<compile_context>
chip_gen: v6e
topology: v6e:2x2x1
jax: 0.10.0
libtpu: 0.0.40
codegen_flags: <defaults>
</compile_context>

<pallas_src>
import numpy as np

import jax
import jax.numpy as jnp
from jax.experimental import pallas as pl
from jax.experimental.pallas import tpu as pltpu

_LEAKY_SLOPE = 0.01   # nn.LeakyReLU() default
_BN_EPS = 1e-5        # nn.BatchNorm2d default


# ----------------------------------------------------------------------------
# Static geometry (per image)
# ----------------------------------------------------------------------------
# Canvas layout per layer: the image (with its conv zero-padding ring) lives at
# spatial offset (pad, pad) inside an S x S canvas, S = H + 2*pad.  Flattened
# row of canvas position (ci, cj) is  G + ci*S + cj,  with G = S + 1 guard rows
# at both ends so every 3x3 tap shift is an in-bounds static slice.
# A "same-size" 3x3 conv is one matmul of the lane-concatenated 9 tap slices
# (M, 9*Cin) @ (9*Cin, Cout), M = S*S.  Only the true-output rows are ever
# consumed downstream.

def _placement_matrix(s_src, s_dst, g_dst, o_dst, n_out, stride, src_rows):
    """Exact 0/1 matrix: conv/pool-output rows of the source layer -> (guarded)
    canvas rows of the destination layer.  stride=2 selects the 2x2-pool
    positions (the 4-way max is done in-kernel first); stride=1 is a crop."""
    e_dst = s_dst * s_dst + 2 * g_dst
    mat = np.zeros((e_dst, src_rows), np.float32)
    for i in range(n_out):
        for j in range(n_out):
            src = (1 + stride * i) * s_src + (1 + stride * j)
            dst = g_dst + (o_dst + i) * s_dst + (o_dst + j)
            mat[dst, src] = 1.0
    return mat


def _build_plan(hin):
    assert hin % 8 == 0 and hin >= 8, "spatial size must be a multiple of 8"
    h = [hin, hin // 2, hin // 4, hin // 8, hin // 8 + 2]   # per-layer input H
    pad = [1, 1, 1, 2, 0]
    layers = []                                             # (S, G, M) per layer
    for hi, pi in zip(h, pad):
        s = hi + 2 * pi
        layers.append((s, s + 1, s * s))
    s = [l[0] for l in layers]
    g = [l[1] for l in layers]
    m = [l[2] for l in layers]
    pmats = []
    for i in range(3):                 # pooled transitions: 1->2, 2->3, 3->4
        src_rows = m[i] - s[i] - 1     # valid prefix for the 4-way pool max
        pmats.append(_placement_matrix(s[i], s[i + 1], g[i + 1],
                                       pad[i + 1], h[i + 1], 2, src_rows))
    # layer4 conv output -> conv_fc canvas (no pool, stride-1 crop)
    pmats.append(_placement_matrix(s[3], s[4], g[4], pad[4], h[4], 1, m[3]))
    n_out = h[4] - 2                   # conv_fc valid output size
    return layers, pmats, n_out


# ----------------------------------------------------------------------------
# Fused Pallas kernel (one grid step == one image)
# ----------------------------------------------------------------------------
def _make_kernel(layers, n_out):
    (S1, G1, M1), (S2, G2, M2), (S3, G3, M3), (S4, G4, M4), (S5, G5, M5) = layers

    def kernel(x_ref, w1, b1, w2, b2, w3, b3, w4, b4, wfc, bfc,
               p1, p2, p3, p4, out_ref):

        def im2col(canvas, s, g, m):
            """Lane-concat of the 9 shifted canvas row-slices: (m, 9*Cin)."""
            taps = []
            for t in range(9):
                di, dj = divmod(t, 3)
                sh = (di - 1) * s + (dj - 1)
                taps.append(canvas[g + sh: g + sh + m, :])
            return jnp.concatenate(taps, axis=1)

        def conv_bn(canvas, w_ref, b_ref, s, g, m):
            """One bf16 MXU matmul per layer; BN scale folded into weights."""
            lhs = im2col(canvas, s, g, m).astype(jnp.bfloat16)
            y = jnp.dot(lhs, w_ref[...], preferred_element_type=jnp.float32)
            return y + b_ref[...]

        def lrelu(y):
            return jnp.where(y >= 0, y, _LEAKY_SLOPE * y)

        def pool_place(y, s, p_ref):
            """Fused 2x2 max-pool + placement into the next layer's canvas.
            All selected pool windows lie in the first (M - S - 1) rows, so the
            4 shifted slices are taken without any zero padding."""
            mp = y.shape[0] - s - 1
            vmax = jnp.maximum(
                jnp.maximum(y[:mp, :], y[1:mp + 1, :]),
                jnp.maximum(y[s:s + mp, :], y[s + 1:s + 1 + mp, :]))
            return jnp.dot(p_ref[...], vmax.astype(jnp.bfloat16),
                           preferred_element_type=jnp.float32)

        c1 = x_ref[...]                                          # (E1, 3) f32
        y1 = lrelu(conv_bn(c1, w1, b1, S1, G1, M1))              # (M1, 16)
        c2 = pool_place(y1, S1, p1)                              # (E2, 16)
        y2 = lrelu(conv_bn(c2, w2, b2, S2, G2, M2))              # (M2, 32)
        c3 = pool_place(y2, S2, p2)                              # (E3, 32)
        y3 = lrelu(conv_bn(c3, w3, b3, S3, G3, M3))              # (M3, 64)
        c4 = pool_place(y3, S3, p3)                              # (E4, 64)
        y4 = lrelu(conv_bn(c4, w4, b4, S4, G4, M4))              # (M4, 128)
        c5 = jnp.dot(p4[...], y4.astype(jnp.bfloat16),
                     preferred_element_type=jnp.float32)         # (E5, 128)

        # conv_fc (Cout = 1): wide VPU multiply + lane reduction (f32), no MXU.
        lhs_fc = im2col(c5, S5, G5, M5)                          # (M5, 1152)
        yfc = jnp.sum(lhs_fc * wfc[...], axis=1, keepdims=True) + bfc[...]

        # Valid conv_fc outputs sit at canvas positions (1+i, 1+j): slice them.
        rows = [yfc[(1 + i) * S5 + 1: (1 + i) * S5 + 1 + n_out, :]
                for i in range(n_out)]
        out_ref[...] = jnp.concatenate(rows, axis=0)             # (n_out^2, 1)

    return kernel


# ----------------------------------------------------------------------------
# Host-side parameter folding / wrapper
# ----------------------------------------------------------------------------
def _fold_conv_bn(w, b, gamma, beta, mean, var):
    """Fold inference-mode BatchNorm into the conv weights (bf16) and bias."""
    cout, cin = w.shape[0], w.shape[1]
    scale = gamma / jnp.sqrt(var + _BN_EPS)                       # (Cout,)
    wt = jnp.transpose(w, (2, 3, 1, 0)).reshape(9 * cin, cout)    # tap-major rows
    wt = wt * scale[None, :]
    bias = beta + (b - mean) * scale
    return wt.astype(jnp.bfloat16), bias.reshape(1, cout).astype(jnp.float32)


def forward(x_nchw, params):
    batch, cin, hin, win = x_nchw.shape
    assert cin == 3 and hin == win
    layers, pmats, n_out = _build_plan(hin)
    S1, G1, M1 = layers[0]
    E1 = M1 + 2 * G1

    # Input canvas per image: NCHW -> NHWC, conv1 zero ring, flatten, guards.
    x = jnp.transpose(x_nchw, (0, 2, 3, 1)).astype(jnp.float32)
    x = jnp.pad(x, ((0, 0), (1, 1), (1, 1), (0, 0)))
    x = x.reshape(batch, S1 * S1, cin)
    x = jnp.pad(x, ((0, 0), (G1, G1), (0, 0)))                    # (B, E1, 3)

    w1, b1 = _fold_conv_bn(*params["block1"])
    w2, b2 = _fold_conv_bn(*params["block2"])
    w3, b3 = _fold_conv_bn(*params["block3"])
    w4, b4 = _fold_conv_bn(*params["block4"])
    wfc_raw, bfc_raw = params["fc"]
    wfc = jnp.transpose(wfc_raw, (2, 3, 1, 0)).reshape(1, 9 * wfc_raw.shape[1])
    wfc = wfc.astype(jnp.float32)
    bfc = bfc_raw.reshape(1, 1).astype(jnp.float32)

    # Placement matrices are exact 0/1 -> ship as bf16 (native bf16 matmul).
    pmats_j = [jnp.asarray(p, dtype=jnp.bfloat16) for p in pmats]

    consts = [w1, b1, w2, b2, w3, b3, w4, b4, wfc, bfc, *pmats_j]

    def _const_spec(a):
        return pl.BlockSpec(a.shape, lambda b: (0,) * a.ndim)

    in_specs = [pl.BlockSpec((None, E1, cin), lambda b: (b, 0, 0))]
    in_specs += [_const_spec(a) for a in consts]

    out = pl.pallas_call(
        _make_kernel(layers, n_out),
        grid=(batch,),
        out_shape=jax.ShapeDtypeStruct((batch, n_out * n_out, 1), jnp.float32),
        in_specs=in_specs,
        out_specs=pl.BlockSpec((None, n_out * n_out, 1), lambda b: (b, 0, 0)),
        compiler_params=pltpu.CompilerParams(
            dimension_semantics=("parallel",)),
    )(x, *consts)

    return out.reshape(batch, n_out, n_out)[:, None, :, :]       # NCHW


# ----------------------------------------------------------------------------
# Deterministic parameter init (synthetic; shapes from the module's __init__)
# ----------------------------------------------------------------------------
def init_params(key):
    def conv_init(k, cout, cin):
        k1, k2 = jax.random.split(k)
        fan_in = cin * 9
        w = jax.random.normal(k1, (cout, cin, 3, 3), jnp.float32) / (fan_in ** 0.5)
        b = 0.05 * jax.random.normal(k2, (cout,), jnp.float32)
        return w, b

    def bn_init(k, c):
        k1, k2, k3, k4 = jax.random.split(k, 4)
        gamma = 1.0 + 0.1 * jax.random.normal(k1, (c,), jnp.float32)
        beta = 0.1 * jax.random.normal(k2, (c,), jnp.float32)
        mean = 0.05 * jax.random.normal(k3, (c,), jnp.float32)
        var = 0.9 + 0.2 * jax.random.uniform(k4, (c,), jnp.float32)
        return gamma, beta, mean, var

    keys = jax.random.split(key, 9)
    params = {}
    dims = [(3, 16), (16, 32), (32, 64), (64, 128)]
    for i, (cin, cout) in enumerate(dims, start=1):
        w, b = conv_init(keys[2 * (i - 1)], cout, cin)
        g, bt, m, v = bn_init(keys[2 * (i - 1) + 1], cout)
        params[f"block{i}"] = (w, b, g, bt, m, v)
    params["fc"] = conv_init(keys[8], 1, 128)
    return params


# ----------------------------------------------------------------------------
# Pure-JAX f32 reference (for correctness check)
# ----------------------------------------------------------------------------
def reference_forward(x_nchw, params):
    x = jnp.transpose(x_nchw, (0, 2, 3, 1)).astype(jnp.float32)

    def conv(x, w, b, pad):
        w_hwio = jnp.transpose(w, (2, 3, 1, 0))
        y = jax.lax.conv_general_dilated(
            x, w_hwio, (1, 1), [(pad, pad), (pad, pad)],
            dimension_numbers=("NHWC", "HWIO", "NHWC"))
        return y + b

    def bn(y, g, bt, m, v):
        return (y - m) / jnp.sqrt(v + _BN_EPS) * g + bt

    def lrelu(y):
        return jnp.where(y >= 0, y, _LEAKY_SLOPE * y)

    def pool(y):
        return jax.lax.reduce_window(y, -jnp.inf, jax.lax.max,
                                     (1, 2, 2, 1), (1, 2, 2, 1), "VALID")

    for name, pad, do_pool in [("block1", 1, True), ("block2", 1, True),
                               ("block3", 1, True), ("block4", 2, False)]:
        w, b, g, bt, m, v = params[name]
        x = lrelu(bn(conv(x, w, b, pad), g, bt, m, v))
        if do_pool:
            x = pool(x)
    wfc, bfc = params["fc"]
    x = conv(x, wfc, bfc, 0)
    return jnp.transpose(x, (0, 3, 1, 2))


# ----------------------------------------------------------------------------
if __name__ == "__main__":
    x = jax.random.normal(jax.random.PRNGKey(0), (2, 3, 16, 16), dtype=jnp.float32)
    params = init_params(jax.random.PRNGKey(42))

    out = jax.block_until_ready(jax.jit(forward)(x, params))
    assert out.shape == (2, 1, 2, 2), out.shape

    ref = reference_forward(x, params)
    # bf16 MXU inputs (f32 accumulation) -> tolerance appropriate for bf16.
    np.testing.assert_allclose(np.asarray(out), np.asarray(ref),
                               rtol=5e-2, atol=5e-2)
    print("KERNEL_OK")
</pallas_src>

<mosaic_0001>
module attributes {stable_mosaic.version = 11 : i64} {
  func.func @kernel(%arg0: i32, %arg1: memref<1x362x3xf32, #tpu.memory_space<vmem>>, %arg2: memref<27x16xbf16, #tpu.memory_space<vmem>>, %arg3: memref<1x16xf32, #tpu.memory_space<vmem>>, %arg4: memref<144x32xbf16, #tpu.memory_space<vmem>>, %arg5: memref<1x32xf32, #tpu.memory_space<vmem>>, %arg6: memref<288x64xbf16, #tpu.memory_space<vmem>>, %arg7: memref<1x64xf32, #tpu.memory_space<vmem>>, %arg8: memref<576x128xbf16, #tpu.memory_space<vmem>>, %arg9: memref<1x128xf32, #tpu.memory_space<vmem>>, %arg10: memref<1x1152xf32, #tpu.memory_space<vmem>>, %arg11: memref<1x1xf32, #tpu.memory_space<vmem>>, %arg12: memref<122x305xbf16, #tpu.memory_space<vmem>>, %arg13: memref<50x89xbf16, #tpu.memory_space<vmem>>, %arg14: memref<50x29xbf16, #tpu.memory_space<vmem>>, %arg15: memref<26x36xbf16, #tpu.memory_space<vmem>>, %arg16: memref<1x4x1xf32, #tpu.memory_space<vmem>>) attributes {dimension_semantics = [#tpu.dimension_semantics<parallel>], iteration_bounds = array<i64: 2>, scalar_prefetch = 0 : i64, scratch_operands = 0 : i64, tpu.core_type = #tpu.core_type<tc>, window_params = [{transform_indices = @transform_0, window_bounds = array<i64: 1, 362, 3>}, {pipeline_mode = #tpu.pipeline_mode<synchronous>, transform_indices = @transform_1, window_bounds = array<i64: 27, 16>}, {pipeline_mode = #tpu.pipeline_mode<synchronous>, transform_indices = @transform_2, window_bounds = array<i64: 1, 16>}, {pipeline_mode = #tpu.pipeline_mode<synchronous>, transform_indices = @transform_3, window_bounds = array<i64: 144, 32>}, {pipeline_mode = #tpu.pipeline_mode<synchronous>, transform_indices = @transform_4, window_bounds = array<i64: 1, 32>}, {pipeline_mode = #tpu.pipeline_mode<synchronous>, transform_indices = @transform_5, window_bounds = array<i64: 288, 64>}, {pipeline_mode = #tpu.pipeline_mode<synchronous>, transform_indices = @transform_6, window_bounds = array<i64: 1, 64>}, {pipeline_mode = #tpu.pipeline_mode<synchronous>, transform_indices = @transform_7, window_bounds = array<i64: 576, 128>}, {pipeline_mode = #tpu.pipeline_mode<synchronous>, transform_indices = @transform_8, window_bounds = array<i64: 1, 128>}, {pipeline_mode = #tpu.pipeline_mode<synchronous>, transform_indices = @transform_9, window_bounds = array<i64: 1, 1152>}, {pipeline_mode = #tpu.pipeline_mode<synchronous>, transform_indices = @transform_10, window_bounds = array<i64: 1, 1>}, {pipeline_mode = #tpu.pipeline_mode<synchronous>, transform_indices = @transform_11, window_bounds = array<i64: 122, 305>}, {pipeline_mode = #tpu.pipeline_mode<synchronous>, transform_indices = @transform_12, window_bounds = array<i64: 50, 89>}, {pipeline_mode = #tpu.pipeline_mode<synchronous>, transform_indices = @transform_13, window_bounds = array<i64: 50, 29>}, {pipeline_mode = #tpu.pipeline_mode<synchronous>, transform_indices = @transform_14, window_bounds = array<i64: 26, 36>}, {transform_indices = @transform_15, window_bounds = array<i64: 1, 4, 1>}]} {
    %c0 = arith.constant 0 : index
    %c0_0 = arith.constant 0 : index
    %c0_1 = arith.constant 0 : index
    %0 = vector.load %arg1[%c0, %c0_0, %c0_1] : memref<1x362x3xf32, #tpu.memory_space<vmem>>, vector<1x362x3xf32>
    %1 = vector.shape_cast %0 : vector<1x362x3xf32> to vector<362x3xf32>
    %2 = vector.extract_strided_slice %1 {offsets = [0, 0], sizes = [324, 3], strides = [1, 1]} : vector<362x3xf32> to vector<324x3xf32>
    %3 = vector.extract_strided_slice %1 {offsets = [1, 0], sizes = [324, 3], strides = [1, 1]} : vector<362x3xf32> to vector<324x3xf32>
    %4 = vector.extract_strided_slice %1 {offsets = [2, 0], sizes = [324, 3], strides = [1, 1]} : vector<362x3xf32> to vector<324x3xf32>
    %5 = vector.extract_strided_slice %1 {offsets = [18, 0], sizes = [324, 3], strides = [1, 1]} : vector<362x3xf32> to vector<324x3xf32>
    %6 = vector.extract_strided_slice %1 {offsets = [19, 0], sizes = [324, 3], strides = [1, 1]} : vector<362x3xf32> to vector<324x3xf32>
    %7 = vector.extract_strided_slice %1 {offsets = [20, 0], sizes = [324, 3], strides = [1, 1]} : vector<362x3xf32> to vector<324x3xf32>
    %8 = vector.extract_strided_slice %1 {offsets = [36, 0], sizes = [324, 3], strides = [1, 1]} : vector<362x3xf32> to vector<324x3xf32>
    %9 = vector.extract_strided_slice %1 {offsets = [37, 0], sizes = [324, 3], strides = [1, 1]} : vector<362x3xf32> to vector<324x3xf32>
    %10 = vector.extract_strided_slice %1 {offsets = [38, 0], sizes = [324, 3], strides = [1, 1]} : vector<362x3xf32> to vector<324x3xf32>
    %11 = tpu.concatenate %2, %3, %4, %5, %6, %7, %8, %9, %10 in 1 : vector<324x3xf32>, vector<324x3xf32>, vector<324x3xf32>, vector<324x3xf32>, vector<324x3xf32>, vector<324x3xf32>, vector<324x3xf32>, vector<324x3xf32>, vector<324x3xf32> -> vector<324x27xf32>
    %12 = arith.truncf %11 : vector<324x27xf32> to vector<324x27xbf16>
    %c0_2 = arith.constant 0 : index
    %c0_3 = arith.constant 0 : index
    %13 = vector.load %arg2[%c0_2, %c0_3] : memref<27x16xbf16, #tpu.memory_space<vmem>>, vector<27x16xbf16>
    %cst = arith.constant dense<0.000000e+00> : vector<324x16xf32>
    %14 = tpu.matmul %12, %13, %cst {dimension_numbers = #tpu.dot_dimension_numbers<[1], [0], [0], [1], [0, 0, 1, 1], [], []>} : vector<324x27xbf16>, vector<27x16xbf16>, vector<324x16xf32> -> vector<324x16xf32>
    %c0_4 = arith.constant 0 : index
    %c0_5 = arith.constant 0 : index
    %15 = vector.load %arg3[%c0_4, %c0_5] : memref<1x16xf32, #tpu.memory_space<vmem>>, vector<1x16xf32>
    %16 = vector.broadcast %15 : vector<1x16xf32> to vector<324x16xf32>
    %17 = arith.addf %14, %16 : vector<324x16xf32>
    %cst_6 = arith.constant 0.000000e+00 : f32
    %18 = vector.broadcast %cst_6 : f32 to vector<324x16xf32>
    %19 = arith.cmpf oge, %17, %18 : vector<324x16xf32>
    %cst_7 = arith.constant 0.00999999977 : f32
    %20 = vector.broadcast %cst_7 : f32 to vector<324x16xf32>
    %21 = arith.mulf %20, %17 : vector<324x16xf32>
    %22 = arith.select %19, %17, %21 : vector<324x16xi1>, vector<324x16xf32>
    %23 = vector.extract_strided_slice %22 {offsets = [0, 0], sizes = [305, 16], strides = [1, 1]} : vector<324x16xf32> to vector<305x16xf32>
    %24 = vector.extract_strided_slice %22 {offsets = [1, 0], sizes = [305, 16], strides = [1, 1]} : vector<324x16xf32> to vector<305x16xf32>
    %25 = arith.maximumf %23, %24 : vector<305x16xf32>
    %26 = vector.extract_strided_slice %22 {offsets = [18, 0], sizes = [305, 16], strides = [1, 1]} : vector<324x16xf32> to vector<305x16xf32>
    %27 = vector.extract_strided_slice %22 {offsets = [19, 0], sizes = [305, 16], strides = [1, 1]} : vector<324x16xf32> to vector<305x16xf32>
    %28 = arith.maximumf %26, %27 : vector<305x16xf32>
    %29 = arith.maximumf %25, %28 : vector<305x16xf32>
    %c0_8 = arith.constant 0 : index
    %c0_9 = arith.constant 0 : index
    %30 = vector.load %arg12[%c0_8, %c0_9] : memref<122x305xbf16, #tpu.memory_space<vmem>>, vector<122x305xbf16>
    %31 = arith.truncf %29 : vector<305x16xf32> to vector<305x16xbf16>
    %cst_10 = arith.constant dense<0.000000e+00> : vector<122x16xf32>
    %32 = tpu.matmul %30, %31, %cst_10 {dimension_numbers = #tpu.dot_dimension_numbers<[1], [0], [0], [1], [0, 0, 1, 1], [], []>} : vector<122x305xbf16>, vector<305x16xbf16>, vector<122x16xf32> -> vector<122x16xf32>
    %33 = vector.extract_strided_slice %32 {offsets = [0, 0], sizes = [100, 16], strides = [1, 1]} : vector<122x16xf32> to vector<100x16xf32>
    %34 = vector.extract_strided_slice %32 {offsets = [1, 0], sizes = [100, 16], strides = [1, 1]} : vector<122x16xf32> to vector<100x16xf32>
    %35 = vector.extract_strided_slice %32 {offsets = [2, 0], sizes = [100, 16], strides = [1, 1]} : vector<122x16xf32> to vector<100x16xf32>
    %36 = vector.extract_strided_slice %32 {offsets = [10, 0], sizes = [100, 16], strides = [1, 1]} : vector<122x16xf32> to vector<100x16xf32>
    %37 = vector.extract_strided_slice %32 {offsets = [11, 0], sizes = [100, 16], strides = [1, 1]} : vector<122x16xf32> to vector<100x16xf32>
    %38 = vector.extract_strided_slice %32 {offsets = [12, 0], sizes = [100, 16], strides = [1, 1]} : vector<122x16xf32> to vector<100x16xf32>
    %39 = vector.extract_strided_slice %32 {offsets = [20, 0], sizes = [100, 16], strides = [1, 1]} : vector<122x16xf32> to vector<100x16xf32>
    %40 = vector.extract_strided_slice %32 {offsets = [21, 0], sizes = [100, 16], strides = [1, 1]} : vector<122x16xf32> to vector<100x16xf32>
    %41 = vector.extract_strided_slice %32 {offsets = [22, 0], sizes = [100, 16], strides = [1, 1]} : vector<122x16xf32> to vector<100x16xf32>
    %42 = tpu.concatenate %33, %34, %35, %36, %37, %38, %39, %40, %41 in 1 : vector<100x16xf32>, vector<100x16xf32>, vector<100x16xf32>, vector<100x16xf32>, vector<100x16xf32>, vector<100x16xf32>, vector<100x16xf32>, vector<100x16xf32>, vector<100x16xf32> -> vector<100x144xf32>
    %43 = arith.truncf %42 : vector<100x144xf32> to vector<100x144xbf16>
    %c0_11 = arith.constant 0 : index
    %c0_12 = arith.constant 0 : index
    %44 = vector.load %arg4[%c0_11, %c0_12] : memref<144x32xbf16, #tpu.memory_space<vmem>>, vector<144x32xbf16>
    %cst_13 = arith.constant dense<0.000000e+00> : vector<100x32xf32>
    %45 = tpu.matmul %43, %44, %cst_13 {dimension_numbers = #tpu.dot_dimension_numbers<[1], [0], [0], [1], [0, 0, 1, 1], [], []>} : vector<100x144xbf16>, vector<144x32xbf16>, vector<100x32xf32> -> vector<100x32xf32>
    %c0_14 = arith.constant 0 : index
    %c0_15 = arith.constant 0 : index
    %46 = vector.load %arg5[%c0_14, %c0_15] : memref<1x32xf32, #tpu.memory_space<vmem>>, vector<1x32xf32>
    %47 = vector.broadcast %46 : vector<1x32xf32> to vector<100x32xf32>
    %48 = arith.addf %45, %47 : vector<100x32xf32>
    %cst_16 = arith.constant 0.000000e+00 : f32
    %49 = vector.broadcast %cst_16 : f32 to vector<100x32xf32>
    %50 = arith.cmpf oge, %48, %49 : vector<100x32xf32>
    %cst_17 = arith.constant 0.00999999977 : f32
    %51 = vector.broadcast %cst_17 : f32 to vector<100x32xf32>
    %52 = arith.mulf %51, %48 : vector<100x32xf32>
    %53 = arith.select %50, %48, %52 : vector<100x32xi1>, vector<100x32xf32>
    %54 = vector.extract_strided_slice %53 {offsets = [0, 0], sizes = [89, 32], strides = [1, 1]} : vector<100x32xf32> to vector<89x32xf32>
    %55 = vector.extract_strided_slice %53 {offsets = [1, 0], sizes = [89, 32], strides = [1, 1]} : vector<100x32xf32> to vector<89x32xf32>
    %56 = arith.maximumf %54, %55 : vector<89x32xf32>
    %57 = vector.extract_strided_slice %53 {offsets = [10, 0], sizes = [89, 32], strides = [1, 1]} : vector<100x32xf32> to vector<89x32xf32>
    %58 = vector.extract_strided_slice %53 {offsets = [11, 0], sizes = [89, 32], strides = [1, 1]} : vector<100x32xf32> to vector<89x32xf32>
    %59 = arith.maximumf %57, %58 : vector<89x32xf32>
    %60 = arith.maximumf %56, %59 : vector<89x32xf32>
    %c0_18 = arith.constant 0 : index
    %c0_19 = arith.constant 0 : index
    %61 = vector.load %arg13[%c0_18, %c0_19] : memref<50x89xbf16, #tpu.memory_space<vmem>>, vector<50x89xbf16>
    %62 = arith.truncf %60 : vector<89x32xf32> to vector<89x32xbf16>
    %cst_20 = arith.constant dense<0.000000e+00> : vector<50x32xf32>
    %63 = tpu.matmul %61, %62, %cst_20 {dimension_numbers = #tpu.dot_dimension_numbers<[1], [0], [0], [1], [0, 0, 1, 1], [], []>} : vector<50x89xbf16>, vector<89x32xbf16>, vector<50x32xf32> -> vector<50x32xf32>
    %64 = vector.extract_strided_slice %63 {offsets = [0, 0], sizes = [36, 32], strides = [1, 1]} : vector<50x32xf32> to vector<36x32xf32>
    %65 = vector.extract_strided_slice %63 {offsets = [1, 0], sizes = [36, 32], strides = [1, 1]} : vector<50x32xf32> to vector<36x32xf32>
    %66 = vector.extract_strided_slice %63 {offsets = [2, 0], sizes = [36, 32], strides = [1, 1]} : vector<50x32xf32> to vector<36x32xf32>
    %67 = vector.extract_strided_slice %63 {offsets = [6, 0], sizes = [36, 32], strides = [1, 1]} : vector<50x32xf32> to vector<36x32xf32>
    %68 = vector.extract_strided_slice %63 {offsets = [7, 0], sizes = [36, 32], strides = [1, 1]} : vector<50x32xf32> to vector<36x32xf32>
    %69 = vector.extract_strided_slice %63 {offsets = [8, 0], sizes = [36, 32], strides = [1, 1]} : vector<50x32xf32> to vector<36x32xf32>
    %70 = vector.extract_strided_slice %63 {offsets = [12, 0], sizes = [36, 32], strides = [1, 1]} : vector<50x32xf32> to vector<36x32xf32>
    %71 = vector.extract_strided_slice %63 {offsets = [13, 0], sizes = [36, 32], strides = [1, 1]} : vector<50x32xf32> to vector<36x32xf32>
    %72 = vector.extract_strided_slice %63 {offsets = [14, 0], sizes = [36, 32], strides = [1, 1]} : vector<50x32xf32> to vector<36x32xf32>
    %73 = tpu.concatenate %64, %65, %66, %67, %68, %69, %70, %71, %72 in 1 : vector<36x32xf32>, vector<36x32xf32>, vector<36x32xf32>, vector<36x32xf32>, vector<36x32xf32>, vector<36x32xf32>, vector<36x32xf32>, vector<36x32xf32>, vector<36x32xf32> -> vector<36x288xf32>
    %74 = arith.truncf %73 : vector<36x288xf32> to vector<36x288xbf16>
    %c0_21 = arith.constant 0 : index
    %c0_22 = arith.constant 0 : index
    %75 = vector.load %arg6[%c0_21, %c0_22] : memref<288x64xbf16, #tpu.memory_space<vmem>>, vector<288x64xbf16>
    %cst_23 = arith.constant dense<0.000000e+00> : vector<36x64xf32>
    %76 = tpu.matmul %74, %75, %cst_23 {dimension_numbers = #tpu.dot_dimension_numbers<[1], [0], [0], [1], [0, 0, 1, 1], [], []>} : vector<36x288xbf16>, vector<288x64xbf16>, vector<36x64xf32> -> vector<36x64xf32>
    %c0_24 = arith.constant 0 : index
    %c0_25 = arith.constant 0 : index
    %77 = vector.load %arg7[%c0_24, %c0_25] : memref<1x64xf32, #tpu.memory_space<vmem>>, vector<1x64xf32>
    %78 = vector.broadcast %77 : vector<1x64xf32> to vector<36x64xf32>
    %79 = arith.addf %76, %78 : vector<36x64xf32>
    %cst_26 = arith.constant 0.000000e+00 : f32
    %80 = vector.broadcast %cst_26 : f32 to vector<36x64xf32>
    %81 = arith.cmpf oge, %79, %80 : vector<36x64xf32>
    %cst_27 = arith.constant 0.00999999977 : f32
    %82 = vector.broadcast %cst_27 : f32 to vector<36x64xf32>
    %83 = arith.mulf %82, %79 : vector<36x64xf32>
    %84 = arith.select %81, %79, %83 : vector<36x64xi1>, vector<36x64xf32>
    %85 = vector.extract_strided_slice %84 {offsets = [0, 0], sizes = [29, 64], strides = [1, 1]} : vector<36x64xf32> to vector<29x64xf32>
    %86 = vector.extract_strided_slice %84 {offsets = [1, 0], sizes = [29, 64], strides = [1, 1]} : vector<36x64xf32> to vector<29x64xf32>
    %87 = arith.maximumf %85, %86 : vector<29x64xf32>
    %88 = vector.extract_strided_slice %84 {offsets = [6, 0], sizes = [29, 64], strides = [1, 1]} : vector<36x64xf32> to vector<29x64xf32>
    %89 = vector.extract_strided_slice %84 {offsets = [7, 0], sizes = [29, 64], strides = [1, 1]} : vector<36x64xf32> to vector<29x64xf32>
    %90 = arith.maximumf %88, %89 : vector<29x64xf32>
    %91 = arith.maximumf %87, %90 : vector<29x64xf32>
    %c0_28 = arith.constant 0 : index
    %c0_29 = arith.constant 0 : index
    %92 = vector.load %arg14[%c0_28, %c0_29] : memref<50x29xbf16, #tpu.memory_space<vmem>>, vector<50x29xbf16>
    %93 = arith.truncf %91 : vector<29x64xf32> to vector<29x64xbf16>
    %cst_30 = arith.constant dense<0.000000e+00> : vector<50x64xf32>
    %94 = tpu.matmul %92, %93, %cst_30 {dimension_numbers = #tpu.dot_dimension_numbers<[1], [0], [0], [1], [0, 0, 1, 1], [], []>} : vector<50x29xbf16>, vector<29x64xbf16>, vector<50x64xf32> -> vector<50x64xf32>
    %95 = vector.extract_strided_slice %94 {offsets = [0, 0], sizes = [36, 64], strides = [1, 1]} : vector<50x64xf32> to vector<36x64xf32>
    %96 = vector.extract_strided_slice %94 {offsets = [1, 0], sizes = [36, 64], strides = [1, 1]} : vector<50x64xf32> to vector<36x64xf32>
    %97 = vector.extract_strided_slice %94 {offsets = [2, 0], sizes = [36, 64], strides = [1, 1]} : vector<50x64xf32> to vector<36x64xf32>
    %98 = vector.extract_strided_slice %94 {offsets = [6, 0], sizes = [36, 64], strides = [1, 1]} : vector<50x64xf32> to vector<36x64xf32>
    %99 = vector.extract_strided_slice %94 {offsets = [7, 0], sizes = [36, 64], strides = [1, 1]} : vector<50x64xf32> to vector<36x64xf32>
    %100 = vector.extract_strided_slice %94 {offsets = [8, 0], sizes = [36, 64], strides = [1, 1]} : vector<50x64xf32> to vector<36x64xf32>
    %101 = vector.extract_strided_slice %94 {offsets = [12, 0], sizes = [36, 64], strides = [1, 1]} : vector<50x64xf32> to vector<36x64xf32>
    %102 = vector.extract_strided_slice %94 {offsets = [13, 0], sizes = [36, 64], strides = [1, 1]} : vector<50x64xf32> to vector<36x64xf32>
    %103 = vector.extract_strided_slice %94 {offsets = [14, 0], sizes = [36, 64], strides = [1, 1]} : vector<50x64xf32> to vector<36x64xf32>
    %104 = tpu.concatenate %95, %96, %97, %98, %99, %100, %101, %102, %103 in 1 : vector<36x64xf32>, vector<36x64xf32>, vector<36x64xf32>, vector<36x64xf32>, vector<36x64xf32>, vector<36x64xf32>, vector<36x64xf32>, vector<36x64xf32>, vector<36x64xf32> -> vector<36x576xf32>
    %105 = arith.truncf %104 : vector<36x576xf32> to vector<36x576xbf16>
    %c0_31 = arith.constant 0 : index
    %c0_32 = arith.constant 0 : index
    %106 = vector.load %arg8[%c0_31, %c0_32] : memref<576x128xbf16, #tpu.memory_space<vmem>>, vector<576x128xbf16>
    %cst_33 = arith.constant dense<0.000000e+00> : vector<36x128xf32>
    %107 = tpu.matmul %105, %106, %cst_33 {dimension_numbers = #tpu.dot_dimension_numbers<[1], [0], [0], [1], [0, 0, 1, 1], [], []>} : vector<36x576xbf16>, vector<576x128xbf16>, vector<36x128xf32> -> vector<36x128xf32>
    %c0_34 = arith.constant 0 : index
    %c0_35 = arith.constant 0 : index
    %108 = vector.load %arg9[%c0_34, %c0_35] : memref<1x128xf32, #tpu.memory_space<vmem>>, vector<1x128xf32>
    %109 = vector.broadcast %108 : vector<1x128xf32> to vector<36x128xf32>
    %110 = arith.addf %107, %109 : vector<36x128xf32>
    %cst_36 = arith.constant 0.000000e+00 : f32
    %111 = vector.broadcast %cst_36 : f32 to vector<36x128xf32>
    %112 = arith.cmpf oge, %110, %111 : vector<36x128xf32>
    %cst_37 = arith.constant 0.00999999977 : f32
    %113 = vector.broadcast %cst_37 : f32 to vector<36x128xf32>
    %114 = arith.mulf %113, %110 : vector<36x128xf32>
    %115 = arith.select %112, %110, %114 : vector<36x128xi1>, vector<36x128xf32>
    %c0_38 = arith.constant 0 : index
    %c0_39 = arith.constant 0 : index
    %116 = vector.load %arg15[%c0_38, %c0_39] : memref<26x36xbf16, #tpu.memory_space<vmem>>, vector<26x36xbf16>
    %117 = arith.truncf %115 : vector<36x128xf32> to vector<36x128xbf16>
    %cst_40 = arith.constant dense<0.000000e+00> : vector<26x128xf32>
    %118 = tpu.matmul %116, %117, %cst_40 {dimension_numbers = #tpu.dot_dimension_numbers<[1], [0], [0], [1], [0, 0, 1, 1], [], []>} : vector<26x36xbf16>, vector<36x128xbf16>, vector<26x128xf32> -> vector<26x128xf32>
    %119 = vector.extract_strided_slice %118 {offsets = [0, 0], sizes = [16, 128], strides = [1, 1]} : vector<26x128xf32> to vector<16x128xf32>
    %120 = vector.extract_strided_slice %118 {offsets = [1, 0], sizes = [16, 128], strides = [1, 1]} : vector<26x128xf32> to vector<16x128xf32>
    %121 = vector.extract_strided_slice %118 {offsets = [2, 0], sizes = [16, 128], strides = [1, 1]} : vector<26x128xf32> to vector<16x128xf32>
    %122 = vector.extract_strided_slice %118 {offsets = [4, 0], sizes = [16, 128], strides = [1, 1]} : vector<26x128xf32> to vector<16x128xf32>
    %123 = vector.extract_strided_slice %118 {offsets = [5, 0], sizes = [16, 128], strides = [1, 1]} : vector<26x128xf32> to vector<16x128xf32>
    %124 = vector.extract_strided_slice %118 {offsets = [6, 0], sizes = [16, 128], strides = [1, 1]} : vector<26x128xf32> to vector<16x128xf32>
    %125 = vector.extract_strided_slice %118 {offsets = [8, 0], sizes = [16, 128], strides = [1, 1]} : vector<26x128xf32> to vector<16x128xf32>
    %126 = vector.extract_strided_slice %118 {offsets = [9, 0], sizes = [16, 128], strides = [1, 1]} : vector<26x128xf32> to vector<16x128xf32>
    %127 = vector.extract_strided_slice %118 {offsets = [10, 0], sizes = [16, 128], strides = [1, 1]} : vector<26x128xf32> to vector<16x128xf32>
    %128 = tpu.concatenate %119, %120, %121, %122, %123, %124, %125, %126, %127 in 1 : vector<16x128xf32>, vector<16x128xf32>, vector<16x128xf32>, vector<16x128xf32>, vector<16x128xf32>, vector<16x128xf32>, vector<16x128xf32>, vector<16x128xf32>, vector<16x128xf32> -> vector<16x1152xf32>
    %c0_41 = arith.constant 0 : index
    %c0_42 = arith.constant 0 : index
    %129 = vector.load %arg10[%c0_41, %c0_42] : memref<1x1152xf32, #tpu.memory_space<vmem>>, vector<1x1152xf32>
    %130 = vector.broadcast %129 : vector<1x1152xf32> to vector<16x1152xf32>
    %131 = arith.mulf %128, %130 : vector<16x1152xf32>
    %cst_43 = arith.constant dense<0.000000e+00> : vector<16xf32>
    %132 = vector.multi_reduction <add>, %131, %cst_43 [1] : vector<16x1152xf32> to vector<16xf32>
    %133 = vector.shape_cast %132 : vector<16xf32> to vector<16x1xf32>
    %c0_44 = arith.constant 0 : index
    %c0_45 = arith.constant 0 : index
    %134 = vector.load %arg11[%c0_44, %c0_45] : memref<1x1xf32, #tpu.memory_space<vmem>>, vector<1x1xf32>
    %135 = vector.broadcast %134 : vector<1x1xf32> to vector<16x1xf32>
    %136 = arith.addf %133, %135 : vector<16x1xf32>
    %137 = vector.extract_strided_slice %136 {offsets = [5, 0], sizes = [2, 1], strides = [1, 1]} : vector<16x1xf32> to vector<2x1xf32>
    %138 = vector.extract_strided_slice %136 {offsets = [9, 0], sizes = [2, 1], strides = [1, 1]} : vector<16x1xf32> to vector<2x1xf32>
    %139 = tpu.concatenate %137, %138 in 0 : vector<2x1xf32>, vector<2x1xf32> -> vector<4x1xf32>
    %c0_46 = arith.constant 0 : index
    %c0_47 = arith.constant 0 : index
    %c0_48 = arith.constant 0 : index
    %140 = vector.load %arg16[%c0_46, %c0_47, %c0_48] : memref<1x4x1xf32, #tpu.memory_space<vmem>>, vector<1x4x1xf32>
    %141 = vector.shape_cast %140 : vector<1x4x1xf32> to vector<4x1xf32>
    %142 = vector.shape_cast %139 : vector<4x1xf32> to vector<1x4x1xf32>
    tpu.vector_store %arg16[%c0_46, %c0_47, %c0_48], %142 {strides = array<i32>} : memref<1x4x1xf32, #tpu.memory_space<vmem>>, vector<1x4x1xf32>,
    return
  }
  func.func @transform_0(%arg0: i32) -> (i32, i32, i32) {
    %c0_i32 = arith.constant 0 : i32
    %c0_i32_0 = arith.constant 0 : i32
    %c0_i32_1 = arith.constant 0 : i32
    return %arg0, %c0_i32, %c0_i32_0 : i32, i32, i32
  }
  func.func @transform_1(%arg0: i32) -> (i32, i32) {
    %c0_i32 = arith.constant 0 : i32
    %c0_i32_0 = arith.constant 0 : i32
    %c0_i32_1 = arith.constant 0 : i32
    return %c0_i32, %c0_i32_0 : i32, i32
  }
  func.func @transform_2(%arg0: i32) -> (i32, i32) {
    %c0_i32 = arith.constant 0 : i32
    %c0_i32_0 = arith.constant 0 : i32
    %c0_i32_1 = arith.constant 0 : i32
    return %c0_i32, %c0_i32_0 : i32, i32
  }
  func.func @transform_3(%arg0: i32) -> (i32, i32) {
    %c0_i32 = arith.constant 0 : i32
    %c0_i32_0 = arith.constant 0 : i32
    %c0_i32_1 = arith.constant 0 : i32
    return %c0_i32, %c0_i32_0 : i32, i32
  }
  func.func @transform_4(%arg0: i32) -> (i32, i32) {
    %c0_i32 = arith.constant 0 : i32
    %c0_i32_0 = arith.constant 0 : i32
    %c0_i32_1 = arith.constant 0 : i32
    return %c0_i32, %c0_i32_0 : i32, i32
  }
  func.func @transform_5(%arg0: i32) -> (i32, i32) {
    %c0_i32 = arith.constant 0 : i32
    %c0_i32_0 = arith.constant 0 : i32
    %c0_i32_1 = arith.constant 0 : i32
    return %c0_i32, %c0_i32_0 : i32, i32
  }
  func.func @transform_6(%arg0: i32) -> (i32, i32) {
    %c0_i32 = arith.constant 0 : i32
    %c0_i32_0 = arith.constant 0 : i32
    %c0_i32_1 = arith.constant 0 : i32
    return %c0_i32, %c0_i32_0 : i32, i32
  }
  func.func @transform_7(%arg0: i32) -> (i32, i32) {
    %c0_i32 = arith.constant 0 : i32
    %c0_i32_0 = arith.constant 0 : i32
    %c0_i32_1 = arith.constant 0 : i32
    return %c0_i32, %c0_i32_0 : i32, i32
  }
  func.func @transform_8(%arg0: i32) -> (i32, i32) {
    %c0_i32 = arith.constant 0 : i32
    %c0_i32_0 = arith.constant 0 : i32
    %c0_i32_1 = arith.constant 0 : i32
    return %c0_i32, %c0_i32_0 : i32, i32
  }
  func.func @transform_9(%arg0: i32) -> (i32, i32) {
    %c0_i32 = arith.constant 0 : i32
    %c0_i32_0 = arith.constant 0 : i32
    %c0_i32_1 = arith.constant 0 : i32
    return %c0_i32, %c0_i32_0 : i32, i32
  }
  func.func @transform_10(%arg0: i32) -> (i32, i32) {
    %c0_i32 = arith.constant 0 : i32
    %c0_i32_0 = arith.constant 0 : i32
    %c0_i32_1 = arith.constant 0 : i32
    return %c0_i32, %c0_i32_0 : i32, i32
  }
  func.func @transform_11(%arg0: i32) -> (i32, i32) {
    %c0_i32 = arith.constant 0 : i32
    %c0_i32_0 = arith.constant 0 : i32
    %c0_i32_1 = arith.constant 0 : i32
    return %c0_i32, %c0_i32_0 : i32, i32
  }
  func.func @transform_12(%arg0: i32) -> (i32, i32) {
    %c0_i32 = arith.constant 0 : i32
    %c0_i32_0 = arith.constant 0 : i32
    %c0_i32_1 = arith.constant 0 : i32
    return %c0_i32, %c0_i32_0 : i32, i32
  }
  func.func @transform_13(%arg0: i32) -> (i32, i32) {
    %c0_i32 = arith.constant 0 : i32
    %c0_i32_0 = arith.constant 0 : i32
    %c0_i32_1 = arith.constant 0 : i32
    return %c0_i32, %c0_i32_0 : i32, i32
  }
  func.func @transform_14(%arg0: i32) -> (i32, i32) {
    %c0_i32 = arith.constant 0 : i32
    %c0_i32_0 = arith.constant 0 : i32
    %c0_i32_1 = arith.constant 0 : i32
    return %c0_i32, %c0_i32_0 : i32, i32
  }
  func.func @transform_15(%arg0: i32) -> (i32, i32, i32) {
    %c0_i32 = arith.constant 0 : i32
    %c0_i32_0 = arith.constant 0 : i32
    %c0_i32_1 = arith.constant 0 : i32
    return %arg0, %c0_i32, %c0_i32_0 : i32, i32, i32
  }
}

</mosaic_0001>

<llo_original>
// kernel: forward.1
$region0: #{forward.1}
  #allocation0 [shape = 'u32[]', space=smem, size = 0x4, offset = 0x4, fixed_abs, tag = 'smem constant byte address 0x4 - core index']
  #allocation1 [shape = 'u32[144,128]{1,0:T(1,128)}', space=vmem, size = 0x12000, scoped, tag = 'internal scratch']
  #allocation2 [shape = 'f32[1,1]{1,0:T(1,128)S(1)}', space=vmem, size = 0x200, scoped, tag = 'scoped memory for forward.1']
  %s0 = inlined_call_operand.vmem [shape: f32[2,362,3], index: 0, kind: input, shape index: {}]
  %s1 = inlined_call_operand.vmem [shape: bf16[27,16], index: 1, kind: input, shape index: {}]
  %s2 = inlined_call_operand.vmem [shape: f32[1,16], index: 2, kind: input, shape index: {}]
  %s3 = inlined_call_operand.vmem [shape: bf16[144,32], index: 3, kind: input, shape index: {}]
  %s4 = inlined_call_operand.vmem [shape: f32[1,32], index: 4, kind: input, shape index: {}]
  %s5 = inlined_call_operand.vmem [shape: bf16[288,64], index: 5, kind: input, shape index: {}]
  %s6 = inlined_call_operand.vmem [shape: f32[1,64], index: 6, kind: input, shape index: {}]
  %s7 = inlined_call_operand.vmem [shape: bf16[576,128], index: 7, kind: input, shape index: {}]
  %s8 = inlined_call_operand.vmem [shape: f32[1,128], index: 8, kind: input, shape index: {}]
  %s9 = inlined_call_operand.vmem [shape: f32[1,1152], index: 9, kind: input, shape index: {}]
  %s10 = inlined_call_operand.<no memory space> [shape: f32[1,1], index: 10, kind: input, shape index: {}]
  %s11 = inlined_call_operand.vmem [shape: bf16[122,305], index: 11, kind: input, shape index: {}]
  %s12 = inlined_call_operand.vmem [shape: bf16[50,89], index: 12, kind: input, shape index: {}]
  %s13 = inlined_call_operand.vmem [shape: bf16[50,29], index: 13, kind: input, shape index: {}]
  %s14 = inlined_call_operand.vmem [shape: bf16[26,36], index: 14, kind: input, shape index: {}]
  %s15 = inlined_call_operand.vmem [shape: f32[2,4,1], index: 15, kind: output, shape index: {}]
  %s16 = sld [smem:[#allocation0]]
  $region93: #{forward.1} parent=0
    _
  %s18 = ssub.s32 1, %s16
  %s19 = scalar_select 0, %s18, %s16
  %v20 = vstv %s10
  %21 = vst [vmem:[#allocation2] sm:$0x1] %v20
  loop: start=0, step=1, limit=4
  $region2: #{forward.1} parent=0 // loop_pre_header
    _
  $region3: #{forward.1} parent=0 // loop_header
    %s23 = sphi 0, %s27
    %p24 = scmp.ge.s32.totalorder %s23, 4
    %s33 = sphi 0, %s35
    %s36 = sphi 0, %s33
    %s37 = sphi 0, %s36
    %s53 = sphi 0, %s37
    %s57 = sphi 0, %s57
    %s59 = sphi 0, %s57
    %s60 = sphi 0, %s59
    %s74 = sphi 0, %s60
    %s78 = sphi 0, %s78
    %s80 = sphi 0, %s78
    %s81 = sphi 0, %s80
    %s95 = sphi 0, %s81
    %s99 = sphi 0, %s99
    %s101 = sphi 0, %s99
    %s102 = sphi 0, %s101
    %s116 = sphi 0, %s102
    %s120 = sphi 0, %s120
    %s122 = sphi 0, %s120
    %s123 = sphi 0, %s122
    %s137 = sphi 0, %s123
    %s141 = sphi 0, %s141
    %s143 = sphi 0, %s141
    %s144 = sphi 0, %s143
    %s158 = sphi 0, %s144
    %s162 = sphi 0, %s162
    %s164 = sphi 0, %s162
    %s165 = sphi 0, %s164
    %s179 = sphi 0, %s165
    %s183 = sphi 0, %s183
    %s185 = sphi 0, %s183
    %s186 = sphi 0, %s185
    %s200 = sphi 0, %s186
    %s204 = sphi 0, %s204
    %s206 = sphi 0, %s204
    %s207 = sphi 0, %s206
    %s221 = sphi 0, %s207
    %s225 = sphi 0, %s225
    %s227 = sphi 0, %s225
    %s228 = sphi 0, %s227
    %s242 = sphi 0, %s228
    %s246 = sphi 0, %s246
    %s248 = sphi 0, %s246
    %s249 = sphi 0, %s248
    %s263 = sphi 0, %s249
    %s267 = sphi 0, %s267
    %s269 = sphi 0, %s267
    %s270 = sphi 0, %s269
    %s284 = sphi 0, %s270
    %s288 = sphi 0, %s288
    %s290 = sphi 0, %s288
    %s291 = sphi 0, %s290
    %s305 = sphi 0, %s291
    %s309 = sphi 0, %s309
    %s311 = sphi 0, %s309
    %s312 = sphi 0, %s311
    %s326 = sphi 0, %s312
    %s330 = sphi 0, %s330
    %s332 = sphi 0, %s330
    %s333 = sphi 0, %s332
    %s347 = sphi 0, %s333
    %s353 = sphi 0, %s355
    %s356 = sphi 0, %s353
    %s357 = sphi 0, %s356
    %s373 = sphi 0, %s357
  $region4: #{forward.1} parent=0 // loop_header_branch
    %26 = sbr.rel (%p24) target = $region8
  $region5: #{forward.1} parent=0 // loop_body
    %s28 = ssub.s32 %s23, 1
    %s29 = ssub.s32 %s23, 2
    %s30 = sadd.s32 %s23, 1
    %s31 = ssub.s32 %s23, %s30
    %p32 = scmp.eq.s32.totalorder %s31, 0
    %s34 = sadd.s32 %s33, 1
    %s35 = scalar_select %p32, %s33, %s34
    %p38 = pneg %p32
    %p39 = scmp.eq.s32.totalorder %s23, 1
    %p40 = por %p38, %p39
    %p41 = scmp.ne.s32.totalorder %s33, %s36
    %p42 = scmp.eq.s32.totalorder %s23, 0
    %p43 = por %p41, %p42
    %p44 = scmp.ne.s32.totalorder %s33, %s36
    %p45 = scmp.eq.s32.totalorder %s28, 1
    %p46 = por %p44, %p45
    %p47 = scmp.ne.s32.totalorder %s36, %s37
    %p48 = scmp.eq.s32.totalorder %s28, 0
    %p49 = por %p47, %p48
    %p50 = scmp.ne.s32.totalorder %s36, %s37
    %p51 = scmp.eq.s32.totalorder %s29, 1
    %p52 = por %p50, %p51
    %p54 = scmp.ne.s32.totalorder %s37, %s53
    %p55 = scmp.eq.s32.totalorder %s29, 0
    %p56 = por %p54, %p55
    %s58 = sadd.s32 %s57, 1
    %p61 = scmp.eq.s32.totalorder %s23, 1
    %p62 = scmp.ne.s32.totalorder %s57, %s59
    %p63 = scmp.eq.s32.totalorder %s23, 0
    %p64 = por %p62, %p63
    %p65 = scmp.ne.s32.totalorder %s57, %s59
    %p66 = scmp.eq.s32.totalorder %s28, 1
    %p67 = por %p65, %p66
    %p68 = scmp.ne.s32.totalorder %s59, %s60
    %p69 = scmp.eq.s32.totalorder %s28, 0
    %p70 = por %p68, %p69
    %p71 = scmp.ne.s32.totalorder %s59, %s60
    %p72 = scmp.eq.s32.totalorder %s29, 1
    %p73 = por %p71, %p72
    %p75 = scmp.ne.s32.totalorder %s60, %s74
    %p76 = scmp.eq.s32.totalorder %s29, 0
    %p77 = por %p75, %p76
    %s79 = sadd.s32 %s78, 1
    %p82 = scmp.eq.s32.totalorder %s23, 1
    %p83 = scmp.ne.s32.totalorder %s78, %s80
    %p84 = scmp.eq.s32.totalorder %s23, 0
    %p85 = por %p83, %p84
    %p86 = scmp.ne.s32.totalorder %s78, %s80
    %p87 = scmp.eq.s32.totalorder %s28, 1
    %p88 = por %p86, %p87
    %p89 = scmp.ne.s32.totalorder %s80, %s81
    %p90 = scmp.eq.s32.totalorder %s28, 0
    %p91 = por %p89, %p90
    %p92 = scmp.ne.s32.totalorder %s80, %s81
    %p93 = scmp.eq.s32.totalorder %s29, 1
    %p94 = por %p92, %p93
    %p96 = scmp.ne.s32.totalorder %s81, %s95
    %p97 = scmp.eq.s32.totalorder %s29, 0
    %p98 = por %p96, %p97
    %s100 = sadd.s32 %s99, 1
    %p103 = scmp.eq.s32.totalorder %s23, 1
    %p104 = scmp.ne.s32.totalorder %s99, %s101
    %p105 = scmp.eq.s32.totalorder %s23, 0
    %p106 = por %p104, %p105
    %p107 = scmp.ne.s32.totalorder %s99, %s101
    %p108 = scmp.eq.s32.totalorder %s28, 1
    %p109 = por %p107, %p108
    %p110 = scmp.ne.s32.totalorder %s101, %s102
    %p111 = scmp.eq.s32.totalorder %s28, 0
    %p112 = por %p110, %p111
    %p113 = scmp.ne.s32.totalorder %s101, %s102
    %p114 = scmp.eq.s32.totalorder %s29, 1
    %p115 = por %p113, %p114
    %p117 = scmp.ne.s32.totalorder %s102, %s116
    %p118 = scmp.eq.s32.totalorder %s29, 0
    %p119 = por %p117, %p118
    %s121 = sadd.s32 %s120, 1
    %p124 = scmp.eq.s32.totalorder %s23, 1
    %p125 = scmp.ne.s32.totalorder %s120, %s122
    %p126 = scmp.eq.s32.totalorder %s23, 0
    %p127 = por %p125, %p126
    %p128 = scmp.ne.s32.totalorder %s120, %s122
    %p129 = scmp.eq.s32.totalorder %s28, 1
    %p130 = por %p128, %p129
    %p131 = scmp.ne.s32.totalorder %s122, %s123
    %p132 = scmp.eq.s32.totalorder %s28, 0
    %p133 = por %p131, %p132
    %p134 = scmp.ne.s32.totalorder %s122, %s123
    %p135 = scmp.eq.s32.totalorder %s29, 1
    %p136 = por %p134, %p135
    %p138 = scmp.ne.s32.totalorder %s123, %s137
    %p139 = scmp.eq.s32.totalorder %s29, 0
    %p140 = por %p138, %p139
    %s142 = sadd.s32 %s141, 1
    %p145 = scmp.eq.s32.totalorder %s23, 1
    %p146 = scmp.ne.s32.totalorder %s141, %s143
    %p147 = scmp.eq.s32.totalorder %s23, 0
    %p148 = por %p146, %p147
    %p149 = scmp.ne.s32.totalorder %s141, %s143
    %p150 = scmp.eq.s32.totalorder %s28, 1
    %p151 = por %p149, %p150
    %p152 = scmp.ne.s32.totalorder %s143, %s144
    %p153 = scmp.eq.s32.totalorder %s28, 0
    %p154 = por %p152, %p153
    %p155 = scmp.ne.s32.totalorder %s143, %s144
    %p156 = scmp.eq.s32.totalorder %s29, 1
    %p157 = por %p155, %p156
    %p159 = scmp.ne.s32.totalorder %s144, %s158
    %p160 = scmp.eq.s32.totalorder %s29, 0
    %p161 = por %p159, %p160
    %s163 = sadd.s32 %s162, 1
    %p166 = scmp.eq.s32.totalorder %s23, 1
    %p167 = scmp.ne.s32.totalorder %s162, %s164
    %p168 = scmp.eq.s32.totalorder %s23, 0
    %p169 = por %p167, %p168
    %p170 = scmp.ne.s32.totalorder %s162, %s164
    %p171 = scmp.eq.s32.totalorder %s28, 1
    %p172 = por %p170, %p171
    %p173 = scmp.ne.s32.totalorder %s164, %s165
    %p174 = scmp.eq.s32.totalorder %s28, 0
    %p175 = por %p173, %p174
    %p176 = scmp.ne.s32.totalorder %s164, %s165
    %p177 = scmp.eq.s32.totalorder %s29, 1
    %p178 = por %p176, %p177
    %p180 = scmp.ne.s32.totalorder %s165, %s179
    %p181 = scmp.eq.s32.totalorder %s29, 0
    %p182 = por %p180, %p181
    %s184 = sadd.s32 %s183, 1
    %p187 = scmp.eq.s32.totalorder %s23, 1
    %p188 = scmp.ne.s32.totalorder %s183, %s185
    %p189 = scmp.eq.s32.totalorder %s23, 0
    %p190 = por %p188, %p189
    %p191 = scmp.ne.s32.totalorder %s183, %s185
    %p192 = scmp.eq.s32.totalorder %s28, 1
    %p193 = por %p191, %p192
    %p194 = scmp.ne.s32.totalorder %s185, %s186
    %p195 = scmp.eq.s32.totalorder %s28, 0
    %p196 = por %p194, %p195
    %p197 = scmp.ne.s32.totalorder %s185, %s186
    %p198 = scmp.eq.s32.totalorder %s29, 1
    %p199 = por %p197, %p198
    %p201 = scmp.ne.s32.totalorder %s186, %s200
    %p202 = scmp.eq.s32.totalorder %s29, 0
    %p203 = por %p201, %p202
    %s205 = sadd.s32 %s204, 1
    %p208 = scmp.eq.s32.totalorder %s23, 1
    %p209 = scmp.ne.s32.totalorder %s204, %s206
    %p210 = scmp.eq.s32.totalorder %s23, 0
    %p211 = por %p209, %p210
    %p212 = scmp.ne.s32.totalorder %s204, %s206
    %p213 = scmp.eq.s32.totalorder %s28, 1
    %p214 = por %p212, %p213
    %p215 = scmp.ne.s32.totalorder %s206, %s207
    %p216 = scmp.eq.s32.totalorder %s28, 0
    %p217 = por %p215, %p216
    %p218 = scmp.ne.s32.totalorder %s206, %s207
    %p219 = scmp.eq.s32.totalorder %s29, 1
    %p220 = por %p218, %p219
    %p222 = scmp.ne.s32.totalorder %s207, %s221
    %p223 = scmp.eq.s32.totalorder %s29, 0
    %p224 = por %p222, %p223
    %s226 = sadd.s32 %s225, 1
    %p229 = scmp.eq.s32.totalorder %s23, 1
    %p230 = scmp.ne.s32.totalorder %s225, %s227
    %p231 = scmp.eq.s32.totalorder %s23, 0
    %p232 = por %p230, %p231
    %p233 = scmp.ne.s32.totalorder %s225, %s227
    %p234 = scmp.eq.s32.totalorder %s28, 1
    %p235 = por %p233, %p234
    %p236 = scmp.ne.s32.totalorder %s227, %s228
    %p237 = scmp.eq.s32.totalorder %s28, 0
    %p238 = por %p236, %p237
    %p239 = scmp.ne.s32.totalorder %s227, %s228
    %p240 = scmp.eq.s32.totalorder %s29, 1
    %p241 = por %p239, %p240
    %p243 = scmp.ne.s32.totalorder %s228, %s242
    %p244 = scmp.eq.s32.totalorder %s29, 0
    %p245 = por %p243, %p244
    %s247 = sadd.s32 %s246, 1
    %p250 = scmp.eq.s32.totalorder %s23, 1
    %p251 = scmp.ne.s32.totalorder %s246, %s248
    %p252 = scmp.eq.s32.totalorder %s23, 0
    %p253 = por %p251, %p252
    %p254 = scmp.ne.s32.totalorder %s246, %s248
    %p255 = scmp.eq.s32.totalorder %s28, 1
    %p256 = por %p254, %p255
    %p257 = scmp.ne.s32.totalorder %s248, %s249
    %p258 = scmp.eq.s32.totalorder %s28, 0
    %p259 = por %p257, %p258
    %p260 = scmp.ne.s32.totalorder %s248, %s249
    %p261 = scmp.eq.s32.totalorder %s29, 1
    %p262 = por %p260, %p261
    %p264 = scmp.ne.s32.totalorder %s249, %s263
    %p265 = scmp.eq.s32.totalorder %s29, 0
    %p266 = por %p264, %p265
    %s268 = sadd.s32 %s267, 1
    %p271 = scmp.eq.s32.totalorder %s23, 1
    %p272 = scmp.ne.s32.totalorder %s267, %s269
    %p273 = scmp.eq.s32.totalorder %s23, 0
    %p274 = por %p272, %p273
    %p275 = scmp.ne.s32.totalorder %s267, %s269
    %p276 = scmp.eq.s32.totalorder %s28, 1
    %p277 = por %p275, %p276
    %p278 = scmp.ne.s32.totalorder %s269, %s270
    %p279 = scmp.eq.s32.totalorder %s28, 0
    %p280 = por %p278, %p279
    %p281 = scmp.ne.s32.totalorder %s269, %s270
    %p282 = scmp.eq.s32.totalorder %s29, 1
    %p283 = por %p281, %p282
    %p285 = scmp.ne.s32.totalorder %s270, %s284
    %p286 = scmp.eq.s32.totalorder %s29, 0
    %p287 = por %p285, %p286
    %s289 = sadd.s32 %s288, 1
    %p292 = scmp.eq.s32.totalorder %s23, 1
    %p293 = scmp.ne.s32.totalorder %s288, %s290
    %p294 = scmp.eq.s32.totalorder %s23, 0
    %p295 = por %p293, %p294
    %p296 = scmp.ne.s32.totalorder %s288, %s290
    %p297 = scmp.eq.s32.totalorder %s28, 1
    %p298 = por %p296, %p297
    %p299 = scmp.ne.s32.totalorder %s290, %s291
    %p300 = scmp.eq.s32.totalorder %s28, 0
    %p301 = por %p299, %p300
    %p302 = scmp.ne.s32.totalorder %s290, %s291
    %p303 = scmp.eq.s32.totalorder %s29, 1
    %p304 = por %p302, %p303
    %p306 = scmp.ne.s32.totalorder %s291, %s305
    %p307 = scmp.eq.s32.totalorder %s29, 0
    %p308 = por %p306, %p307
    %s310 = sadd.s32 %s309, 1
    %p313 = scmp.eq.s32.totalorder %s23, 1
    %p314 = scmp.ne.s32.totalorder %s309, %s311
    %p315 = scmp.eq.s32.totalorder %s23, 0
    %p316 = por %p314, %p315
    %p317 = scmp.ne.s32.totalorder %s309, %s311
    %p318 = scmp.eq.s32.totalorder %s28, 1
    %p319 = por %p317, %p318
    %p320 = scmp.ne.s32.totalorder %s311, %s312
    %p321 = scmp.eq.s32.totalorder %s28, 0
    %p322 = por %p320, %p321
    %p323 = scmp.ne.s32.totalorder %s311, %s312
    %p324 = scmp.eq.s32.totalorder %s29, 1
    %p325 = por %p323, %p324
    %p327 = scmp.ne.s32.totalorder %s312, %s326
    %p328 = scmp.eq.s32.totalorder %s29, 0
    %p329 = por %p327, %p328
    %s331 = sadd.s32 %s330, 1
    %p334 = scmp.eq.s32.totalorder %s23, 1
    %p335 = scmp.ne.s32.totalorder %s330, %s332
    %p336 = scmp.eq.s32.totalorder %s23, 0
    %p337 = por %p335, %p336
    %p338 = scmp.ne.s32.totalorder %s330, %s332
    %p339 = scmp.eq.s32.totalorder %s28, 1
    %p340 = por %p338, %p339
    %p341 = scmp.ne.s32.totalorder %s332, %s333
    %p342 = scmp.eq.s32.totalorder %s28, 0
    %p343 = por %p341, %p342
    %p344 = scmp.ne.s32.totalorder %s332, %s333
    %p345 = scmp.eq.s32.totalorder %s29, 1
    %p346 = por %p344, %p345
    %p348 = scmp.ne.s32.totalorder %s333, %s347
    %p349 = scmp.eq.s32.totalorder %s29, 0
    %p350 = por %p348, %p349
    %s351 = ssub.s32 %s23, %s30
    %p352 = scmp.eq.s32.totalorder %s351, 0
    %s354 = sadd.s32 %s353, 1
    %s355 = scalar_select %p352, %s353, %s354
    %p358 = pneg %p352
    %p359 = scmp.eq.s32.totalorder %s23, 1
    %p360 = por %p358, %p359
    %p361 = scmp.ne.s32.totalorder %s353, %s356
    %p362 = scmp.eq.s32.totalorder %s23, 0
    %p363 = por %p361, %p362
    %p364 = scmp.ne.s32.totalorder %s353, %s356
    %p365 = scmp.eq.s32.totalorder %s28, 1
    %p366 = por %p364, %p365
    %p367 = scmp.ne.s32.totalorder %s356, %s357
    %p368 = scmp.eq.s32.totalorder %s28, 0
    %p369 = por %p367, %p368
    %p370 = scmp.ne.s32.totalorder %s356, %s357
    %p371 = scmp.eq.s32.totalorder %s29, 1
    %p372 = por %p370, %p371
    %p374 = scmp.ne.s32.totalorder %s357, %s373
    %p375 = scmp.eq.s32.totalorder %s29, 0
    %p376 = por %p374, %p375
    %p377 = scmp.le.s32.totalorder 1, %s23
    %p378 = scmp.lt.s32.totalorder %s23, 3
    %p379 = pnand %p377, %p378
    %p380 = pneg %p379
    // Predicated region
    $region9: #{forward.1} parent=5 // pred_check
      _
    $region10: #{forward.1} parent=5 // pred_check_branch
      %382 = sbr.rel (%p379) target = $region12
    $region11: #{forward.1} parent=5 // pred_region
      %s383 = ssub.s32 %s23, 1
      // Predicated region
      $region13: #{forward.1} parent=11 // pred_check
        %p384 = pneg %p70
      $region14: #{forward.1} parent=11 // pred_check_branch
        %386 = sbr.rel (%p384) target = $region16
      $region15: #{forward.1} parent=11 // pred_region
        _
      $region16: #{forward.1} parent=11 // pred_fallthru
        _
      // Predicated region
      $region17: #{forward.1} parent=11 // pred_check
        %p387 = pneg %p91
      $region18: #{forward.1} parent=11 // pred_check_branch
        %389 = sbr.rel (%p387) target = $region20
      $region19: #{forward.1} parent=11 // pred_region
        _
      $region20: #{forward.1} parent=11 // pred_fallthru
        _
      // Predicated region
      $region21: #{forward.1} parent=11 // pred_check
        %p390 = pneg %p112
      $region22: #{forward.1} parent=11 // pred_check_branch
        %392 = sbr.rel (%p390) target = $region24
      $region23: #{forward.1} parent=11 // pred_region
        _
      $region24: #{forward.1} parent=11 // pred_fallthru
        _
      // Predicated region
      $region25: #{forward.1} parent=11 // pred_check
        %p393 = pneg %p133
      $region26: #{forward.1} parent=11 // pred_check_branch
        %395 = sbr.rel (%p393) target = $region28
      $region27: #{forward.1} parent=11 // pred_region
        _
      $region28: #{forward.1} parent=11 // pred_fallthru
        _
      // Predicated region
      $region29: #{forward.1} parent=11 // pred_check
        %p396 = pneg %p154
      $region30: #{forward.1} parent=11 // pred_check_branch
        %398 = sbr.rel (%p396) target = $region32
      $region31: #{forward.1} parent=11 // pred_region
        _
      $region32: #{forward.1} parent=11 // pred_fallthru
        _
      // Predicated region
      $region33: #{forward.1} parent=11 // pred_check
        %p399 = pneg %p175
      $region34: #{forward.1} parent=11 // pred_check_branch
        %401 = sbr.rel (%p399) target = $region36
      $region35: #{forward.1} parent=11 // pred_region
        _
      $region36: #{forward.1} parent=11 // pred_fallthru
        _
      // Predicated region
      $region37: #{forward.1} parent=11 // pred_check
        %p402 = pneg %p196
      $region38: #{forward.1} parent=11 // pred_check_branch
        %404 = sbr.rel (%p402) target = $region40
      $region39: #{forward.1} parent=11 // pred_region
        _
      $region40: #{forward.1} parent=11 // pred_fallthru
        _
      // Predicated region
      $region41: #{forward.1} parent=11 // pred_check
        %p405 = pneg %p217
      $region42: #{forward.1} parent=11 // pred_check_branch
        %407 = sbr.rel (%p405) target = $region44
      $region43: #{forward.1} parent=11 // pred_region
        _
      $region44: #{forward.1} parent=11 // pred_fallthru
        _
      // Predicated region
      $region45: #{forward.1} parent=11 // pred_check
        %p408 = pneg %p238
      $region46: #{forward.1} parent=11 // pred_check_branch
        %410 = sbr.rel (%p408) target = $region48
      $region47: #{forward.1} parent=11 // pred_region
        _
      $region48: #{forward.1} parent=11 // pred_fallthru
        _
      // Predicated region
      $region49: #{forward.1} parent=11 // pred_check
        %p411 = pneg %p259
      $region50: #{forward.1} parent=11 // pred_check_branch
        %413 = sbr.rel (%p411) target = $region52
      $region51: #{forward.1} parent=11 // pred_region
        _
      $region52: #{forward.1} parent=11 // pred_fallthru
        _
      // Predicated region
      $region53: #{forward.1} parent=11 // pred_check
        %p414 = pneg %p280
      $region54: #{forward.1} parent=11 // pred_check_branch
        %416 = sbr.rel (%p414) target = $region56
      $region55: #{forward.1} parent=11 // pred_region
        _
      $region56: #{forward.1} parent=11 // pred_fallthru
        _
      // Predicated region
      $region57: #{forward.1} parent=11 // pred_check
        %p417 = pneg %p301
      $region58: #{forward.1} parent=11 // pred_check_branch
        %419 = sbr.rel (%p417) target = $region60
      $region59: #{forward.1} parent=11 // pred_region
        _
      $region60: #{forward.1} parent=11 // pred_fallthru
        _
      // Predicated region
      $region61: #{forward.1} parent=11 // pred_check
        %p420 = pneg %p322
      $region62: #{forward.1} parent=11 // pred_check_branch
        %422 = sbr.rel (%p420) target = $region64
      $region63: #{forward.1} parent=11 // pred_region
        _
      $region64: #{forward.1} parent=11 // pred_fallthru
        _
      // Predicated region
      $region65: #{forward.1} parent=11 // pred_check
        %p423 = pneg %p343
      $region66: #{forward.1} parent=11 // pred_check_branch
        %425 = sbr.rel (%p423) target = $region68
      $region67: #{forward.1} parent=11 // pred_region
        _
      $region68: #{forward.1} parent=11 // pred_fallthru
        _
    $region12: #{forward.1} parent=5 // pred_fallthru
      _
    %p426 = scmp.lt.s32.totalorder %s23, 2
    // Predicated region
    $region69: #{forward.1} parent=5 // pred_check
      %p427 = pneg %p426
    $region70: #{forward.1} parent=5 // pred_check_branch
      %429 = sbr.rel (%p427) target = $region72
    $region71: #{forward.1} parent=5 // pred_region
      // Predicated region
      $region73: #{forward.1} parent=71 // pred_check
        %p430 = pneg %p43
      $region74: #{forward.1} parent=71 // pred_check_branch
        %432 = sbr.rel (%p430) target = $region76
      $region75: #{forward.1} parent=71 // pred_region
        %p433 = scmp.lt.s32.totalorder %s23, 1
        %s434 = scalar_select %p433, %s23, 1
        %s435 = smul.addr %s434, 46
        %s436 = smul.addr %s435, 8
        %s437 = scalar_lea.vmem %s0, %s436
      $region76: #{forward.1} parent=71 // pred_fallthru
        _
    $region72: #{forward.1} parent=5 // pred_fallthru
      _
    %p438 = scmp.le.s32.totalorder 1, %s23
    %p439 = scmp.lt.s32.totalorder %s23, 3
    %p440 = pnand %p438, %p439
    %p441 = pneg %p440
    // Predicated region
    $region77: #{forward.1} parent=5 // pred_check
      _
    $region78: #{forward.1} parent=5 // pred_check_branch
      %443 = sbr.rel (%p440) target = $region80
    $region79: #{forward.1} parent=5 // pred_region
      %s444 = ssub.s32 %s23, 1
      %p445 = scmp.lt.s32.totalorder %s28, 1
      %s446 = scalar_select %p445, %s28, 1
      %s447 = smul.addr %s446, 46
      %s448 = smul.addr %s447, 8
      %s449 = scalar_lea.vmem %s0, %s448
      %p450 = pneg %p49
      %p451 = pneg %p46
      %p452 = pneg %p70
      %p453 = pneg %p67
      %p454 = pneg %p91
      %p455 = pneg %p88
      %p456 = pneg %p112
      %p457 = pneg %p109
      %p458 = pneg %p133
      %p459 = pneg %p130
      %p460 = pneg %p154
      %p461 = pneg %p151
      %p462 = pneg %p175
      %p463 = pneg %p172
      %p464 = pneg %p196
      %p465 = pneg %p193
      %p466 = pneg %p217
      %p467 = pneg %p214
      %p468 = pneg %p238
      %p469 = pneg %p235
      %p470 = pneg %p259
      %p471 = pneg %p256
      %p472 = pneg %p280
      %p473 = pneg %p277
      %p474 = pneg %p301
      %p475 = pneg %p298
      %p476 = pneg %p322
      %p477 = pneg %p319
      %p478 = pneg %p343
      %p479 = pneg %p340
      %p480 = pneg %p369
      %p481 = pneg %p366
      %p482 = scmp.lt.s32.totalorder %s28, 1
      %s483 = scalar_select %p482, %s28, 1
      %s484 = smul.addr %s483, 4
      %s485 = scalar_lea.vmem %s15, %s484
      %p486 = scmp.lt.s32.totalorder %s28, 1
      %s487 = scalar_select %p486, %s28, 1
      %s488 = smul.addr %s487, 46
      %s489 = smul.addr %s488, 8
      %s490 = scalar_lea.vmem %s0, %s489
      %p491 = scmp.lt.s32.totalorder %s28, 1
      %s492 = scalar_select %p491, %s28, 1
      %s493 = smul.addr %s492, 4
      %s494 = scalar_lea.vmem %s15, %s493
      %v496 = vld [vmem:[%s490] sm:$0xff]
      %v497 = vld [vmem:[%s490 + $0x8] sm:$0xff]
      %v498 = vld [vmem:[%s490 + $0x10] sm:$0xff]
      %v499 = vld [vmem:[%s490 + $0x18] sm:$0xff]
      %v500 = vld [vmem:[%s490 + $0x20] sm:$0xff]
      %v501 = vld [vmem:[%s490 + $0x28] sm:$0xff]
      %v502 = vld [vmem:[%s490 + $0x30] sm:$0xff]
      %v503 = vld [vmem:[%s490 + $0x38] sm:$0xff]
      %v504 = vld [vmem:[%s490 + $0x40] sm:$0xff]
      %v505 = vld [vmem:[%s490 + $0x48] sm:$0xff]
      %v506 = vld [vmem:[%s490 + $0x50] sm:$0xff]
      %v507 = vld [vmem:[%s490 + $0x58] sm:$0xff]
      %v508 = vld [vmem:[%s490 + $0x60] sm:$0xff]
      %v509 = vld [vmem:[%s490 + $0x68] sm:$0xff]
      %v510 = vld [vmem:[%s490 + $0x70] sm:$0xff]
      %v511 = vld [vmem:[%s490 + $0x78] sm:$0xff]
      %v512 = vld [vmem:[%s490 + $0x80] sm:$0xff]
      %v513 = vld [vmem:[%s490 + $0x88] sm:$0xff]
      %v514 = vld [vmem:[%s490 + $0x90] sm:$0xff]
      %v515 = vld [vmem:[%s490 + $0x98] sm:$0xff]
      %v516 = vld [vmem:[%s490 + $0xa0] sm:$0xff]
      %v517 = vld [vmem:[%s490 + $0xa8] sm:$0xff]
      %v518 = vld [vmem:[%s490 + $0xb0] sm:$0xff]
      %v519 = vld [vmem:[%s490 + $0xb8] sm:$0xff]
      %v520 = vld [vmem:[%s490 + $0xc0] sm:$0xff]
      %v521 = vld [vmem:[%s490 + $0xc8] sm:$0xff]
      %v522 = vld [vmem:[%s490 + $0xd0] sm:$0xff]
      %v523 = vld [vmem:[%s490 + $0xd8] sm:$0xff]
      %v524 = vld [vmem:[%s490 + $0xe0] sm:$0xff]
      %v525 = vld [vmem:[%s490 + $0xe8] sm:$0xff]
      %v526 = vld [vmem:[%s490 + $0xf0] sm:$0xff]
      %v527 = vld [vmem:[%s490 + $0xf8] sm:$0xff]
      %v528 = vld [vmem:[%s490 + $0x100] sm:$0xff]
      %v529 = vld [vmem:[%s490 + $0x108] sm:$0xff]
      %v530 = vld [vmem:[%s490 + $0x110] sm:$0xff]
      %v531 = vld [vmem:[%s490 + $0x118] sm:$0xff]
      %v532 = vld [vmem:[%s490 + $0x120] sm:$0xff]
      %v533 = vld [vmem:[%s490 + $0x128] sm:$0xff]
      %v534 = vld [vmem:[%s490 + $0x130] sm:$0xff]
      %v535 = vld [vmem:[%s490 + $0x138] sm:$0xff]
      %v536 = vld [vmem:[%s490 + $0x140] sm:$0xff]
      %v537 = vld [vmem:[%s490 + $0x148] sm:$0xff]
      %v538 = vld [vmem:[%s490 + $0x150] sm:$0xff]
      %v539 = vld [vmem:[%s490 + $0x158] sm:$0xff]
      %v540 = vld [vmem:[%s490 + $0x160] sm:$0xff]
      %v541 = vld [vmem:[%s490 + $0x168] sm:$0x3]
      %vm583 = vcmask 1046528
      %v584 = vrot.slane %v496, 1
      %v585 = vrot.slane %v497, 1
      %v586 = vsel %vm583, %v584, %v585
      %v587 = vrot.slane %v498, 1
      %v588 = vsel %vm583, %v585, %v587
      %v589 = vrot.slane %v499, 1
      %v590 = vsel %vm583, %v587, %v589
      %v591 = vrot.slane %v500, 1
      %v592 = vsel %vm583, %v589, %v591
      %v593 = vrot.slane %v501, 1
      %v594 = vsel %vm583, %v591, %v593
      %v595 = vrot.slane %v502, 1
      %v596 = vsel %vm583, %v593, %v595
      %v597 = vrot.slane %v503, 1
      %v598 = vsel %vm583, %v595, %v597
      %v599 = vrot.slane %v504, 1
      %v600 = vsel %vm583, %v597, %v599
      %v601 = vrot.slane %v505, 1
      %v602 = vsel %vm583, %v599, %v601
      %v603 = vrot.slane %v506, 1
      %v604 = vsel %vm583, %v601, %v603
      %v605 = vrot.slane %v507, 1
      %v606 = vsel %vm583, %v603, %v605
      %v607 = vrot.slane %v508, 1
      %v608 = vsel %vm583, %v605, %v607
      %v609 = vrot.slane %v509, 1
      %v610 = vsel %vm583, %v607, %v609
      %v611 = vrot.slane %v510, 1
      %v612 = vsel %vm583, %v609, %v611
      %v613 = vrot.slane %v511, 1
      %v614 = vsel %vm583, %v611, %v613
      %v615 = vrot.slane %v512, 1
      %v616 = vsel %vm583, %v613, %v615
      %v617 = vrot.slane %v513, 1
      %v618 = vsel %vm583, %v615, %v617
      %v619 = vrot.slane %v514, 1
      %v620 = vsel %vm583, %v617, %v619
      %v621 = vrot.slane %v515, 1
      %v622 = vsel %vm583, %v619, %v621
      %v623 = vrot.slane %v516, 1
      %v624 = vsel %vm583, %v621, %v623
      %v625 = vrot.slane %v517, 1
      %v626 = vsel %vm583, %v623, %v625
      %v627 = vrot.slane %v518, 1
      %v628 = vsel %vm583, %v625, %v627
      %v629 = vrot.slane %v519, 1
      %v630 = vsel %vm583, %v627, %v629
      %v631 = vrot.slane %v520, 1
      %v632 = vsel %vm583, %v629, %v631
      %v633 = vrot.slane %v521, 1
      %v634 = vsel %vm583, %v631, %v633
      %v635 = vrot.slane %v522, 1
      %v636 = vsel %vm583, %v633, %v635
      %v637 = vrot.slane %v523, 1
      %v638 = vsel %vm583, %v635, %v637
      %v639 = vrot.slane %v524, 1
      %v640 = vsel %vm583, %v637, %v639
      %v641 = vrot.slane %v525, 1
      %v642 = vsel %vm583, %v639, %v641
      %v643 = vrot.slane %v526, 1
      %v644 = vsel %vm583, %v641, %v643
      %v645 = vrot.slane %v527, 1
      %v646 = vsel %vm583, %v643, %v645
      %v647 = vrot.slane %v528, 1
      %v648 = vsel %vm583, %v645, %v647
      %v649 = vrot.slane %v529, 1
      %v650 = vsel %vm583, %v647, %v649
      %v651 = vrot.slane %v530, 1
      %v652 = vsel %vm583, %v649, %v651
      %v653 = vrot.slane %v531, 1
      %v654 = vsel %vm583, %v651, %v653
      %v655 = vrot.slane %v532, 1
      %v656 = vsel %vm583, %v653, %v655
      %v657 = vrot.slane %v533, 1
      %v658 = vsel %vm583, %v655, %v657
      %v659 = vrot.slane %v534, 1
      %v660 = vsel %vm583, %v657, %v659
      %v661 = vrot.slane %v535, 1
      %v662 = vsel %vm583, %v659, %v661
      %v663 = vrot.slane %v536, 1
      %v664 = vsel %vm583, %v661, %v663
      %665 = vrot.lane.b32.xlu0 %v586, 3
      %v666 = vpop.permute.xlu0 %665
      %667 = vrot.lane.b32.xlu0 %v588, 3
      %v668 = vpop.permute.xlu0 %667
      %669 = vrot.lane.b32.xlu0 %v590, 3
      %v670 = vpop.permute.xlu0 %669
      %671 = vrot.lane.b32.xlu0 %v592, 3
      %v672 = vpop.permute.xlu0 %671
      %673 = vrot.lane.b32.xlu0 %v594, 3
      %v674 = vpop.permute.xlu0 %673
      %675 = vrot.lane.b32.xlu0 %v596, 3
      %v676 = vpop.permute.xlu0 %675
      %677 = vrot.lane.b32.xlu0 %v598, 3
      %v678 = vpop.permute.xlu0 %677
      %679 = vrot.lane.b32.xlu0 %v600, 3
      %v680 = vpop.permute.xlu0 %679
      %681 = vrot.lane.b32.xlu0 %v602, 3
      %v682 = vpop.permute.xlu0 %681
      %683 = vrot.lane.b32.xlu0 %v604, 3
      %v684 = vpop.permute.xlu0 %683
      %685 = vrot.lane.b32.xlu0 %v606, 3
      %v686 = vpop.permute.xlu0 %685
      %687 = vrot.lane.b32.xlu0 %v608, 3
      %v688 = vpop.permute.xlu0 %687
      %689 = vrot.lane.b32.xlu0 %v610, 3
      %v690 = vpop.permute.xlu0 %689
      %691 = vrot.lane.b32.xlu0 %v612, 3
      %v692 = vpop.permute.xlu0 %691
      %693 = vrot.lane.b32.xlu0 %v614, 3
      %v694 = vpop.permute.xlu0 %693
      %695 = vrot.lane.b32.xlu0 %v616, 3
      %v696 = vpop.permute.xlu0 %695
      %697 = vrot.lane.b32.xlu0 %v618, 3
      %v698 = vpop.permute.xlu0 %697
      %699 = vrot.lane.b32.xlu0 %v620, 3
      %v700 = vpop.permute.xlu0 %699
      %701 = vrot.lane.b32.xlu0 %v622, 3
      %v702 = vpop.permute.xlu0 %701
      %703 = vrot.lane.b32.xlu0 %v624, 3
      %v704 = vpop.permute.xlu0 %703
      %705 = vrot.lane.b32.xlu0 %v626, 3
      %v706 = vpop.permute.xlu0 %705
      %707 = vrot.lane.b32.xlu0 %v628, 3
      %v708 = vpop.permute.xlu0 %707
      %709 = vrot.lane.b32.xlu0 %v630, 3
      %v710 = vpop.permute.xlu0 %709
      %711 = vrot.lane.b32.xlu0 %v632, 3
      %v712 = vpop.permute.xlu0 %711
      %713 = vrot.lane.b32.xlu0 %v634, 3
      %v714 = vpop.permute.xlu0 %713
      %715 = vrot.lane.b32.xlu0 %v636, 3
      %v716 = vpop.permute.xlu0 %715
      %717 = vrot.lane.b32.xlu0 %v638, 3
      %v718 = vpop.permute.xlu0 %717
      %719 = vrot.lane.b32.xlu0 %v640, 3
      %v720 = vpop.permute.xlu0 %719
      %721 = vrot.lane.b32.xlu0 %v642, 3
      %v722 = vpop.permute.xlu0 %721
      %723 = vrot.lane.b32.xlu0 %v644, 3
      %v724 = vpop.permute.xlu0 %723
      %725 = vrot.lane.b32.xlu0 %v646, 3
      %v726 = vpop.permute.xlu0 %725
      %727 = vrot.lane.b32.xlu0 %v648, 3
      %v728 = vpop.permute.xlu0 %727
      %729 = vrot.lane.b32.xlu0 %v650, 3
      %v730 = vpop.permute.xlu0 %729
      %731 = vrot.lane.b32.xlu0 %v652, 3
      %v732 = vpop.permute.xlu0 %731
      %733 = vrot.lane.b32.xlu0 %v654, 3
      %v734 = vpop.permute.xlu0 %733
      %735 = vrot.lane.b32.xlu0 %v656, 3
      %v736 = vpop.permute.xlu0 %735
      %737 = vrot.lane.b32.xlu0 %v658, 3
      %v738 = vpop.permute.xlu0 %737
      %739 = vrot.lane.b32.xlu0 %v660, 3
      %v740 = vpop.permute.xlu0 %739
      %741 = vrot.lane.b32.xlu0 %v662, 3
      %v742 = vpop.permute.xlu0 %741
      %743 = vrot.lane.b32.xlu0 %v664, 3
      %v744 = vpop.permute.xlu0 %743
      %745 = vrot.lane.b32.xlu0 %v663, 3
      %v746 = vpop.permute.xlu0 %745
      %vm788 = vcmask 1045504
      %v789 = vrot.slane %v496, 2
      %v790 = vrot.slane %v497, 2
      %v791 = vsel %vm788, %v789, %v790
      %v792 = vrot.slane %v498, 2
      %v793 = vsel %vm788, %v790, %v792
      %v794 = vrot.slane %v499, 2
      %v795 = vsel %vm788, %v792, %v794
      %v796 = vrot.slane %v500, 2
      %v797 = vsel %vm788, %v794, %v796
      %v798 = vrot.slane %v501, 2
      %v799 = vsel %vm788, %v796, %v798
      %v800 = vrot.slane %v502, 2
      %v801 = vsel %vm788, %v798, %v800
      %v802 = vrot.slane %v503, 2
      %v803 = vsel %vm788, %v800, %v802
      %v804 = vrot.slane %v504, 2
      %v805 = vsel %vm788, %v802, %v804
      %v806 = vrot.slane %v505, 2
      %v807 = vsel %vm788, %v804, %v806
      %v808 = vrot.slane %v506, 2
      %v809 = vsel %vm788, %v806, %v808
      %v810 = vrot.slane %v507, 2
      %v811 = vsel %vm788, %v808, %v810
      %v812 = vrot.slane %v508, 2
      %v813 = vsel %vm788, %v810, %v812
      %v814 = vrot.slane %v509, 2
      %v815 = vsel %vm788, %v812, %v814
      %v816 = vrot.slane %v510, 2
      %v817 = vsel %vm788, %v814, %v816
      %v818 = vrot.slane %v511, 2
      %v819 = vsel %vm788, %v816, %v818
      %v820 = vrot.slane %v512, 2
      %v821 = vsel %vm788, %v818, %v820
      %v822 = vrot.slane %v513, 2
      %v823 = vsel %vm788, %v820, %v822
      %v824 = vrot.slane %v514, 2
      %v825 = vsel %vm788, %v822, %v824
      %v826 = vrot.slane %v515, 2
      %v827 = vsel %vm788, %v824, %v826
      %v828 = vrot.slane %v516, 2
      %v829 = vsel %vm788, %v826, %v828
      %v830 = vrot.slane %v517, 2
      %v831 = vsel %vm788, %v828, %v830
      %v832 = vrot.slane %v518, 2
      %v833 = vsel %vm788, %v830, %v832
      %v834 = vrot.slane %v519, 2
      %v835 = vsel %vm788, %v832, %v834
      %v836 = vrot.slane %v520, 2
      %v837 = vsel %vm788, %v834, %v836
      %v838 = vrot.slane %v521, 2
      %v839 = vsel %vm788, %v836, %v838
      %v840 = vrot.slane %v522, 2
      %v841 = vsel %vm788, %v838, %v840
      %v842 = vrot.slane %v523, 2
      %v843 = vsel %vm788, %v840, %v842
      %v844 = vrot.slane %v524, 2
      %v845 = vsel %vm788, %v842, %v844
      %v846 = vrot.slane %v525, 2
      %v847 = vsel %vm788, %v844, %v846
      %v848 = vrot.slane %v526, 2
      %v849 = vsel %vm788, %v846, %v848
      %v850 = vrot.slane %v527, 2
      %v851 = vsel %vm788, %v848, %v850
      %v852 = vrot.slane %v528, 2
      %v853 = vsel %vm788, %v850, %v852
      %v854 = vrot.slane %v529, 2
      %v855 = vsel %vm788, %v852, %v854
      %v856 = vrot.slane %v530, 2
      %v857 = vsel %vm788, %v854, %v856
      %v858 = vrot.slane %v531, 2
      %v859 = vsel %vm788, %v856, %v858
      %v860 = vrot.slane %v532, 2
      %v861 = vsel %vm788, %v858, %v860
      %v862 = vrot.slane %v533, 2
      %v863 = vsel %vm788, %v860, %v862
      %v864 = vrot.slane %v534, 2
      %v865 = vsel %vm788, %v862, %v864
      %v866 = vrot.slane %v535, 2
      %v867 = vsel %vm788, %v864, %v866
      %v868 = vrot.slane %v536, 2
      %v869 = vsel %vm788, %v866, %v868
      %870 = vrot.lane.b32.xlu0 %v791, 6
      %v871 = vpop.permute.xlu0 %870
      %872 = vrot.lane.b32.xlu0 %v793, 6
      %v873 = vpop.permute.xlu0 %872
      %874 = vrot.lane.b32.xlu0 %v795, 6
      %v875 = vpop.permute.xlu0 %874
      %876 = vrot.lane.b32.xlu0 %v797, 6
      %v877 = vpop.permute.xlu0 %876
      %878 = vrot.lane.b32.xlu0 %v799, 6
      %v879 = vpop.permute.xlu0 %878
      %880 = vrot.lane.b32.xlu0 %v801, 6
      %v881 = vpop.permute.xlu0 %880
      %882 = vrot.lane.b32.xlu0 %v803, 6
      %v883 = vpop.permute.xlu0 %882
      %884 = vrot.lane.b32.xlu0 %v805, 6
      %v885 = vpop.permute.xlu0 %884
      %886 = vrot.lane.b32.xlu0 %v807, 6
      %v887 = vpop.permute.xlu0 %886
      %888 = vrot.lane.b32.xlu0 %v809, 6
      %v889 = vpop.permute.xlu0 %888
      %890 = vrot.lane.b32.xlu0 %v811, 6
      %v891 = vpop.permute.xlu0 %890
      %892 = vrot.lane.b32.xlu0 %v813, 6
      %v893 = vpop.permute.xlu0 %892
      %894 = vrot.lane.b32.xlu0 %v815, 6
      %v895 = vpop.permute.xlu0 %894
      %896 = vrot.lane.b32.xlu0 %v817, 6
      %v897 = vpop.permute.xlu0 %896
      %898 = vrot.lane.b32.xlu0 %v819, 6
      %v899 = vpop.permute.xlu0 %898
      %900 = vrot.lane.b32.xlu0 %v821, 6
      %v901 = vpop.permute.xlu0 %900
      %902 = vrot.lane.b32.xlu0 %v823, 6
      %v903 = vpop.permute.xlu0 %902
      %904 = vrot.lane.b32.xlu0 %v825, 6
      %v905 = vpop.permute.xlu0 %904
      %906 = vrot.lane.b32.xlu0 %v827, 6
      %v907 = vpop.permute.xlu0 %906
      %908 = vrot.lane.b32.xlu0 %v829, 6
      %v909 = vpop.permute.xlu0 %908
      %910 = vrot.lane.b32.xlu0 %v831, 6
      %v911 = vpop.permute.xlu0 %910
      %912 = vrot.lane.b32.xlu0 %v833, 6
      %v913 = vpop.permute.xlu0 %912
      %914 = vrot.lane.b32.xlu0 %v835, 6
      %v915 = vpop.permute.xlu0 %914
      %916 = vrot.lane.b32.xlu0 %v837, 6
      %v917 = vpop.permute.xlu0 %916
      %918 = vrot.lane.b32.xlu0 %v839, 6
      %v919 = vpop.permute.xlu0 %918
      %920 = vrot.lane.b32.xlu0 %v841, 6
      %v921 = vpop.permute.xlu0 %920
      %922 = vrot.lane.b32.xlu0 %v843, 6
      %v923 = vpop.permute.xlu0 %922
      %924 = vrot.lane.b32.xlu0 %v845, 6
      %v925 = vpop.permute.xlu0 %924
      %926 = vrot.lane.b32.xlu0 %v847, 6
      %v927 = vpop.permute.xlu0 %926
      %928 = vrot.lane.b32.xlu0 %v849, 6
      %v929 = vpop.permute.xlu0 %928
      %930 = vrot.lane.b32.xlu0 %v851, 6
      %v931 = vpop.permute.xlu0 %930
      %932 = vrot.lane.b32.xlu0 %v853, 6
      %v933 = vpop.permute.xlu0 %932
      %934 = vrot.lane.b32.xlu0 %v855, 6
      %v935 = vpop.permute.xlu0 %934
      %936 = vrot.lane.b32.xlu0 %v857, 6
      %v937 = vpop.permute.xlu0 %936
      %938 = vrot.lane.b32.xlu0 %v859, 6
      %v939 = vpop.permute.xlu0 %938
      %940 = vrot.lane.b32.xlu0 %v861, 6
      %v941 = vpop.permute.xlu0 %940
      %942 = vrot.lane.b32.xlu0 %v863, 6
      %v943 = vpop.permute.xlu0 %942
      %944 = vrot.lane.b32.xlu0 %v865, 6
      %v945 = vpop.permute.xlu0 %944
      %946 = vrot.lane.b32.xlu0 %v867, 6
      %v947 = vpop.permute.xlu0 %946
      %948 = vrot.lane.b32.xlu0 %v869, 6
      %v949 = vpop.permute.xlu0 %948
      %950 = vrot.lane.b32.xlu0 %v868, 6
      %v951 = vpop.permute.xlu0 %950
      %v995 = vrot.slane %v537, 2
      %v996 = vsel %vm788, %v868, %v995
      %v997 = vrot.slane %v538, 2
      %v998 = vsel %vm788, %v995, %v997
      %999 = vrot.lane.b32.xlu0 %v795, 9
      %v1000 = vpop.permute.xlu0 %999
      %1001 = vrot.lane.b32.xlu0 %v797, 9
      %v1002 = vpop.permute.xlu0 %1001
      %1003 = vrot.lane.b32.xlu0 %v799, 9
      %v1004 = vpop.permute.xlu0 %1003
      %1005 = vrot.lane.b32.xlu0 %v801, 9
      %v1006 = vpop.permute.xlu0 %1005
      %1007 = vrot.lane.b32.xlu0 %v803, 9
      %v1008 = vpop.permute.xlu0 %1007
      %1009 = vrot.lane.b32.xlu0 %v805, 9
      %v1010 = vpop.permute.xlu0 %1009
      %1011 = vrot.lane.b32.xlu0 %v807, 9
      %v1012 = vpop.permute.xlu0 %1011
      %1013 = vrot.lane.b32.xlu0 %v809, 9
      %v1014 = vpop.permute.xlu0 %1013
      %1015 = vrot.lane.b32.xlu0 %v811, 9
      %v1016 = vpop.permute.xlu0 %1015
      %1017 = vrot.lane.b32.xlu0 %v813, 9
      %v1018 = vpop.permute.xlu0 %1017
      %1019 = vrot.lane.b32.xlu0 %v815, 9
      %v1020 = vpop.permute.xlu0 %1019
      %1021 = vrot.lane.b32.xlu0 %v817, 9
      %v1022 = vpop.permute.xlu0 %1021
      %1023 = vrot.lane.b32.xlu0 %v819, 9
      %v1024 = vpop.permute.xlu0 %1023
      %1025 = vrot.lane.b32.xlu0 %v821, 9
      %v1026 = vpop.permute.xlu0 %1025
      %1027 = vrot.lane.b32.xlu0 %v823, 9
      %v1028 = vpop.permute.xlu0 %1027
      %1029 = vrot.lane.b32.xlu0 %v825, 9
      %v1030 = vpop.permute.xlu0 %1029
      %1031 = vrot.lane.b32.xlu0 %v827, 9
      %v1032 = vpop.permute.xlu0 %1031
      %1033 = vrot.lane.b32.xlu0 %v829, 9
      %v1034 = vpop.permute.xlu0 %1033
      %1035 = vrot.lane.b32.xlu0 %v831, 9
      %v1036 = vpop.permute.xlu0 %1035
      %1037 = vrot.lane.b32.xlu0 %v833, 9
      %v1038 = vpop.permute.xlu0 %1037
      %1039 = vrot.lane.b32.xlu0 %v835, 9
      %v1040 = vpop.permute.xlu0 %1039
      %1041 = vrot.lane.b32.xlu0 %v837, 9
      %v1042 = vpop.permute.xlu0 %1041
      %1043 = vrot.lane.b32.xlu0 %v839, 9
      %v1044 = vpop.permute.xlu0 %1043
      %1045 = vrot.lane.b32.xlu0 %v841, 9
      %v1046 = vpop.permute.xlu0 %1045
      %1047 = vrot.lane.b32.xlu0 %v843, 9
      %v1048 = vpop.permute.xlu0 %1047
      %1049 = vrot.lane.b32.xlu0 %v845, 9
      %v1050 = vpop.permute.xlu0 %1049
      %1051 = vrot.lane.b32.xlu0 %v847, 9
      %v1052 = vpop.permute.xlu0 %1051
      %1053 = vrot.lane.b32.xlu0 %v849, 9
      %v1054 = vpop.permute.xlu0 %1053
      %1055 = vrot.lane.b32.xlu0 %v851, 9
      %v1056 = vpop.permute.xlu0 %1055
      %1057 = vrot.lane.b32.xlu0 %v853, 9
      %v1058 = vpop.permute.xlu0 %1057
      %1059 = vrot.lane.b32.xlu0 %v855, 9
      %v1060 = vpop.permute.xlu0 %1059
      %1061 = vrot.lane.b32.xlu0 %v857, 9
      %v1062 = vpop.permute.xlu0 %1061
      %1063 = vrot.lane.b32.xlu0 %v859, 9
      %v1064 = vpop.permute.xlu0 %1063
      %1065 = vrot.lane.b32.xlu0 %v861, 9
      %v1066 = vpop.permute.xlu0 %1065
      %1067 = vrot.lane.b32.xlu0 %v863, 9
      %v1068 = vpop.permute.xlu0 %1067
      %1069 = vrot.lane.b32.xlu0 %v865, 9
      %v1070 = vpop.permute.xlu0 %1069
      %1071 = vrot.lane.b32.xlu0 %v867, 9
      %v1072 = vpop.permute.xlu0 %1071
      %1073 = vrot.lane.b32.xlu0 %v869, 9
      %v1074 = vpop.permute.xlu0 %1073
      %1075 = vrot.lane.b32.xlu0 %v996, 9
      %v1076 = vpop.permute.xlu0 %1075
      %1077 = vrot.lane.b32.xlu0 %v998, 9
      %v1078 = vpop.permute.xlu0 %1077
      %1079 = vrot.lane.b32.xlu0 %v997, 9
      %v1080 = vpop.permute.xlu0 %1079
      %vm1122 = vcmask 1044480
      %v1123 = vrot.slane %v498, 3
      %v1124 = vrot.slane %v499, 3
      %v1125 = vsel %vm1122, %v1123, %v1124
      %v1126 = vrot.slane %v500, 3
      %v1127 = vsel %vm1122, %v1124, %v1126
      %v1128 = vrot.slane %v501, 3
      %v1129 = vsel %vm1122, %v1126, %v1128
      %v1130 = vrot.slane %v502, 3
      %v1131 = vsel %vm1122, %v1128, %v1130
      %v1132 = vrot.slane %v503, 3
      %v1133 = vsel %vm1122, %v1130, %v1132
      %v1134 = vrot.slane %v504, 3
      %v1135 = vsel %vm1122, %v1132, %v1134
      %v1136 = vrot.slane %v505, 3
      %v1137 = vsel %vm1122, %v1134, %v1136
      %v1138 = vrot.slane %v506, 3
      %v1139 = vsel %vm1122, %v1136, %v1138
      %v1140 = vrot.slane %v507, 3
      %v1141 = vsel %vm1122, %v1138, %v1140
      %v1142 = vrot.slane %v508, 3
      %v1143 = vsel %vm1122, %v1140, %v1142
      %v1144 = vrot.slane %v509, 3
      %v1145 = vsel %vm1122, %v1142, %v1144
      %v1146 = vrot.slane %v510, 3
      %v1147 = vsel %vm1122, %v1144, %v1146
      %v1148 = vrot.slane %v511, 3
      %v1149 = vsel %vm1122, %v1146, %v1148
      %v1150 = vrot.slane %v512, 3
      %v1151 = vsel %vm1122, %v1148, %v1150
      %v1152 = vrot.slane %v513, 3
      %v1153 = vsel %vm1122, %v1150, %v1152
      %v1154 = vrot.slane %v514, 3
      %v1155 = vsel %vm1122, %v1152, %v1154
      %v1156 = vrot.slane %v515, 3
      %v1157 = vsel %vm1122, %v1154, %v1156
      %v1158 = vrot.slane %v516, 3
      %v1159 = vsel %vm1122, %v1156, %v1158
      %v1160 = vrot.slane %v517, 3
      %v1161 = vsel %vm1122, %v1158, %v1160
      %v1162 = vrot.slane %v518, 3
      %v1163 = vsel %vm1122, %v1160, %v1162
      %v1164 = vrot.slane %v519, 3
      %v1165 = vsel %vm1122, %v1162, %v1164
      %v1166 = vrot.slane %v520, 3
      %v1167 = vsel %vm1122, %v1164, %v1166
      %v1168 = vrot.slane %v521, 3
      %v1169 = vsel %vm1122, %v1166, %v1168
      %v1170 = vrot.slane %v522, 3
      %v1171 = vsel %vm1122, %v1168, %v1170
      %v1172 = vrot.slane %v523, 3
      %v1173 = vsel %vm1122, %v1170, %v1172
      %v1174 = vrot.slane %v524, 3
      %v1175 = vsel %vm1122, %v1172, %v1174
      %v1176 = vrot.slane %v525, 3
      %v1177 = vsel %vm1122, %v1174, %v1176
      %v1178 = vrot.slane %v526, 3
      %v1179 = vsel %vm1122, %v1176, %v1178
      %v1180 = vrot.slane %v527, 3
      %v1181 = vsel %vm1122, %v1178, %v1180
      %v1182 = vrot.slane %v528, 3
      %v1183 = vsel %vm1122, %v1180, %v1182
      %v1184 = vrot.slane %v529, 3
      %v1185 = vsel %vm1122, %v1182, %v1184
      %v1186 = vrot.slane %v530, 3
      %v1187 = vsel %vm1122, %v1184, %v1186
      %v1188 = vrot.slane %v531, 3
      %v1189 = vsel %vm1122, %v1186, %v1188
      %v1190 = vrot.slane %v532, 3
      %v1191 = vsel %vm1122, %v1188, %v1190
      %v1192 = vrot.slane %v533, 3
      %v1193 = vsel %vm1122, %v1190, %v1192
      %v1194 = vrot.slane %v534, 3
      %v1195 = vsel %vm1122, %v1192, %v1194
      %v1196 = vrot.slane %v535, 3
      %v1197 = vsel %vm1122, %v1194, %v1196
      %v1198 = vrot.slane %v536, 3
      %v1199 = vsel %vm1122, %v1196, %v1198
      %v1200 = vrot.slane %v537, 3
      %v1201 = vsel %vm1122, %v1198, %v1200
      %v1202 = vrot.slane %v538, 3
      %v1203 = vsel %vm1122, %v1200, %v1202
      %1204 = vrot.lane.b32.xlu0 %v1125, 12
      %v1205 = vpop.permute.xlu0 %1204
      %1206 = vrot.lane.b32.xlu0 %v1127, 12
      %v1207 = vpop.permute.xlu0 %1206
      %1208 = vrot.lane.b32.xlu0 %v1129, 12
      %v1209 = vpop.permute.xlu0 %1208
      %1210 = vrot.lane.b32.xlu0 %v1131, 12
      %v1211 = vpop.permute.xlu0 %1210
      %1212 = vrot.lane.b32.xlu0 %v1133, 12
      %v1213 = vpop.permute.xlu0 %1212
      %1214 = vrot.lane.b32.xlu0 %v1135, 12
      %v1215 = vpop.permute.xlu0 %1214
      %1216 = vrot.lane.b32.xlu0 %v1137, 12
      %v1217 = vpop.permute.xlu0 %1216
      %1218 = vrot.lane.b32.xlu0 %v1139, 12
      %v1219 = vpop.permute.xlu0 %1218
      %1220 = vrot.lane.b32.xlu0 %v1141, 12
      %v1221 = vpop.permute.xlu0 %1220
      %1222 = vrot.lane.b32.xlu0 %v1143, 12
      %v1223 = vpop.permute.xlu0 %1222
      %1224 = vrot.lane.b32.xlu0 %v1145, 12
      %v1225 = vpop.permute.xlu0 %1224
      %1226 = vrot.lane.b32.xlu0 %v1147, 12
      %v1227 = vpop.permute.xlu0 %1226
      %1228 = vrot.lane.b32.xlu0 %v1149, 12
      %v1229 = vpop.permute.xlu0 %1228
      %1230 = vrot.lane.b32.xlu0 %v1151, 12
      %v1231 = vpop.permute.xlu0 %1230
      %1232 = vrot.lane.b32.xlu0 %v1153, 12
      %v1233 = vpop.permute.xlu0 %1232
      %1234 = vrot.lane.b32.xlu0 %v1155, 12
      %v1235 = vpop.permute.xlu0 %1234
      %1236 = vrot.lane.b32.xlu0 %v1157, 12
      %v1237 = vpop.permute.xlu0 %1236
      %1238 = vrot.lane.b32.xlu0 %v1159, 12
      %v1239 = vpop.permute.xlu0 %1238
      %1240 = vrot.lane.b32.xlu0 %v1161, 12
      %v1241 = vpop.permute.xlu0 %1240
      %1242 = vrot.lane.b32.xlu0 %v1163, 12
      %v1243 = vpop.permute.xlu0 %1242
      %1244 = vrot.lane.b32.xlu0 %v1165, 12
      %v1245 = vpop.permute.xlu0 %1244
      %1246 = vrot.lane.b32.xlu0 %v1167, 12
      %v1247 = vpop.permute.xlu0 %1246
      %1248 = vrot.lane.b32.xlu0 %v1169, 12
      %v1249 = vpop.permute.xlu0 %1248
      %1250 = vrot.lane.b32.xlu0 %v1171, 12
      %v1251 = vpop.permute.xlu0 %1250
      %1252 = vrot.lane.b32.xlu0 %v1173, 12
      %v1253 = vpop.permute.xlu0 %1252
      %1254 = vrot.lane.b32.xlu0 %v1175, 12
      %v1255 = vpop.permute.xlu0 %1254
      %1256 = vrot.lane.b32.xlu0 %v1177, 12
      %v1257 = vpop.permute.xlu0 %1256
      %1258 = vrot.lane.b32.xlu0 %v1179, 12
      %v1259 = vpop.permute.xlu0 %1258
      %1260 = vrot.lane.b32.xlu0 %v1181, 12
      %v1261 = vpop.permute.xlu0 %1260
      %1262 = vrot.lane.b32.xlu0 %v1183, 12
      %v1263 = vpop.permute.xlu0 %1262
      %1264 = vrot.lane.b32.xlu0 %v1185, 12
      %v1265 = vpop.permute.xlu0 %1264
      %1266 = vrot.lane.b32.xlu0 %v1187, 12
      %v1267 = vpop.permute.xlu0 %1266
      %1268 = vrot.lane.b32.xlu0 %v1189, 12
      %v1269 = vpop.permute.xlu0 %1268
      %1270 = vrot.lane.b32.xlu0 %v1191, 12
      %v1271 = vpop.permute.xlu0 %1270
      %1272 = vrot.lane.b32.xlu0 %v1193, 12
      %v1273 = vpop.permute.xlu0 %1272
      %1274 = vrot.lane.b32.xlu0 %v1195, 12
      %v1275 = vpop.permute.xlu0 %1274
      %1276 = vrot.lane.b32.xlu0 %v1197, 12
      %v1277 = vpop.permute.xlu0 %1276
      %1278 = vrot.lane.b32.xlu0 %v1199, 12
      %v1279 = vpop.permute.xlu0 %1278
      %1280 = vrot.lane.b32.xlu0 %v1201, 12
      %v1281 = vpop.permute.xlu0 %1280
      %1282 = vrot.lane.b32.xlu0 %v1203, 12
      %v1283 = vpop.permute.xlu0 %1282
      %1284 = vrot.lane.b32.xlu0 %v1202, 12
      %v1285 = vpop.permute.xlu0 %1284
      %vm1327 = vcmask 1043456
      %v1328 = vrot.slane %v498, 4
      %v1329 = vrot.slane %v499, 4
      %v1330 = vsel %vm1327, %v1328, %v1329
      %v1331 = vrot.slane %v500, 4
      %v1332 = vsel %vm1327, %v1329, %v1331
      %v1333 = vrot.slane %v501, 4
      %v1334 = vsel %vm1327, %v1331, %v1333
      %v1335 = vrot.slane %v502, 4
      %v1336 = vsel %vm1327, %v1333, %v1335
      %v1337 = vrot.slane %v503, 4
      %v1338 = vsel %vm1327, %v1335, %v1337
      %v1339 = vrot.slane %v504, 4
      %v1340 = vsel %vm1327, %v1337, %v1339
      %v1341 = vrot.slane %v505, 4
      %v1342 = vsel %vm1327, %v1339, %v1341
      %v1343 = vrot.slane %v506, 4
      %v1344 = vsel %vm1327, %v1341, %v1343
      %v1345 = vrot.slane %v507, 4
      %v1346 = vsel %vm1327, %v1343, %v1345
      %v1347 = vrot.slane %v508, 4
      %v1348 = vsel %vm1327, %v1345, %v1347
      %v1349 = vrot.slane %v509, 4
      %v1350 = vsel %vm1327, %v1347, %v1349
      %v1351 = vrot.slane %v510, 4
      %v1352 = vsel %vm1327, %v1349, %v1351
      %v1353 = vrot.slane %v511, 4
      %v1354 = vsel %vm1327, %v1351, %v1353
      %v1355 = vrot.slane %v512, 4
      %v1356 = vsel %vm1327, %v1353, %v1355
      %v1357 = vrot.slane %v513, 4
      %v1358 = vsel %vm1327, %v1355, %v1357
      %v1359 = vrot.slane %v514, 4
      %v1360 = vsel %vm1327, %v1357, %v1359
      %v1361 = vrot.slane %v515, 4
      %v1362 = vsel %vm1327, %v1359, %v1361
      %v1363 = vrot.slane %v516, 4
      %v1364 = vsel %vm1327, %v1361, %v1363
      %v1365 = vrot.slane %v517, 4
      %v1366 = vsel %vm1327, %v1363, %v1365
      %v1367 = vrot.slane %v518, 4
      %v1368 = vsel %vm1327, %v1365, %v1367
      %v1369 = vrot.slane %v519, 4
      %v1370 = vsel %vm1327, %v1367, %v1369
      %v1371 = vrot.slane %v520, 4
      %v1372 = vsel %vm1327, %v1369, %v1371
      %v1373 = vrot.slane %v521, 4
      %v1374 = vsel %vm1327, %v1371, %v1373
      %v1375 = vrot.slane %v522, 4
      %v1376 = vsel %vm1327, %v1373, %v1375
      %v1377 = vrot.slane %v523, 4
      %v1378 = vsel %vm1327, %v1375, %v1377
      %v1379 = vrot.slane %v524, 4
      %v1380 = vsel %vm1327, %v1377, %v1379
      %v1381 = vrot.slane %v525, 4
      %v1382 = vsel %vm1327, %v1379, %v1381
      %v1383 = vrot.slane %v526, 4
      %v1384 = vsel %vm1327, %v1381, %v1383
      %v1385 = vrot.slane %v527, 4
      %v1386 = vsel %vm1327, %v1383, %v1385
      %v1387 = vrot.slane %v528, 4
      %v1388 = vsel %vm1327, %v1385, %v1387
      %v1389 = vrot.slane %v529, 4
      %v1390 = vsel %vm1327, %v1387, %v1389
      %v1391 = vrot.slane %v530, 4
      %v1392 = vsel %vm1327, %v1389, %v1391
      %v1393 = vrot.slane %v531, 4
      %v1394 = vsel %vm1327, %v1391, %v1393
      %v1395 = vrot.slane %v532, 4
      %v1396 = vsel %vm1327, %v1393, %v1395
      %v1397 = vrot.slane %v533, 4
      %v1398 = vsel %vm1327, %v1395, %v1397
      %v1399 = vrot.slane %v534, 4
      %v1400 = vsel %vm1327, %v1397, %v1399
      %v1401 = vrot.slane %v535, 4
      %v1402 = vsel %vm1327, %v1399, %v1401
      %v1403 = vrot.slane %v536, 4
      %v1404 = vsel %vm1327, %v1401, %v1403
      %v1405 = vrot.slane %v537, 4
      %v1406 = vsel %vm1327, %v1403, %v1405
      %v1407 = vrot.slane %v538, 4
      %v1408 = vsel %vm1327, %v1405, %v1407
      %1409 = vrot.lane.b32.xlu0 %v1330, 15
      %v1410 = vpop.permute.xlu0 %1409
      %1411 = vrot.lane.b32.xlu0 %v1332, 15
      %v1412 = vpop.permute.xlu0 %1411
      %1413 = vrot.lane.b32.xlu0 %v1334, 15
      %v1414 = vpop.permute.xlu0 %1413
      %1415 = vrot.lane.b32.xlu0 %v1336, 15
      %v1416 = vpop.permute.xlu0 %1415
      %1417 = vrot.lane.b32.xlu0 %v1338, 15
      %v1418 = vpop.permute.xlu0 %1417
      %1419 = vrot.lane.b32.xlu0 %v1340, 15
      %v1420 = vpop.permute.xlu0 %1419
      %1421 = vrot.lane.b32.xlu0 %v1342, 15
      %v1422 = vpop.permute.xlu0 %1421
      %1423 = vrot.lane.b32.xlu0 %v1344, 15
      %v1424 = vpop.permute.xlu0 %1423
      %1425 = vrot.lane.b32.xlu0 %v1346, 15
      %v1426 = vpop.permute.xlu0 %1425
      %1427 = vrot.lane.b32.xlu0 %v1348, 15
      %v1428 = vpop.permute.xlu0 %1427
      %1429 = vrot.lane.b32.xlu0 %v1350, 15
      %v1430 = vpop.permute.xlu0 %1429
      %1431 = vrot.lane.b32.xlu0 %v1352, 15
      %v1432 = vpop.permute.xlu0 %1431
      %1433 = vrot.lane.b32.xlu0 %v1354, 15
      %v1434 = vpop.permute.xlu0 %1433
      %1435 = vrot.lane.b32.xlu0 %v1356, 15
      %v1436 = vpop.permute.xlu0 %1435
      %1437 = vrot.lane.b32.xlu0 %v1358, 15
      %v1438 = vpop.permute.xlu0 %1437
      %1439 = vrot.lane.b32.xlu0 %v1360, 15
      %v1440 = vpop.permute.xlu0 %1439
      %1441 = vrot.lane.b32.xlu0 %v1362, 15
      %v1442 = vpop.permute.xlu0 %1441
      %1443 = vrot.lane.b32.xlu0 %v1364, 15
      %v1444 = vpop.permute.xlu0 %1443
      %1445 = vrot.lane.b32.xlu0 %v1366, 15
      %v1446 = vpop.permute.xlu0 %1445
      %1447 = vrot.lane.b32.xlu0 %v1368, 15
      %v1448 = vpop.permute.xlu0 %1447
      %1449 = vrot.lane.b32.xlu0 %v1370, 15
      %v1450 = vpop.permute.xlu0 %1449
      %1451 = vrot.lane.b32.xlu0 %v1372, 15
      %v1452 = vpop.permute.xlu0 %1451
      %1453 = vrot.lane.b32.xlu0 %v1374, 15
      %v1454 = vpop.permute.xlu0 %1453
      %1455 = vrot.lane.b32.xlu0 %v1376, 15
      %v1456 = vpop.permute.xlu0 %1455
      %1457 = vrot.lane.b32.xlu0 %v1378, 15
      %v1458 = vpop.permute.xlu0 %1457
      %1459 = vrot.lane.b32.xlu0 %v1380, 15
      %v1460 = vpop.permute.xlu0 %1459
      %1461 = vrot.lane.b32.xlu0 %v1382, 15
      %v1462 = vpop.permute.xlu0 %1461
      %1463 = vrot.lane.b32.xlu0 %v1384, 15
      %v1464 = vpop.permute.xlu0 %1463
      %1465 = vrot.lane.b32.xlu0 %v1386, 15
      %v1466 = vpop.permute.xlu0 %1465
      %1467 = vrot.lane.b32.xlu0 %v1388, 15
      %v1468 = vpop.permute.xlu0 %1467
      %1469 = vrot.lane.b32.xlu0 %v1390, 15
      %v1470 = vpop.permute.xlu0 %1469
      %1471 = vrot.lane.b32.xlu0 %v1392, 15
      %v1472 = vpop.permute.xlu0 %1471
      %1473 = vrot.lane.b32.xlu0 %v1394, 15
      %v1474 = vpop.permute.xlu0 %1473
      %1475 = vrot.lane.b32.xlu0 %v1396, 15
      %v1476 = vpop.permute.xlu0 %1475
      %1477 = vrot.lane.b32.xlu0 %v1398, 15
      %v1478 = vpop.permute.xlu0 %1477
      %1479 = vrot.lane.b32.xlu0 %v1400, 15
      %v1480 = vpop.permute.xlu0 %1479
      %1481 = vrot.lane.b32.xlu0 %v1402, 15
      %v1482 = vpop.permute.xlu0 %1481
      %1483 = vrot.lane.b32.xlu0 %v1404, 15
      %v1484 = vpop.permute.xlu0 %1483
      %1485 = vrot.lane.b32.xlu0 %v1406, 15
      %v1486 = vpop.permute.xlu0 %1485
      %1487 = vrot.lane.b32.xlu0 %v1408, 15
      %v1488 = vpop.permute.xlu0 %1487
      %1489 = vrot.lane.b32.xlu0 %v1407, 15
      %v1490 = vpop.permute.xlu0 %1489
      %v1534 = vrot.slane %v539, 4
      %v1535 = vsel %vm1327, %v1407, %v1534
      %v1536 = vrot.slane %v540, 4
      %v1537 = vsel %vm1327, %v1534, %v1536
      %1538 = vrot.lane.b32.xlu0 %v1334, 18
      %v1539 = vpop.permute.xlu0 %1538
      %1540 = vrot.lane.b32.xlu0 %v1336, 18
      %v1541 = vpop.permute.xlu0 %1540
      %1542 = vrot.lane.b32.xlu0 %v1338, 18
      %v1543 = vpop.permute.xlu0 %1542
      %1544 = vrot.lane.b32.xlu0 %v1340, 18
      %v1545 = vpop.permute.xlu0 %1544
      %1546 = vrot.lane.b32.xlu0 %v1342, 18
      %v1547 = vpop.permute.xlu0 %1546
      %1548 = vrot.lane.b32.xlu0 %v1344, 18
      %v1549 = vpop.permute.xlu0 %1548
      %1550 = vrot.lane.b32.xlu0 %v1346, 18
      %v1551 = vpop.permute.xlu0 %1550
      %1552 = vrot.lane.b32.xlu0 %v1348, 18
      %v1553 = vpop.permute.xlu0 %1552
      %1554 = vrot.lane.b32.xlu0 %v1350, 18
      %v1555 = vpop.permute.xlu0 %1554
      %1556 = vrot.lane.b32.xlu0 %v1352, 18
      %v1557 = vpop.permute.xlu0 %1556
      %1558 = vrot.lane.b32.xlu0 %v1354, 18
      %v1559 = vpop.permute.xlu0 %1558
      %1560 = vrot.lane.b32.xlu0 %v1356, 18
      %v1561 = vpop.permute.xlu0 %1560
      %1562 = vrot.lane.b32.xlu0 %v1358, 18
      %v1563 = vpop.permute.xlu0 %1562
      %1564 = vrot.lane.b32.xlu0 %v1360, 18
      %v1565 = vpop.permute.xlu0 %1564
      %1566 = vrot.lane.b32.xlu0 %v1362, 18
      %v1567 = vpop.permute.xlu0 %1566
      %1568 = vrot.lane.b32.xlu0 %v1364, 18
      %v1569 = vpop.permute.xlu0 %1568
      %1570 = vrot.lane.b32.xlu0 %v1366, 18
      %v1571 = vpop.permute.xlu0 %1570
      %1572 = vrot.lane.b32.xlu0 %v1368, 18
      %v1573 = vpop.permute.xlu0 %1572
      %1574 = vrot.lane.b32.xlu0 %v1370, 18
      %v1575 = vpop.permute.xlu0 %1574
      %1576 = vrot.lane.b32.xlu0 %v1372, 18
      %v1577 = vpop.permute.xlu0 %1576
      %1578 = vrot.lane.b32.xlu0 %v1374, 18
      %v1579 = vpop.permute.xlu0 %1578
      %1580 = vrot.lane.b32.xlu0 %v1376, 18
      %v1581 = vpop.permute.xlu0 %1580
      %1582 = vrot.lane.b32.xlu0 %v1378, 18
      %v1583 = vpop.permute.xlu0 %1582
      %1584 = vrot.lane.b32.xlu0 %v1380, 18
      %v1585 = vpop.permute.xlu0 %1584
      %1586 = vrot.lane.b32.xlu0 %v1382, 18
      %v1587 = vpop.permute.xlu0 %1586
      %1588 = vrot.lane.b32.xlu0 %v1384, 18
      %v1589 = vpop.permute.xlu0 %1588
      %1590 = vrot.lane.b32.xlu0 %v1386, 18
      %v1591 = vpop.permute.xlu0 %1590
      %1592 = vrot.lane.b32.xlu0 %v1388, 18
      %v1593 = vpop.permute.xlu0 %1592
      %1594 = vrot.lane.b32.xlu0 %v1390, 18
      %v1595 = vpop.permute.xlu0 %1594
      %1596 = vrot.lane.b32.xlu0 %v1392, 18
      %v1597 = vpop.permute.xlu0 %1596
      %1598 = vrot.lane.b32.xlu0 %v1394, 18
      %v1599 = vpop.permute.xlu0 %1598
      %1600 = vrot.lane.b32.xlu0 %v1396, 18
      %v1601 = vpop.permute.xlu0 %1600
      %1602 = vrot.lane.b32.xlu0 %v1398, 18
      %v1603 = vpop.permute.xlu0 %1602
      %1604 = vrot.lane.b32.xlu0 %v1400, 18
      %v1605 = vpop.permute.xlu0 %1604
      %1606 = vrot.lane.b32.xlu0 %v1402, 18
      %v1607 = vpop.permute.xlu0 %1606
      %1608 = vrot.lane.b32.xlu0 %v1404, 18
      %v1609 = vpop.permute.xlu0 %1608
      %1610 = vrot.lane.b32.xlu0 %v1406, 18
      %v1611 = vpop.permute.xlu0 %1610
      %1612 = vrot.lane.b32.xlu0 %v1408, 18
      %v1613 = vpop.permute.xlu0 %1612
      %1614 = vrot.lane.b32.xlu0 %v1535, 18
      %v1615 = vpop.permute.xlu0 %1614
      %1616 = vrot.lane.b32.xlu0 %v1537, 18
      %v1617 = vpop.permute.xlu0 %1616
      %1618 = vrot.lane.b32.xlu0 %v1536, 18
      %v1619 = vpop.permute.xlu0 %1618
      %vm1662 = vcmask 1042432
      %v1663 = vrot.slane %v500, 5
      %v1664 = vrot.slane %v501, 5
      %v1665 = vsel %vm1662, %v1663, %v1664
      %v1666 = vrot.slane %v502, 5
      %v1667 = vsel %vm1662, %v1664, %v1666
      %v1668 = vrot.slane %v503, 5
      %v1669 = vsel %vm1662, %v1666, %v1668
      %v1670 = vrot.slane %v504, 5
      %v1671 = vsel %vm1662, %v1668, %v1670
      %v1672 = vrot.slane %v505, 5
      %v1673 = vsel %vm1662, %v1670, %v1672
      %v1674 = vrot.slane %v506, 5
      %v1675 = vsel %vm1662, %v1672, %v1674
      %v1676 = vrot.slane %v507, 5
      %v1677 = vsel %vm1662, %v1674, %v1676
      %v1678 = vrot.slane %v508, 5
      %v1679 = vsel %vm1662, %v1676, %v1678
      %v1680 = vrot.slane %v509, 5
      %v1681 = vsel %vm1662, %v1678, %v1680
      %v1682 = vrot.slane %v510, 5
      %v1683 = vsel %vm1662, %v1680, %v1682
      %v1684 = vrot.slane %v511, 5
      %v1685 = vsel %vm1662, %v1682, %v1684
      %v1686 = vrot.slane %v512, 5
      %v1687 = vsel %vm1662, %v1684, %v1686
      %v1688 = vrot.slane %v513, 5
      %v1689 = vsel %vm1662, %v1686, %v1688
      %v1690 = vrot.slane %v514, 5
      %v1691 = vsel %vm1662, %v1688, %v1690
      %v1692 = vrot.slane %v515, 5
      %v1693 = vsel %vm1662, %v1690, %v1692
      %v1694 = vrot.slane %v516, 5
      %v1695 = vsel %vm1662, %v1692, %v1694
      %v1696 = vrot.slane %v517, 5
      %v1697 = vsel %vm1662, %v1694, %v1696
      %v1698 = vrot.slane %v518, 5
      %v1699 = vsel %vm1662, %v1696, %v1698
      %v1700 = vrot.slane %v519, 5
      %v1701 = vsel %vm1662, %v1698, %v1700
      %v1702 = vrot.slane %v520, 5
      %v1703 = vsel %vm1662, %v1700, %v1702
      %v1704 = vrot.slane %v521, 5
      %v1705 = vsel %vm1662, %v1702, %v1704
      %v1706 = vrot.slane %v522, 5
      %v1707 = vsel %vm1662, %v1704, %v1706
      %v1708 = vrot.slane %v523, 5
      %v1709 = vsel %vm1662, %v1706, %v1708
      %v1710 = vrot.slane %v524, 5
      %v1711 = vsel %vm1662, %v1708, %v1710
      %v1712 = vrot.slane %v525, 5
      %v1713 = vsel %vm1662, %v1710, %v1712
      %v1714 = vrot.slane %v526, 5
      %v1715 = vsel %vm1662, %v1712, %v1714
      %v1716 = vrot.slane %v527, 5
      %v1717 = vsel %vm1662, %v1714, %v1716
      %v1718 = vrot.slane %v528, 5
      %v1719 = vsel %vm1662, %v1716, %v1718
      %v1720 = vrot.slane %v529, 5
      %v1721 = vsel %vm1662, %v1718, %v1720
      %v1722 = vrot.slane %v530, 5
      %v1723 = vsel %vm1662, %v1720, %v1722
      %v1724 = vrot.slane %v531, 5
      %v1725 = vsel %vm1662, %v1722, %v1724
      %v1726 = vrot.slane %v532, 5
      %v1727 = vsel %vm1662, %v1724, %v1726
      %v1728 = vrot.slane %v533, 5
      %v1729 = vsel %vm1662, %v1726, %v1728
      %v1730 = vrot.slane %v534, 5
      %v1731 = vsel %vm1662, %v1728, %v1730
      %v1732 = vrot.slane %v535, 5
      %v1733 = vsel %vm1662, %v1730, %v1732
      %v1734 = vrot.slane %v536, 5
      %v1735 = vsel %vm1662, %v1732, %v1734
      %v1736 = vrot.slane %v537, 5
      %v1737 = vsel %vm1662, %v1734, %v1736
      %v1738 = vrot.slane %v538, 5
      %v1739 = vsel %vm1662, %v1736, %v1738
      %v1740 = vrot.slane %v539, 5
      %v1741 = vsel %vm1662, %v1738, %v1740
      %v1742 = vrot.slane %v540, 5
      %v1743 = vsel %vm1662, %v1740, %v1742
      %v1744 = vrot.slane %v541, 5
      %v1745 = vsel %vm1662, %v1742, %v1744
      %1746 = vrot.lane.b32.xlu0 %v1665, 21
      %v1747 = vpop.permute.xlu0 %1746
      %1748 = vrot.lane.b32.xlu0 %v1667, 21
      %v1749 = vpop.permute.xlu0 %1748
      %1750 = vrot.lane.b32.xlu0 %v1669, 21
      %v1751 = vpop.permute.xlu0 %1750
      %1752 = vrot.lane.b32.xlu0 %v1671, 21
      %v1753 = vpop.permute.xlu0 %1752
      %1754 = vrot.lane.b32.xlu0 %v1673, 21
      %v1755 = vpop.permute.xlu0 %1754
      %1756 = vrot.lane.b32.xlu0 %v1675, 21
      %v1757 = vpop.permute.xlu0 %1756
      %1758 = vrot.lane.b32.xlu0 %v1677, 21
      %v1759 = vpop.permute.xlu0 %1758
      %1760 = vrot.lane.b32.xlu0 %v1679, 21
      %v1761 = vpop.permute.xlu0 %1760
      %1762 = vrot.lane.b32.xlu0 %v1681, 21
      %v1763 = vpop.permute.xlu0 %1762
      %1764 = vrot.lane.b32.xlu0 %v1683, 21
      %v1765 = vpop.permute.xlu0 %1764
      %1766 = vrot.lane.b32.xlu0 %v1685, 21
      %v1767 = vpop.permute.xlu0 %1766
      %1768 = vrot.lane.b32.xlu0 %v1687, 21
      %v1769 = vpop.permute.xlu0 %1768
      %1770 = vrot.lane.b32.xlu0 %v1689, 21
      %v1771 = vpop.permute.xlu0 %1770
      %1772 = vrot.lane.b32.xlu0 %v1691, 21
      %v1773 = vpop.permute.xlu0 %1772
      %1774 = vrot.lane.b32.xlu0 %v1693, 21
      %v1775 = vpop.permute.xlu0 %1774
      %1776 = vrot.lane.b32.xlu0 %v1695, 21
      %v1777 = vpop.permute.xlu0 %1776
      %1778 = vrot.lane.b32.xlu0 %v1697, 21
      %v1779 = vpop.permute.xlu0 %1778
      %1780 = vrot.lane.b32.xlu0 %v1699, 21
      %v1781 = vpop.permute.xlu0 %1780
      %1782 = vrot.lane.b32.xlu0 %v1701, 21
      %v1783 = vpop.permute.xlu0 %1782
      %1784 = vrot.lane.b32.xlu0 %v1703, 21
      %v1785 = vpop.permute.xlu0 %1784
      %1786 = vrot.lane.b32.xlu0 %v1705, 21
      %v1787 = vpop.permute.xlu0 %1786
      %1788 = vrot.lane.b32.xlu0 %v1707, 21
      %v1789 = vpop.permute.xlu0 %1788
      %1790 = vrot.lane.b32.xlu0 %v1709, 21
      %v1791 = vpop.permute.xlu0 %1790
      %1792 = vrot.lane.b32.xlu0 %v1711, 21
      %v1793 = vpop.permute.xlu0 %1792
      %1794 = vrot.lane.b32.xlu0 %v1713, 21
      %v1795 = vpop.permute.xlu0 %1794
      %1796 = vrot.lane.b32.xlu0 %v1715, 21
      %v1797 = vpop.permute.xlu0 %1796
      %1798 = vrot.lane.b32.xlu0 %v1717, 21
      %v1799 = vpop.permute.xlu0 %1798
      %1800 = vrot.lane.b32.xlu0 %v1719, 21
      %v1801 = vpop.permute.xlu0 %1800
      %1802 = vrot.lane.b32.xlu0 %v1721, 21
      %v1803 = vpop.permute.xlu0 %1802
      %1804 = vrot.lane.b32.xlu0 %v1723, 21
      %v1805 = vpop.permute.xlu0 %1804
      %1806 = vrot.lane.b32.xlu0 %v1725, 21
      %v1807 = vpop.permute.xlu0 %1806
      %1808 = vrot.lane.b32.xlu0 %v1727, 21
      %v1809 = vpop.permute.xlu0 %1808
      %1810 = vrot.lane.b32.xlu0 %v1729, 21
      %v1811 = vpop.permute.xlu0 %1810
      %1812 = vrot.lane.b32.xlu0 %v1731, 21
      %v1813 = vpop.permute.xlu0 %1812
      %1814 = vrot.lane.b32.xlu0 %v1733, 21
      %v1815 = vpop.permute.xlu0 %1814
      %1816 = vrot.lane.b32.xlu0 %v1735, 21
      %v1817 = vpop.permute.xlu0 %1816
      %1818 = vrot.lane.b32.xlu0 %v1737, 21
      %v1819 = vpop.permute.xlu0 %1818
      %1820 = vrot.lane.b32.xlu0 %v1739, 21
      %v1821 = vpop.permute.xlu0 %1820
      %1822 = vrot.lane.b32.xlu0 %v1741, 21
      %v1823 = vpop.permute.xlu0 %1822
      %1824 = vrot.lane.b32.xlu0 %v1743, 21
      %v1825 = vpop.permute.xlu0 %1824
      %1826 = vrot.lane.b32.xlu0 %v1745, 21
      %v1827 = vpop.permute.xlu0 %1826
      %vm1869 = vcmask 1041408
      %v1870 = vrot.slane %v500, 6
      %v1871 = vrot.slane %v501, 6
      %v1872 = vsel %vm1869, %v1870, %v1871
      %v1873 = vrot.slane %v502, 6
      %v1874 = vsel %vm1869, %v1871, %v1873
      %v1875 = vrot.slane %v503, 6
      %v1876 = vsel %vm1869, %v1873, %v1875
      %v1877 = vrot.slane %v504, 6
      %v1878 = vsel %vm1869, %v1875, %v1877
      %v1879 = vrot.slane %v505, 6
      %v1880 = vsel %vm1869, %v1877, %v1879
      %v1881 = vrot.slane %v506, 6
      %v1882 = vsel %vm1869, %v1879, %v1881
      %v1883 = vrot.slane %v507, 6
      %v1884 = vsel %vm1869, %v1881, %v1883
      %v1885 = vrot.slane %v508, 6
      %v1886 = vsel %vm1869, %v1883, %v1885
      %v1887 = vrot.slane %v509, 6
      %v1888 = vsel %vm1869, %v1885, %v1887
      %v1889 = vrot.slane %v510, 6
      %v1890 = vsel %vm1869, %v1887, %v1889
      %v1891 = vrot.slane %v511, 6
      %v1892 = vsel %vm1869, %v1889, %v1891
      %v1893 = vrot.slane %v512, 6
      %v1894 = vsel %vm1869, %v1891, %v1893
      %v1895 = vrot.slane %v513, 6
      %v1896 = vsel %vm1869, %v1893, %v1895
      %v1897 = vrot.slane %v514, 6
      %v1898 = vsel %vm1869, %v1895, %v1897
      %v1899 = vrot.slane %v515, 6
      %v1900 = vsel %vm1869, %v1897, %v1899
      %v1901 = vrot.slane %v516, 6
      %v1902 = vsel %vm1869, %v1899, %v1901
      %v1903 = vrot.slane %v517, 6
      %v1904 = vsel %vm1869, %v1901, %v1903
      %v1905 = vrot.slane %v518, 6
      %v1906 = vsel %vm1869, %v1903, %v1905
      %v1907 = vrot.slane %v519, 6
      %v1908 = vsel %vm1869, %v1905, %v1907
      %v1909 = vrot.slane %v520, 6
      %v1910 = vsel %vm1869, %v1907, %v1909
      %v1911 = vrot.slane %v521, 6
      %v1912 = vsel %vm1869, %v1909, %v1911
      %v1913 = vrot.slane %v522, 6
      %v1914 = vsel %vm1869, %v1911, %v1913
      %v1915 = vrot.slane %v523, 6
      %v1916 = vsel %vm1869, %v1913, %v1915
      %v1917 = vrot.slane %v524, 6
      %v1918 = vsel %vm1869, %v1915, %v1917
      %v1919 = vrot.slane %v525, 6
      %v1920 = vsel %vm1869, %v1917, %v1919
      %v1921 = vrot.slane %v526, 6
      %v1922 = vsel %vm1869, %v1919, %v1921
      %v1923 = vrot.slane %v527, 6
      %v1924 = vsel %vm1869, %v1921, %v1923
      %v1925 = vrot.slane %v528, 6
      %v1926 = vsel %vm1869, %v1923, %v1925
      %v1927 = vrot.slane %v529, 6
      %v1928 = vsel %vm1869, %v1925, %v1927
      %v1929 = vrot.slane %v530, 6
      %v1930 = vsel %vm1869, %v1927, %v1929
      %v1931 = vrot.slane %v531, 6
      %v1932 = vsel %vm1869, %v1929, %v1931
      %v1933 = vrot.slane %v532, 6
      %v1934 = vsel %vm1869, %v1931, %v1933
      %v1935 = vrot.slane %v533, 6
      %v1936 = vsel %vm1869, %v1933, %v1935
      %v1937 = vrot.slane %v534, 6
      %v1938 = vsel %vm1869, %v1935, %v1937
      %v1939 = vrot.slane %v535, 6
      %v1940 = vsel %vm1869, %v1937, %v1939
      %v1941 = vrot.slane %v536, 6
      %v1942 = vsel %vm1869, %v1939, %v1941
      %v1943 = vrot.slane %v537, 6
      %v1944 = vsel %vm1869, %v1941, %v1943
      %v1945 = vrot.slane %v538, 6
      %v1946 = vsel %vm1869, %v1943, %v1945
      %v1947 = vrot.slane %v539, 6
      %v1948 = vsel %vm1869, %v1945, %v1947
      %v1949 = vrot.slane %v540, 6
      %v1950 = vsel %vm1869, %v1947, %v1949
      %v1951 = vrot.slane %v541, 6
      %v1952 = vsel %vm1869, %v1949, %v1951
      %1953 = vrot.lane.b32.xlu0 %v1872, 24
      %v1954 = vpop.permute.xlu0 %1953
      %1955 = vrot.lane.b32.xlu0 %v1874, 24
      %v1956 = vpop.permute.xlu0 %1955
      %1957 = vrot.lane.b32.xlu0 %v1876, 24
      %v1958 = vpop.permute.xlu0 %1957
      %1959 = vrot.lane.b32.xlu0 %v1878, 24
      %v1960 = vpop.permute.xlu0 %1959
      %1961 = vrot.lane.b32.xlu0 %v1880, 24
      %v1962 = vpop.permute.xlu0 %1961
      %1963 = vrot.lane.b32.xlu0 %v1882, 24
      %v1964 = vpop.permute.xlu0 %1963
      %1965 = vrot.lane.b32.xlu0 %v1884, 24
      %v1966 = vpop.permute.xlu0 %1965
      %1967 = vrot.lane.b32.xlu0 %v1886, 24
      %v1968 = vpop.permute.xlu0 %1967
      %1969 = vrot.lane.b32.xlu0 %v1888, 24
      %v1970 = vpop.permute.xlu0 %1969
      %1971 = vrot.lane.b32.xlu0 %v1890, 24
      %v1972 = vpop.permute.xlu0 %1971
      %1973 = vrot.lane.b32.xlu0 %v1892, 24
      %v1974 = vpop.permute.xlu0 %1973
      %1975 = vrot.lane.b32.xlu0 %v1894, 24
      %v1976 = vpop.permute.xlu0 %1975
      %1977 = vrot.lane.b32.xlu0 %v1896, 24
      %v1978 = vpop.permute.xlu0 %1977
      %1979 = vrot.lane.b32.xlu0 %v1898, 24
      %v1980 = vpop.permute.xlu0 %1979
      %1981 = vrot.lane.b32.xlu0 %v1900, 24
      %v1982 = vpop.permute.xlu0 %1981
      %1983 = vrot.lane.b32.xlu0 %v1902, 24
      %v1984 = vpop.permute.xlu0 %1983
      %1985 = vrot.lane.b32.xlu0 %v1904, 24
      %v1986 = vpop.permute.xlu0 %1985
      %1987 = vrot.lane.b32.xlu0 %v1906, 24
      %v1988 = vpop.permute.xlu0 %1987
      %1989 = vrot.lane.b32.xlu0 %v1908, 24
      %v1990 = vpop.permute.xlu0 %1989
      %1991 = vrot.lane.b32.xlu0 %v1910, 24
      %v1992 = vpop.permute.xlu0 %1991
      %1993 = vrot.lane.b32.xlu0 %v1912, 24
      %v1994 = vpop.permute.xlu0 %1993
      %1995 = vrot.lane.b32.xlu0 %v1914, 24
      %v1996 = vpop.permute.xlu0 %1995
      %1997 = vrot.lane.b32.xlu0 %v1916, 24
      %v1998 = vpop.permute.xlu0 %1997
      %1999 = vrot.lane.b32.xlu0 %v1918, 24
      %v2000 = vpop.permute.xlu0 %1999
      %2001 = vrot.lane.b32.xlu0 %v1920, 24
      %v2002 = vpop.permute.xlu0 %2001
      %2003 = vrot.lane.b32.xlu0 %v1922, 24
      %v2004 = vpop.permute.xlu0 %2003
      %2005 = vrot.lane.b32.xlu0 %v1924, 24
      %v2006 = vpop.permute.xlu0 %2005
      %2007 = vrot.lane.b32.xlu0 %v1926, 24
      %v2008 = vpop.permute.xlu0 %2007
      %2009 = vrot.lane.b32.xlu0 %v1928, 24
      %v2010 = vpop.permute.xlu0 %2009
      %2011 = vrot.lane.b32.xlu0 %v1930, 24
      %v2012 = vpop.permute.xlu0 %2011
      %2013 = vrot.lane.b32.xlu0 %v1932, 24
      %v2014 = vpop.permute.xlu0 %2013
      %2015 = vrot.lane.b32.xlu0 %v1934, 24
      %v2016 = vpop.permute.xlu0 %2015
      %2017 = vrot.lane.b32.xlu0 %v1936, 24
      %v2018 = vpop.permute.xlu0 %2017
      %2019 = vrot.lane.b32.xlu0 %v1938, 24
      %v2020 = vpop.permute.xlu0 %2019
      %2021 = vrot.lane.b32.xlu0 %v1940, 24
      %v2022 = vpop.permute.xlu0 %2021
      %2023 = vrot.lane.b32.xlu0 %v1942, 24
      %v2024 = vpop.permute.xlu0 %2023
      %2025 = vrot.lane.b32.xlu0 %v1944, 24
      %v2026 = vpop.permute.xlu0 %2025
      %2027 = vrot.lane.b32.xlu0 %v1946, 24
      %v2028 = vpop.permute.xlu0 %2027
      %2029 = vrot.lane.b32.xlu0 %v1948, 24
      %v2030 = vpop.permute.xlu0 %2029
      %2031 = vrot.lane.b32.xlu0 %v1950, 24
      %v2032 = vpop.permute.xlu0 %2031
      %2033 = vrot.lane.b32.xlu0 %v1952, 24
      %v2034 = vpop.permute.xlu0 %2033
      %vm2076 = vcmask 23552
      %v2077 = vsel %vm2076, %v496, %v666
      %v2078 = vsel %vm2076, %v497, %v668
      %v2079 = vsel %vm2076, %v498, %v670
      %v2080 = vsel %vm2076, %v499, %v672
      %v2081 = vsel %vm2076, %v500, %v674
      %v2082 = vsel %vm2076, %v501, %v676
      %v2083 = vsel %vm2076, %v502, %v678
      %v2084 = vsel %vm2076, %v503, %v680
      %v2085 = vsel %vm2076, %v504, %v682
      %v2086 = vsel %vm2076, %v505, %v684
      %v2087 = vsel %vm2076, %v506, %v686
      %v2088 = vsel %vm2076, %v507, %v688
      %v2089 = vsel %vm2076, %v508, %v690
      %v2090 = vsel %vm2076, %v509, %v692
      %v2091 = vsel %vm2076, %v510, %v694
      %v2092 = vsel %vm2076, %v511, %v696
      %v2093 = vsel %vm2076, %v512, %v698
      %v2094 = vsel %vm2076, %v513, %v700
      %v2095 = vsel %vm2076, %v514, %v702
      %v2096 = vsel %vm2076, %v515, %v704
      %v2097 = vsel %vm2076, %v516, %v706
      %v2098 = vsel %vm2076, %v517, %v708
      %v2099 = vsel %vm2076, %v518, %v710
      %v2100 = vsel %vm2076, %v519, %v712
      %v2101 = vsel %vm2076, %v520, %v714
      %v2102 = vsel %vm2076, %v521, %v716
      %v2103 = vsel %vm2076, %v522, %v718
      %v2104 = vsel %vm2076, %v523, %v720
      %v2105 = vsel %vm2076, %v524, %v722
      %v2106 = vsel %vm2076, %v525, %v724
      %v2107 = vsel %vm2076, %v526, %v726
      %v2108 = vsel %vm2076, %v527, %v728
      %v2109 = vsel %vm2076, %v528, %v730
      %v2110 = vsel %vm2076, %v529, %v732
      %v2111 = vsel %vm2076, %v530, %v734
      %v2112 = vsel %vm2076, %v531, %v736
      %v2113 = vsel %vm2076, %v532, %v738
      %v2114 = vsel %vm2076, %v533, %v740
      %v2115 = vsel %vm2076, %v534, %v742
      %v2116 = vsel %vm2076, %v535, %v744
      %v2117 = vsel %vm2076, %v536, %v746
      %vm2118 = vcmask 48128
      %v2119 = vsel %vm2118, %v2077, %v871
      %v2120 = vsel %vm2118, %v2078, %v873
      %v2121 = vsel %vm2118, %v2079, %v875
      %v2122 = vsel %vm2118, %v2080, %v877
      %v2123 = vsel %vm2118, %v2081, %v879
      %v2124 = vsel %vm2118, %v2082, %v881
      %v2125 = vsel %vm2118, %v2083, %v883
      %v2126 = vsel %vm2118, %v2084, %v885
      %v2127 = vsel %vm2118, %v2085, %v887
      %v2128 = vsel %vm2118, %v2086, %v889
      %v2129 = vsel %vm2118, %v2087, %v891
      %v2130 = vsel %vm2118, %v2088, %v893
      %v2131 = vsel %vm2118, %v2089, %v895
      %v2132 = vsel %vm2118, %v2090, %v897
      %v2133 = vsel %vm2118, %v2091, %v899
      %v2134 = vsel %vm2118, %v2092, %v901
      %v2135 = vsel %vm2118, %v2093, %v903
      %v2136 = vsel %vm2118, %v2094, %v905
      %v2137 = vsel %vm2118, %v2095, %v907
      %v2138 = vsel %vm2118, %v2096, %v909
      %v2139 = vsel %vm2118, %v2097, %v911
      %v2140 = vsel %vm2118, %v2098, %v913
      %v2141 = vsel %vm2118, %v2099, %v915
      %v2142 = vsel %vm2118, %v2100, %v917
      %v2143 = vsel %vm2118, %v2101, %v919
      %v2144 = vsel %vm2118, %v2102, %v921
      %v2145 = vsel %vm2118, %v2103, %v923
      %v2146 = vsel %vm2118, %v2104, %v925
      %v2147 = vsel %vm2118, %v2105, %v927
      %v2148 = vsel %vm2118, %v2106, %v929
      %v2149 = vsel %vm2118, %v2107, %v931
      %v2150 = vsel %vm2118, %v2108, %v933
      %v2151 = vsel %vm2118, %v2109, %v935
      %v2152 = vsel %vm2118, %v2110, %v937
      %v2153 = vsel %vm2118, %v2111, %v939
      %v2154 = vsel %vm2118, %v2112, %v941
      %v2155 = vsel %vm2118, %v2113, %v943
      %v2156 = vsel %vm2118, %v2114, %v945
      %v2157 = vsel %vm2118, %v2115, %v947
      %v2158 = vsel %vm2118, %v2116, %v949
      %v2159 = vsel %vm2118, %v2117, %v951
      %vm2160 = vcmask 72704
      %v2161 = vsel %vm2160, %v2119, %v1000
      %v2162 = vsel %vm2160, %v2120, %v1002
      %v2163 = vsel %vm2160, %v2121, %v1004
      %v2164 = vsel %vm2160, %v2122, %v1006
      %v2165 = vsel %vm2160, %v2123, %v1008
      %v2166 = vsel %vm2160, %v2124, %v1010
      %v2167 = vsel %vm2160, %v2125, %v1012
      %v2168 = vsel %vm2160, %v2126, %v1014
      %v2169 = vsel %vm2160, %v2127, %v1016
      %v2170 = vsel %vm2160, %v2128, %v1018
      %v2171 = vsel %vm2160, %v2129, %v1020
      %v2172 = vsel %vm2160, %v2130, %v1022
      %v2173 = vsel %vm2160, %v2131, %v1024
      %v2174 = vsel %vm2160, %v2132, %v1026
      %v2175 = vsel %vm2160, %v2133, %v1028
      %v2176 = vsel %vm2160, %v2134, %v1030
      %v2177 = vsel %vm2160, %v2135, %v1032
      %v2178 = vsel %vm2160, %v2136, %v1034
      %v2179 = vsel %vm2160, %v2137, %v1036
      %v2180 = vsel %vm2160, %v2138, %v1038
      %v2181 = vsel %vm2160, %v2139, %v1040
      %v2182 = vsel %vm2160, %v2140, %v1042
      %v2183 = vsel %vm2160, %v2141, %v1044
      %v2184 = vsel %vm2160, %v2142, %v1046
      %v2185 = vsel %vm2160, %v2143, %v1048
      %v2186 = vsel %vm2160, %v2144, %v1050
      %v2187 = vsel %vm2160, %v2145, %v1052
      %v2188 = vsel %vm2160, %v2146, %v1054
      %v2189 = vsel %vm2160, %v2147, %v1056
      %v2190 = vsel %vm2160, %v2148, %v1058
      %v2191 = vsel %vm2160, %v2149, %v1060
      %v2192 = vsel %vm2160, %v2150, %v1062
      %v2193 = vsel %vm2160, %v2151, %v1064
      %v2194 = vsel %vm2160, %v2152, %v1066
      %v2195 = vsel %vm2160, %v2153, %v1068
      %v2196 = vsel %vm2160, %v2154, %v1070
      %v2197 = vsel %vm2160, %v2155, %v1072
      %v2198 = vsel %vm2160, %v2156, %v1074
      %v2199 = vsel %vm2160, %v2157, %v1076
      %v2200 = vsel %vm2160, %v2158, %v1078
      %v2201 = vsel %vm2160, %v2159, %v1080
      %vm2202 = vcmask 97280
      %v2203 = vsel %vm2202, %v2161, %v1205
      %v2204 = vsel %vm2202, %v2162, %v1207
      %v2205 = vsel %vm2202, %v2163, %v1209
      %v2206 = vsel %vm2202, %v2164, %v1211
      %v2207 = vsel %vm2202, %v2165, %v1213
      %v2208 = vsel %vm2202, %v2166, %v1215
      %v2209 = vsel %vm2202, %v2167, %v1217
      %v2210 = vsel %vm2202, %v2168, %v1219
      %v2211 = vsel %vm2202, %v2169, %v1221
      %v2212 = vsel %vm2202, %v2170, %v1223
      %v2213 = vsel %vm2202, %v2171, %v1225
      %v2214 = vsel %vm2202, %v2172, %v1227
      %v2215 = vsel %vm2202, %v2173, %v1229
      %v2216 = vsel %vm2202, %v2174, %v1231
      %v2217 = vsel %vm2202, %v2175, %v1233
      %v2218 = vsel %vm2202, %v2176, %v1235
      %v2219 = vsel %vm2202, %v2177, %v1237
      %v2220 = vsel %vm2202, %v2178, %v1239
      %v2221 = vsel %vm2202, %v2179, %v1241
      %v2222 = vsel %vm2202, %v2180, %v1243
      %v2223 = vsel %vm2202, %v2181, %v1245
      %v2224 = vsel %vm2202, %v2182, %v1247
      %v2225 = vsel %vm2202, %v2183, %v1249
      %v2226 = vsel %vm2202, %v2184, %v1251
      %v2227 = vsel %vm2202, %v2185, %v1253
      %v2228 = vsel %vm2202, %v2186, %v1255
      %v2229 = vsel %vm2202, %v2187, %v1257
      %v2230 = vsel %vm2202, %v2188, %v1259
      %v2231 = vsel %vm2202, %v2189, %v1261
      %v2232 = vsel %vm2202, %v2190, %v1263
      %v2233 = vsel %vm2202, %v2191, %v1265
      %v2234 = vsel %vm2202, %v2192, %v1267
      %v2235 = vsel %vm2202, %v2193, %v1269
      %v2236 = vsel %vm2202, %v2194, %v1271
      %v2237 = vsel %vm2202, %v2195, %v1273
      %v2238 = vsel %vm2202, %v2196, %v1275
      %v2239 = vsel %vm2202, %v2197, %v1277
      %v2240 = vsel %vm2202, %v2198, %v1279
      %v2241 = vsel %vm2202, %v2199, %v1281
      %v2242 = vsel %vm2202, %v2200, %v1283
      %v2243 = vsel %vm2202, %v2201, %v1285
      %vm2244 = vcmask 121856
      %v2245 = vsel %vm2244, %v2203, %v1410
      %v2246 = vsel %vm2244, %v2204, %v1412
      %v2247 = vsel %vm2244, %v2205, %v1414
      %v2248 = vsel %vm2244, %v2206, %v1416
      %v2249 = vsel %vm2244, %v2207, %v1418
      %v2250 = vsel %vm2244, %v2208, %v1420
      %v2251 = vsel %vm2244, %v2209, %v1422
      %v2252 = vsel %vm2244, %v2210, %v1424
      %v2253 = vsel %vm2244, %v2211, %v1426
      %v2254 = vsel %vm2244, %v2212, %v1428
      %v2255 = vsel %vm2244, %v2213, %v1430
      %v2256 = vsel %vm2244, %v2214, %v1432
      %v2257 = vsel %vm2244, %v2215, %v1434
      %v2258 = vsel %vm2244, %v2216, %v1436
      %v2259 = vsel %vm2244, %v2217, %v1438
      %v2260 = vsel %vm2244, %v2218, %v1440
      %v2261 = vsel %vm2244, %v2219, %v1442
      %v2262 = vsel %vm2244, %v2220, %v1444
      %v2263 = vsel %vm2244, %v2221, %v1446
      %v2264 = vsel %vm2244, %v2222, %v1448
      %v2265 = vsel %vm2244, %v2223, %v1450
      %v2266 = vsel %vm2244, %v2224, %v1452
      %v2267 = vsel %vm2244, %v2225, %v1454
      %v2268 = vsel %vm2244, %v2226, %v1456
      %v2269 = vsel %vm2244, %v2227, %v1458
      %v2270 = vsel %vm2244, %v2228, %v1460
      %v2271 = vsel %vm2244, %v2229, %v1462
      %v2272 = vsel %vm2244, %v2230, %v1464
      %v2273 = vsel %vm2244, %v2231, %v1466
      %v2274 = vsel %vm2244, %v2232, %v1468
      %v2275 = vsel %vm2244, %v2233, %v1470
      %v2276 = vsel %vm2244, %v2234, %v1472
      %v2277 = vsel %vm2244, %v2235, %v1474
      %v2278 = vsel %vm2244, %v2236, %v1476
      %v2279 = vsel %vm2244, %v2237, %v1478
      %v2280 = vsel %vm2244, %v2238, %v1480
      %v2281 = vsel %vm2244, %v2239, %v1482
      %v2282 = vsel %vm2244, %v2240, %v1484
      %v2283 = vsel %vm2244, %v2241, %v1486
      %v2284 = vsel %vm2244, %v2242, %v1488
      %v2285 = vsel %vm2244, %v2243, %v1490
      %vm2286 = vcmask 146432
      %v2287 = vsel %vm2286, %v2245, %v1539
      %v2288 = vsel %vm2286, %v2246, %v1541
      %v2289 = vsel %vm2286, %v2247, %v1543
      %v2290 = vsel %vm2286, %v2248, %v1545
      %v2291 = vsel %vm2286, %v2249, %v1547
      %v2292 = vsel %vm2286, %v2250, %v1549
      %v2293 = vsel %vm2286, %v2251, %v1551
      %v2294 = vsel %vm2286, %v2252, %v1553
      %v2295 = vsel %vm2286, %v2253, %v1555
      %v2296 = vsel %vm2286, %v2254, %v1557
      %v2297 = vsel %vm2286, %v2255, %v1559
      %v2298 = vsel %vm2286, %v2256, %v1561
      %v2299 = vsel %vm2286, %v2257, %v1563
      %v2300 = vsel %vm2286, %v2258, %v1565
      %v2301 = vsel %vm2286, %v2259, %v1567
      %v2302 = vsel %vm2286, %v2260, %v1569
      %v2303 = vsel %vm2286, %v2261, %v1571
      %v2304 = vsel %vm2286, %v2262, %v1573
      %v2305 = vsel %vm2286, %v2263, %v1575
      %v2306 = vsel %vm2286, %v2264, %v1577
      %v2307 = vsel %vm2286, %v2265, %v1579
      %v2308 = vsel %vm2286, %v2266, %v1581
      %v2309 = vsel %vm2286, %v2267, %v1583
      %v2310 = vsel %vm2286, %v2268, %v1585
      %v2311 = vsel %vm2286, %v2269, %v1587
      %v2312 = vsel %vm2286, %v2270, %v1589
      %v2313 = vsel %vm2286, %v2271, %v1591
      %v2314 = vsel %vm2286, %v2272, %v1593
      %v2315 = vsel %vm2286, %v2273, %v1595
      %v2316 = vsel %vm2286, %v2274, %v1597
      %v2317 = vsel %vm2286, %v2275, %v1599
      %v2318 = vsel %vm2286, %v2276, %v1601
      %v2319 = vsel %vm2286, %v2277, %v1603
      %v2320 = vsel %vm2286, %v2278, %v1605
      %v2321 = vsel %vm2286, %v2279, %v1607
      %v2322 = vsel %vm2286, %v2280, %v1609
      %v2323 = vsel %vm2286, %v2281, %v1611
      %v2324 = vsel %vm2286, %v2282, %v1613
      %v2325 = vsel %vm2286, %v2283, %v1615
      %v2326 = vsel %vm2286, %v2284, %v1617
      %v2327 = vsel %vm2286, %v2285, %v1619
      %vm2328 = vcmask 171008
      %v2329 = vsel %vm2328, %v2287, %v1747
      %v2330 = vsel %vm2328, %v2288, %v1749
      %v2331 = vsel %vm2328, %v2289, %v1751
      %v2332 = vsel %vm2328, %v2290, %v1753
      %v2333 = vsel %vm2328, %v2291, %v1755
      %v2334 = vsel %vm2328, %v2292, %v1757
      %v2335 = vsel %vm2328, %v2293, %v1759
      %v2336 = vsel %vm2328, %v2294, %v1761
      %v2337 = vsel %vm2328, %v2295, %v1763
      %v2338 = vsel %vm2328, %v2296, %v1765
      %v2339 = vsel %vm2328, %v2297, %v1767
      %v2340 = vsel %vm2328, %v2298, %v1769
      %v2341 = vsel %vm2328, %v2299, %v1771
      %v2342 = vsel %vm2328, %v2300, %v1773
      %v2343 = vsel %vm2328, %v2301, %v1775
      %v2344 = vsel %vm2328, %v2302, %v1777
      %v2345 = vsel %vm2328, %v2303, %v1779
      %v2346 = vsel %vm2328, %v2304, %v1781
      %v2347 = vsel %vm2328, %v2305, %v1783
      %v2348 = vsel %vm2328, %v2306, %v1785
      %v2349 = vsel %vm2328, %v2307, %v1787
      %v2350 = vsel %vm2328, %v2308, %v1789
      %v2351 = vsel %vm2328, %v2309, %v1791
      %v2352 = vsel %vm2328, %v2310, %v1793
      %v2353 = vsel %vm2328, %v2311, %v1795
      %v2354 = vsel %vm2328, %v2312, %v1797
      %v2355 = vsel %vm2328, %v2313, %v1799
      %v2356 = vsel %vm2328, %v2314, %v1801
      %v2357 = vsel %vm2328, %v2315, %v1803
      %v2358 = vsel %vm2328, %v2316, %v1805
      %v2359 = vsel %vm2328, %v2317, %v1807
      %v2360 = vsel %vm2328, %v2318, %v1809
      %v2361 = vsel %vm2328, %v2319, %v1811
      %v2362 = vsel %vm2328, %v2320, %v1813
      %v2363 = vsel %vm2328, %v2321, %v1815
      %v2364 = vsel %vm2328, %v2322, %v1817
      %v2365 = vsel %vm2328, %v2323, %v1819
      %v2366 = vsel %vm2328, %v2324, %v1821
      %v2367 = vsel %vm2328, %v2325, %v1823
      %v2368 = vsel %vm2328, %v2326, %v1825
      %v2369 = vsel %vm2328, %v2327, %v1827
      %vm2370 = vcmask 195584
      %v2371 = vsel %vm2370, %v2329, %v1954
      %v2372 = vsel %vm2370, %v2330, %v1956
      %v2373 = vsel %vm2370, %v2331, %v1958
      %v2374 = vsel %vm2370, %v2332, %v1960
      %v2375 = vsel %vm2370, %v2333, %v1962
      %v2376 = vsel %vm2370, %v2334, %v1964
      %v2377 = vsel %vm2370, %v2335, %v1966
      %v2378 = vsel %vm2370, %v2336, %v1968
      %v2379 = vsel %vm2370, %v2337, %v1970
      %v2380 = vsel %vm2370, %v2338, %v1972
      %v2381 = vsel %vm2370, %v2339, %v1974
      %v2382 = vsel %vm2370, %v2340, %v1976
      %v2383 = vsel %vm2370, %v2341, %v1978
      %v2384 = vsel %vm2370, %v2342, %v1980
      %v2385 = vsel %vm2370, %v2343, %v1982
      %v2386 = vsel %vm2370, %v2344, %v1984
      %v2387 = vsel %vm2370, %v2345, %v1986
      %v2388 = vsel %vm2370, %v2346, %v1988
      %v2389 = vsel %vm2370, %v2347, %v1990
      %v2390 = vsel %vm2370, %v2348, %v1992
      %v2391 = vsel %vm2370, %v2349, %v1994
      %v2392 = vsel %vm2370, %v2350, %v1996
      %v2393 = vsel %vm2370, %v2351, %v1998
      %v2394 = vsel %vm2370, %v2352, %v2000
      %v2395 = vsel %vm2370, %v2353, %v2002
      %v2396 = vsel %vm2370, %v2354, %v2004
      %v2397 = vsel %vm2370, %v2355, %v2006
      %v2398 = vsel %vm2370, %v2356, %v2008
      %v2399 = vsel %vm2370, %v2357, %v2010
      %v2400 = vsel %vm2370, %v2358, %v2012
      %v2401 = vsel %vm2370, %v2359, %v2014
      %v2402 = vsel %vm2370, %v2360, %v2016
      %v2403 = vsel %vm2370, %v2361, %v2018
      %v2404 = vsel %vm2370, %v2362, %v2020
      %v2405 = vsel %vm2370, %v2363, %v2022
      %v2406 = vsel %vm2370, %v2364, %v2024
      %v2407 = vsel %vm2370, %v2365, %v2026
      %v2408 = vsel %vm2370, %v2366, %v2028
      %v2409 = vsel %vm2370, %v2367, %v2030
      %v2410 = vsel %vm2370, %v2368, %v2032
      %v2411 = vsel %vm2370, %v2369, %v2034
      %v2412 = vpack.c.bf16 %v2372, %v2371
      %v2413 = vpack.c.bf16 %v2374, %v2373
      %v2414 = vpack.c.bf16 %v2376, %v2375
      %v2415 = vpack.c.bf16 %v2378, %v2377
      %v2416 = vpack.c.bf16 %v2380, %v2379
      %v2417 = vpack.c.bf16 %v2382, %v2381
      %v2418 = vpack.c.bf16 %v2384, %v2383
      %v2419 = vpack.c.bf16 %v2386, %v2385
      %v2420 = vpack.c.bf16 %v2388, %v2387
      %v2421 = vpack.c.bf16 %v2390, %v2389
      %v2422 = vpack.c.bf16 %v2392, %v2391
      %v2423 = vpack.c.bf16 %v2394, %v2393
      %v2424 = vpack.c.bf16 %v2396, %v2395
      %v2425 = vpack.c.bf16 %v2398, %v2397
      %v2426 = vpack.c.bf16 %v2400, %v2399
      %v2427 = vpack.c.bf16 %v2402, %v2401
      %v2428 = vpack.c.bf16 %v2404, %v2403
      %v2429 = vpack.c.bf16 %v2406, %v2405
      %v2430 = vpack.c.bf16 %v2408, %v2407
      %v2431 = vpack.c.bf16 %v2410, %v2409
      %v2432 = vpack.c.bf16 %v2411, %v2411
      %v2433 = vld [vmem:[%s1] sm:$0xf]
      %v2434 = vld [vmem:[%s1 + $0x4] sm:$0xf]
      %v2435 = vld [vmem:[%s1 + $0x8] sm:$0xf]
      %v2436 = vld [vmem:[%s1 + $0xc] sm:$0x3]
      %v2437 = vld [vmem:[%s2] sm:$0x1]
      %v2439 = vlaneseq
      %v2440 = vshrl.u32 %v2439, 7
      %v2441 = vsub.s32 0, %v2440
      %v2442 = vrot.slane %v2437, %v2441
      %v2448 = vunpack.c.l.b16 %v2433
      %v2449 = vunpack.c.l.b16 %v2434
      %v2450 = vunpack.c.l.b16 %v2435
      %v2451 = vunpack.c.l.b16 %v2436
      %v2452 = vpack.c.b16 %v2449, %v2448
      %v2453 = vpack.c.b16 %v2451, %v2450
      %vm2455 = vcmask 220160
      %v2457 = vsel %vm2455, %v2412, 0
      %v2460 = vsel %vm2455, %v2413, 0
      %v2463 = vsel %vm2455, %v2414, 0
      %v2466 = vsel %vm2455, %v2415, 0
      %v2469 = vsel %vm2455, %v2416, 0
      %v2472 = vsel %vm2455, %v2417, 0
      %v2475 = vsel %vm2455, %v2418, 0
      %v2478 = vsel %vm2455, %v2419, 0
      %v2481 = vsel %vm2455, %v2420, 0
      %v2484 = vsel %vm2455, %v2421, 0
      %v2487 = vsel %vm2455, %v2422, 0
      %v2490 = vsel %vm2455, %v2423, 0
      %v2493 = vsel %vm2455, %v2424, 0
      %v2496 = vsel %vm2455, %v2425, 0
      %v2499 = vsel %vm2455, %v2426, 0
      %v2502 = vsel %vm2455, %v2427, 0
      %v2505 = vsel %vm2455, %v2428, 0
      %v2508 = vsel %vm2455, %v2429, 0
      %v2511 = vsel %vm2455, %v2430, 0
      %v2514 = vsel %vm2455, %v2431, 0
      %v2517 = vsel %vm2455, %v2432, 0
      %v2519 = vsel %vm1122, 4294967295, 65535
      %v2520 = vsel %vm788, %v2519, 0
      %v2522 = vand.u32 %v2453, %v2520
      %2524 = vmatprep.subr.bf16.mxu0 0
      %2525 = vmatpush1.bf16.msra.mxu0 0
      %2526 = vmatprep.subr.bf16.mxu0 0
      %2527 = vmatpush1.bf16.msra.mxu0 0
      %2528 = vmatprep.subr.bf16.mxu0 0
      %2529 = vmatpush1.bf16.msra.mxu0 0
      %2530 = vmatprep.subr.bf16.mxu0 0
      %2531 = vmatpush1.bf16.msra.mxu0 0
      %2532 = vmatprep.subr.bf16.mxu0 0
      %2533 = vmatpush1.bf16.msra.mxu0 0
      %2534 = vmatprep.subr.bf16.mxu0 0
      %2535 = vmatpush1.bf16.msra.mxu0 0
      %2536 = vmatprep.subr.bf16.mxu0 0
      %2537 = vmatpush1.bf16.msra.mxu0 %v2522
      %2538 = vmatprep.subr.bf16.mxu0 0
      %2539 = vmatpush1.bf16.msra.mxu0 %v2452
      %2540 = vmatprep.subr.bf16.mxu0 0
      %2541 = vmatpush2.bf16.msra.mxu0 0
      %2542 = vmatprep.subr.bf16.mxu0 0
      %2543 = vmatpush2.bf16.msra.mxu0 0
      %2544 = vmatprep.subr.bf16.mxu0 0
      %2545 = vmatpush2.bf16.msra.mxu0 0
      %2546 = vmatprep.subr.bf16.mxu0 0
      %2547 = vmatpush2.bf16.msra.mxu0 0
      %2548 = vmatprep.subr.bf16.mxu0 0
      %2549 = vmatpush2.bf16.msra.mxu0 0
      %2550 = vmatprep.subr.bf16.mxu0 0
      %2551 = vmatpush2.bf16.msra.mxu0 0
      %2552 = vmatprep.subr.bf16.mxu0 0
      %2553 = vmatpush2.bf16.msra.mxu0 0
      %2554 = vmatprep.subr.bf16.mxu0 0
      %2555 = vmatpush2.bf16.msra.mxu0 0
      %2556 = vmatprep.mubr.bf16.mxu0 0
      %2557 = vmatmul.mubr.bf16.gmra.mxu0 %v2457
      %v2558 = vpop.f32.mrf.mxu0
      %v2559 = vadd.f32 %v2442, %v2558
      %v2560 = vpop.f32.mrf.mxu0
      %v2561 = vpop.f32.mrf.mxu0
      %v2562 = vadd.f32 %v2442, %v2561
      %v2563 = vpop.f32.mrf.mxu0
      %2564 = vmatprep.mubr.bf16.mxu0 0
      %2565 = vmatmul.mubr.bf16.gmra.mxu0 %v2460
      %v2566 = vpop.f32.mrf.mxu0
      %v2567 = vadd.f32 %v2442, %v2566
      %v2568 = vpop.f32.mrf.mxu0
      %v2569 = vpop.f32.mrf.mxu0
      %v2570 = vadd.f32 %v2442, %v2569
      %v2571 = vpop.f32.mrf.mxu0
      %2572 = vmatprep.mubr.bf16.mxu0 0
      %2573 = vmatmul.mubr.bf16.gmra.mxu0 %v2463
      %v2574 = vpop.f32.mrf.mxu0
      %v2575 = vadd.f32 %v2442, %v2574
      %v2576 = vpop.f32.mrf.mxu0
      %v2577 = vpop.f32.mrf.mxu0
      %v2578 = vadd.f32 %v2442, %v2577
      %v2579 = vpop.f32.mrf.mxu0
      %2580 = vmatprep.mubr.bf16.mxu0 0
      %2581 = vmatmul.mubr.bf16.gmra.mxu0 %v2466
      %v2582 = vpop.f32.mrf.mxu0
      %v2583 = vadd.f32 %v2442, %v2582
      %v2584 = vpop.f32.mrf.mxu0
      %v2585 = vpop.f32.mrf.mxu0
      %v2586 = vadd.f32 %v2442, %v2585
      %v2587 = vpop.f32.mrf.mxu0
      %2588 = vmatprep.mubr.bf16.mxu0 0
      %2589 = vmatmul.mubr.bf16.gmra.mxu0 %v2469
      %v2590 = vpop.f32.mrf.mxu0
      %v2591 = vadd.f32 %v2442, %v2590
      %v2592 = vpop.f32.mrf.mxu0
      %v2593 = vpop.f32.mrf.mxu0
      %v2594 = vadd.f32 %v2442, %v2593
      %v2595 = vpop.f32.mrf.mxu0
      %2596 = vmatprep.mubr.bf16.mxu0 0
      %2597 = vmatmul.mubr.bf16.gmra.mxu0 %v2472
      %v2598 = vpop.f32.mrf.mxu0
      %v2599 = vadd.f32 %v2442, %v2598
      %v2600 = vpop.f32.mrf.mxu0
      %v2601 = vpop.f32.mrf.mxu0
      %v2602 = vadd.f32 %v2442, %v2601
      %v2603 = vpop.f32.mrf.mxu0
      %2604 = vmatprep.mubr.bf16.mxu0 0
      %2605 = vmatmul.mubr.bf16.gmra.mxu0 %v2475
      %v2606 = vpop.f32.mrf.mxu0
      %v2607 = vadd.f32 %v2442, %v2606
      %v2608 = vpop.f32.mrf.mxu0
      %v2609 = vpop.f32.mrf.mxu0
      %v2610 = vadd.f32 %v2442, %v2609
      %v2611 = vpop.f32.mrf.mxu0
      %2612 = vmatprep.mubr.bf16.mxu0 0
      %2613 = vmatmul.mubr.bf16.gmra.mxu0 %v2478
      %v2614 = vpop.f32.mrf.mxu0
      %v2615 = vadd.f32 %v2442, %v2614
      %v2616 = vpop.f32.mrf.mxu0
      %v2617 = vpop.f32.mrf.mxu0
      %v2618 = vadd.f32 %v2442, %v2617
      %v2619 = vpop.f32.mrf.mxu0
      %2620 = vmatprep.mubr.bf16.mxu0 0
      %2621 = vmatmul.mubr.bf16.gmra.mxu0 %v2481
      %v2622 = vpop.f32.mrf.mxu0
      %v2623 = vadd.f32 %v2442, %v2622
      %v2624 = vpop.f32.mrf.mxu0
      %v2625 = vpop.f32.mrf.mxu0
      %v2626 = vadd.f32 %v2442, %v2625
      %v2627 = vpop.f32.mrf.mxu0
      %2628 = vmatprep.mubr.bf16.mxu0 0
      %2629 = vmatmul.mubr.bf16.gmra.mxu0 %v2484
      %v2630 = vpop.f32.mrf.mxu0
      %v2631 = vadd.f32 %v2442, %v2630
      %v2632 = vpop.f32.mrf.mxu0
      %v2633 = vpop.f32.mrf.mxu0
      %v2634 = vadd.f32 %v2442, %v2633
      %v2635 = vpop.f32.mrf.mxu0
      %2636 = vmatprep.mubr.bf16.mxu0 0
      %2637 = vmatmul.mubr.bf16.gmra.mxu0 %v2487
      %v2638 = vpop.f32.mrf.mxu0
      %v2639 = vadd.f32 %v2442, %v2638
      %v2640 = vpop.f32.mrf.mxu0
      %v2641 = vpop.f32.mrf.mxu0
      %v2642 = vadd.f32 %v2442, %v2641
      %v2643 = vpop.f32.mrf.mxu0
      %2644 = vmatprep.mubr.bf16.mxu0 0
      %2645 = vmatmul.mubr.bf16.gmra.mxu0 %v2490
      %v2646 = vpop.f32.mrf.mxu0
      %v2647 = vadd.f32 %v2442, %v2646
      %v2648 = vpop.f32.mrf.mxu0
      %v2649 = vpop.f32.mrf.mxu0
      %v2650 = vadd.f32 %v2442, %v2649
      %v2651 = vpop.f32.mrf.mxu0
      %2652 = vmatprep.mubr.bf16.mxu0 0
      %2653 = vmatmul.mubr.bf16.gmra.mxu0 %v2493
      %v2654 = vpop.f32.mrf.mxu0
      %v2655 = vadd.f32 %v2442, %v2654
      %v2656 = vpop.f32.mrf.mxu0
      %v2657 = vpop.f32.mrf.mxu0
      %v2658 = vadd.f32 %v2442, %v2657
      %v2659 = vpop.f32.mrf.mxu0
      %2660 = vmatprep.mubr.bf16.mxu0 0
      %2661 = vmatmul.mubr.bf16.gmra.mxu0 %v2496
      %v2662 = vpop.f32.mrf.mxu0
      %v2663 = vadd.f32 %v2442, %v2662
      %v2664 = vpop.f32.mrf.mxu0
      %v2665 = vpop.f32.mrf.mxu0
      %v2666 = vadd.f32 %v2442, %v2665
      %v2667 = vpop.f32.mrf.mxu0
      %2668 = vmatprep.mubr.bf16.mxu0 0
      %2669 = vmatmul.mubr.bf16.gmra.mxu0 %v2499
      %v2670 = vpop.f32.mrf.mxu0
      %v2671 = vadd.f32 %v2442, %v2670
      %v2672 = vpop.f32.mrf.mxu0
      %v2673 = vpop.f32.mrf.mxu0
      %v2674 = vadd.f32 %v2442, %v2673
      %v2675 = vpop.f32.mrf.mxu0
      %2676 = vmatprep.mubr.bf16.mxu0 0
      %2677 = vmatmul.mubr.bf16.gmra.mxu0 %v2502
      %v2678 = vpop.f32.mrf.mxu0
      %v2679 = vadd.f32 %v2442, %v2678
      %v2680 = vpop.f32.mrf.mxu0
      %v2681 = vpop.f32.mrf.mxu0
      %v2682 = vadd.f32 %v2442, %v2681
      %v2683 = vpop.f32.mrf.mxu0
      %2684 = vmatprep.mubr.bf16.mxu0 0
      %2685 = vmatmul.mubr.bf16.gmra.mxu0 %v2505
      %v2686 = vpop.f32.mrf.mxu0
      %v2687 = vadd.f32 %v2442, %v2686
      %v2688 = vpop.f32.mrf.mxu0
      %v2689 = vpop.f32.mrf.mxu0
      %v2690 = vadd.f32 %v2442, %v2689
      %v2691 = vpop.f32.mrf.mxu0
      %2692 = vmatprep.mubr.bf16.mxu0 0
      %2693 = vmatmul.mubr.bf16.gmra.mxu0 %v2508
      %v2694 = vpop.f32.mrf.mxu0
      %v2695 = vadd.f32 %v2442, %v2694
      %v2696 = vpop.f32.mrf.mxu0
      %v2697 = vpop.f32.mrf.mxu0
      %v2698 = vadd.f32 %v2442, %v2697
      %v2699 = vpop.f32.mrf.mxu0
      %2700 = vmatprep.mubr.bf16.mxu0 0
      %2701 = vmatmul.mubr.bf16.gmra.mxu0 %v2511
      %v2702 = vpop.f32.mrf.mxu0
      %v2703 = vadd.f32 %v2442, %v2702
      %v2704 = vpop.f32.mrf.mxu0
      %v2705 = vpop.f32.mrf.mxu0
      %v2706 = vadd.f32 %v2442, %v2705
      %v2707 = vpop.f32.mrf.mxu0
      %2708 = vmatprep.mubr.bf16.mxu0 0
      %2709 = vmatmul.mubr.bf16.gmra.mxu0 %v2514
      %v2710 = vpop.f32.mrf.mxu0
      %v2711 = vadd.f32 %v2442, %v2710
      %v2712 = vpop.f32.mrf.mxu0
      %v2713 = vpop.f32.mrf.mxu0
      %v2714 = vadd.f32 %v2442, %v2713
      %v2715 = vpop.f32.mrf.mxu0
      %2716 = vmatprep.mubr.bf16.mxu0 0
      %2717 = vmatmul.mubr.bf16.gmra.mxu0 %v2517
      %v2718 = vpop.f32.mrf.mxu0
      %v2719 = vadd.f32 %v2442, %v2718
      %v2720 = vpop.f32.mrf.mxu0
      %v2721 = vpop.f32.mrf.mxu0
      %v2722 = vpop.f32.mrf.mxu0
      %2723 = vdwg.mxu0
      %vm2724 = vcmp.ge.f32.partialorder %v2559, 0.0
      %vm2725 = vcmp.ge.f32.partialorder %v2562, 0.0
      %vm2726 = vcmp.ge.f32.partialorder %v2567, 0.0
      %vm2727 = vcmp.ge.f32.partialorder %v2570, 0.0
      %vm2728 = vcmp.ge.f32.partialorder %v2575, 0.0
      %vm2729 = vcmp.ge.f32.partialorder %v2578, 0.0
      %vm2730 = vcmp.ge.f32.partialorder %v2583, 0.0
      %vm2731 = vcmp.ge.f32.partialorder %v2586, 0.0
      %vm2732 = vcmp.ge.f32.partialorder %v2591, 0.0
      %vm2733 = vcmp.ge.f32.partialorder %v2594, 0.0
      %vm2734 = vcmp.ge.f32.partialorder %v2599, 0.0
      %vm2735 = vcmp.ge.f32.partialorder %v2602, 0.0
      %vm2736 = vcmp.ge.f32.partialorder %v2607, 0.0
      %vm2737 = vcmp.ge.f32.partialorder %v2610, 0.0
      %vm2738 = vcmp.ge.f32.partialorder %v2615, 0.0
      %vm2739 = vcmp.ge.f32.partialorder %v2618, 0.0
      %vm2740 = vcmp.ge.f32.partialorder %v2623, 0.0
      %vm2741 = vcmp.ge.f32.partialorder %v2626, 0.0
      %vm2742 = vcmp.ge.f32.partialorder %v2631, 0.0
      %vm2743 = vcmp.ge.f32.partialorder %v2634, 0.0
      %vm2744 = vcmp.ge.f32.partialorder %v2639, 0.0
      %vm2745 = vcmp.ge.f32.partialorder %v2642, 0.0
      %vm2746 = vcmp.ge.f32.partialorder %v2647, 0.0
      %vm2747 = vcmp.ge.f32.partialorder %v2650, 0.0
      %vm2748 = vcmp.ge.f32.partialorder %v2655, 0.0
      %vm2749 = vcmp.ge.f32.partialorder %v2658, 0.0
      %vm2750 = vcmp.ge.f32.partialorder %v2663, 0.0
      %vm2751 = vcmp.ge.f32.partialorder %v2666, 0.0
      %vm2752 = vcmp.ge.f32.partialorder %v2671, 0.0
      %vm2753 = vcmp.ge.f32.partialorder %v2674, 0.0
      %vm2754 = vcmp.ge.f32.partialorder %v2679, 0.0
      %vm2755 = vcmp.ge.f32.partialorder %v2682, 0.0
      %vm2756 = vcmp.ge.f32.partialorder %v2687, 0.0
      %vm2757 = vcmp.ge.f32.partialorder %v2690, 0.0
      %vm2758 = vcmp.ge.f32.partialorder %v2695, 0.0
      %vm2759 = vcmp.ge.f32.partialorder %v2698, 0.0
      %vm2760 = vcmp.ge.f32.partialorder %v2703, 0.0
      %vm2761 = vcmp.ge.f32.partialorder %v2706, 0.0
      %vm2762 = vcmp.ge.f32.partialorder %v2711, 0.0
      %vm2763 = vcmp.ge.f32.partialorder %v2714, 0.0
      %vm2764 = vcmp.ge.f32.partialorder %v2719, 0.0
      %v2765 = vmul.f32 %v2559, 0.01
      %v2766 = vmul.f32 %v2562, 0.01
      %v2767 = vmul.f32 %v2567, 0.01
      %v2768 = vmul.f32 %v2570, 0.01
      %v2769 = vmul.f32 %v2575, 0.01
      %v2770 = vmul.f32 %v2578, 0.01
      %v2771 = vmul.f32 %v2583, 0.01
      %v2772 = vmul.f32 %v2586, 0.01
      %v2773 = vmul.f32 %v2591, 0.01
      %v2774 = vmul.f32 %v2594, 0.01
      %v2775 = vmul.f32 %v2599, 0.01
      %v2776 = vmul.f32 %v2602, 0.01
      %v2777 = vmul.f32 %v2607, 0.01
      %v2778 = vmul.f32 %v2610, 0.01
      %v2779 = vmul.f32 %v2615, 0.01
      %v2780 = vmul.f32 %v2618, 0.01
      %v2781 = vmul.f32 %v2623, 0.01
      %v2782 = vmul.f32 %v2626, 0.01
      %v2783 = vmul.f32 %v2631, 0.01
      %v2784 = vmul.f32 %v2634, 0.01
      %v2785 = vmul.f32 %v2639, 0.01
      %v2786 = vmul.f32 %v2642, 0.01
      %v2787 = vmul.f32 %v2647, 0.01
      %v2788 = vmul.f32 %v2650, 0.01
      %v2789 = vmul.f32 %v2655, 0.01
      %v2790 = vmul.f32 %v2658, 0.01
      %v2791 = vmul.f32 %v2663, 0.01
      %v2792 = vmul.f32 %v2666, 0.01
      %v2793 = vmul.f32 %v2671, 0.01
      %v2794 = vmul.f32 %v2674, 0.01
      %v2795 = vmul.f32 %v2679, 0.01
      %v2796 = vmul.f32 %v2682, 0.01
      %v2797 = vmul.f32 %v2687, 0.01
      %v2798 = vmul.f32 %v2690, 0.01
      %v2799 = vmul.f32 %v2695, 0.01
      %v2800 = vmul.f32 %v2698, 0.01
      %v2801 = vmul.f32 %v2703, 0.01
      %v2802 = vmul.f32 %v2706, 0.01
      %v2803 = vmul.f32 %v2711, 0.01
      %v2804 = vmul.f32 %v2714, 0.01
      %v2805 = vmul.f32 %v2719, 0.01
      %v2806 = vsel %vm2724, %v2559, %v2765
      %v2807 = vsel %vm2725, %v2562, %v2766
      %v2808 = vsel %vm2726, %v2567, %v2767
      %v2809 = vsel %vm2727, %v2570, %v2768
      %v2810 = vsel %vm2728, %v2575, %v2769
      %v2811 = vsel %vm2729, %v2578, %v2770
      %v2812 = vsel %vm2730, %v2583, %v2771
      %v2813 = vsel %vm2731, %v2586, %v2772
      %v2814 = vsel %vm2732, %v2591, %v2773
      %v2815 = vsel %vm2733, %v2594, %v2774
      %v2816 = vsel %vm2734, %v2599, %v2775
      %v2817 = vsel %vm2735, %v2602, %v2776
      %v2818 = vsel %vm2736, %v2607, %v2777
      %v2819 = vsel %vm2737, %v2610, %v2778
      %v2820 = vsel %vm2738, %v2615, %v2779
      %v2821 = vsel %vm2739, %v2618, %v2780
      %v2822 = vsel %vm2740, %v2623, %v2781
      %v2823 = vsel %vm2741, %v2626, %v2782
      %v2824 = vsel %vm2742, %v2631, %v2783
      %v2825 = vsel %vm2743, %v2634, %v2784
      %v2826 = vsel %vm2744, %v2639, %v2785
      %v2827 = vsel %vm2745, %v2642, %v2786
      %v2828 = vsel %vm2746, %v2647, %v2787
      %v2829 = vsel %vm2747, %v2650, %v2788
      %v2830 = vsel %vm2748, %v2655, %v2789
      %v2831 = vsel %vm2749, %v2658, %v2790
      %v2832 = vsel %vm2750, %v2663, %v2791
      %v2833 = vsel %vm2751, %v2666, %v2792
      %v2834 = vsel %vm2752, %v2671, %v2793
      %v2835 = vsel %vm2753, %v2674, %v2794
      %v2836 = vsel %vm2754, %v2679, %v2795
      %v2837 = vsel %vm2755, %v2682, %v2796
      %v2838 = vsel %vm2756, %v2687, %v2797
      %v2839 = vsel %vm2757, %v2690, %v2798
      %v2840 = vsel %vm2758, %v2695, %v2799
      %v2841 = vsel %vm2759, %v2698, %v2800
      %v2842 = vsel %vm2760, %v2703, %v2801
      %v2843 = vsel %vm2761, %v2706, %v2802
      %v2844 = vsel %vm2762, %v2711, %v2803
      %v2845 = vsel %vm2763, %v2714, %v2804
      %v2846 = vsel %vm2764, %v2719, %v2805
      %v2886 = vrot.slane %v2806, 1
      %v2887 = vrot.slane %v2807, 1
      %v2888 = vsel %vm583, %v2886, %v2887
      %v2889 = vrot.slane %v2808, 1
      %v2890 = vsel %vm583, %v2887, %v2889
      %v2891 = vrot.slane %v2809, 1
      %v2892 = vsel %vm583, %v2889, %v2891
      %v2893 = vrot.slane %v2810, 1
      %v2894 = vsel %vm583, %v2891, %v2893
      %v2895 = vrot.slane %v2811, 1
      %v2896 = vsel %vm583, %v2893, %v2895
      %v2897 = vrot.slane %v2812, 1
      %v2898 = vsel %vm583, %v2895, %v2897
      %v2899 = vrot.slane %v2813, 1
      %v2900 = vsel %vm583, %v2897, %v2899
      %v2901 = vrot.slane %v2814, 1
      %v2902 = vsel %vm583, %v2899, %v2901
      %v2903 = vrot.slane %v2815, 1
      %v2904 = vsel %vm583, %v2901, %v2903
      %v2905 = vrot.slane %v2816, 1
      %v2906 = vsel %vm583, %v2903, %v2905
      %v2907 = vrot.slane %v2817, 1
      %v2908 = vsel %vm583, %v2905, %v2907
      %v2909 = vrot.slane %v2818, 1
      %v2910 = vsel %vm583, %v2907, %v2909
      %v2911 = vrot.slane %v2819, 1
      %v2912 = vsel %vm583, %v2909, %v2911
      %v2913 = vrot.slane %v2820, 1
      %v2914 = vsel %vm583, %v2911, %v2913
      %v2915 = vrot.slane %v2821, 1
      %v2916 = vsel %vm583, %v2913, %v2915
      %v2917 = vrot.slane %v2822, 1
      %v2918 = vsel %vm583, %v2915, %v2917
      %v2919 = vrot.slane %v2823, 1
      %v2920 = vsel %vm583, %v2917, %v2919
      %v2921 = vrot.slane %v2824, 1
      %v2922 = vsel %vm583, %v2919, %v2921
      %v2923 = vrot.slane %v2825, 1
      %v2924 = vsel %vm583, %v2921, %v2923
      %v2925 = vrot.slane %v2826, 1
      %v2926 = vsel %vm583, %v2923, %v2925
      %v2927 = vrot.slane %v2827, 1
      %v2928 = vsel %vm583, %v2925, %v2927
      %v2929 = vrot.slane %v2828, 1
      %v2930 = vsel %vm583, %v2927, %v2929
      %v2931 = vrot.slane %v2829, 1
      %v2932 = vsel %vm583, %v2929, %v2931
      %v2933 = vrot.slane %v2830, 1
      %v2934 = vsel %vm583, %v2931, %v2933
      %v2935 = vrot.slane %v2831, 1
      %v2936 = vsel %vm583, %v2933, %v2935
      %v2937 = vrot.slane %v2832, 1
      %v2938 = vsel %vm583, %v2935, %v2937
      %v2939 = vrot.slane %v2833, 1
      %v2940 = vsel %vm583, %v2937, %v2939
      %v2941 = vrot.slane %v2834, 1
      %v2942 = vsel %vm583, %v2939, %v2941
      %v2943 = vrot.slane %v2835, 1
      %v2944 = vsel %vm583, %v2941, %v2943
      %v2945 = vrot.slane %v2836, 1
      %v2946 = vsel %vm583, %v2943, %v2945
      %v2947 = vrot.slane %v2837, 1
      %v2948 = vsel %vm583, %v2945, %v2947
      %v2949 = vrot.slane %v2838, 1
      %v2950 = vsel %vm583, %v2947, %v2949
      %v2951 = vrot.slane %v2839, 1
      %v2952 = vsel %vm583, %v2949, %v2951
      %v2953 = vrot.slane %v2840, 1
      %v2954 = vsel %vm583, %v2951, %v2953
      %v2955 = vrot.slane %v2841, 1
      %v2956 = vsel %vm583, %v2953, %v2955
      %v2957 = vrot.slane %v2842, 1
      %v2958 = vsel %vm583, %v2955, %v2957
      %v2959 = vrot.slane %v2843, 1
      %v2960 = vsel %vm583, %v2957, %v2959
      %v2961 = vrot.slane %v2844, 1
      %v2962 = vsel %vm583, %v2959, %v2961
      %v3002 = vmax.f32 %v2806, %v2888
      %v3003 = vmax.f32 %v2807, %v2890
      %v3004 = vmax.f32 %v2808, %v2892
      %v3005 = vmax.f32 %v2809, %v2894
      %v3006 = vmax.f32 %v2810, %v2896
      %v3007 = vmax.f32 %v2811, %v2898
      %v3008 = vmax.f32 %v2812, %v2900
      %v3009 = vmax.f32 %v2813, %v2902
      %v3010 = vmax.f32 %v2814, %v2904
      %v3011 = vmax.f32 %v2815, %v2906
      %v3012 = vmax.f32 %v2816, %v2908
      %v3013 = vmax.f32 %v2817, %v2910
      %v3014 = vmax.f32 %v2818, %v2912
      %v3015 = vmax.f32 %v2819, %v2914
      %v3016 = vmax.f32 %v2820, %v2916
      %v3017 = vmax.f32 %v2821, %v2918
      %v3018 = vmax.f32 %v2822, %v2920
      %v3019 = vmax.f32 %v2823, %v2922
      %v3020 = vmax.f32 %v2824, %v2924
      %v3021 = vmax.f32 %v2825, %v2926
      %v3022 = vmax.f32 %v2826, %v2928
      %v3023 = vmax.f32 %v2827, %v2930
      %v3024 = vmax.f32 %v2828, %v2932
      %v3025 = vmax.f32 %v2829, %v2934
      %v3026 = vmax.f32 %v2830, %v2936
      %v3027 = vmax.f32 %v2831, %v2938
      %v3028 = vmax.f32 %v2832, %v2940
      %v3029 = vmax.f32 %v2833, %v2942
      %v3030 = vmax.f32 %v2834, %v2944
      %v3031 = vmax.f32 %v2835, %v2946
      %v3032 = vmax.f32 %v2836, %v2948
      %v3033 = vmax.f32 %v2837, %v2950
      %v3034 = vmax.f32 %v2838, %v2952
      %v3035 = vmax.f32 %v2839, %v2954
      %v3036 = vmax.f32 %v2840, %v2956
      %v3037 = vmax.f32 %v2841, %v2958
      %v3038 = vmax.f32 %v2842, %v2960
      %v3039 = vmax.f32 %v2843, %v2962
      %v3040 = vmax.f32 %v2844, %v2961
      %v3043 = vrot.slane %v2845, 1
      %v3044 = vsel %vm583, %v2961, %v3043
      %v3045 = vrot.slane %v2846, 1
      %v3046 = vsel %vm583, %v3043, %v3045
      %v3050 = vmax.f32 %v2844, %v3044
      %v3051 = vmax.f32 %v2845, %v3046
      %v3052 = vmax.f32 %v2846, %v3045
      %v3092 = vrot.slane %v3004, 2
      %v3093 = vrot.slane %v3005, 2
      %v3094 = vsel %vm788, %v3092, %v3093
      %v3095 = vrot.slane %v3006, 2
      %v3096 = vsel %vm788, %v3093, %v3095
      %v3097 = vrot.slane %v3007, 2
      %v3098 = vsel %vm788, %v3095, %v3097
      %v3099 = vrot.slane %v3008, 2
      %v3100 = vsel %vm788, %v3097, %v3099
      %v3101 = vrot.slane %v3009, 2
      %v3102 = vsel %vm788, %v3099, %v3101
      %v3103 = vrot.slane %v3010, 2
      %v3104 = vsel %vm788, %v3101, %v3103
      %v3105 = vrot.slane %v3011, 2
      %v3106 = vsel %vm788, %v3103, %v3105
      %v3107 = vrot.slane %v3012, 2
      %v3108 = vsel %vm788, %v3105, %v3107
      %v3109 = vrot.slane %v3013, 2
      %v3110 = vsel %vm788, %v3107, %v3109
      %v3111 = vrot.slane %v3014, 2
      %v3112 = vsel %vm788, %v3109, %v3111
      %v3113 = vrot.slane %v3015, 2
      %v3114 = vsel %vm788, %v3111, %v3113
      %v3115 = vrot.slane %v3016, 2
      %v3116 = vsel %vm788, %v3113, %v3115
      %v3117 = vrot.slane %v3017, 2
      %v3118 = vsel %vm788, %v3115, %v3117
      %v3119 = vrot.slane %v3018, 2
      %v3120 = vsel %vm788, %v3117, %v3119
      %v3121 = vrot.slane %v3019, 2
      %v3122 = vsel %vm788, %v3119, %v3121
      %v3123 = vrot.slane %v3020, 2
      %v3124 = vsel %vm788, %v3121, %v3123
      %v3125 = vrot.slane %v3021, 2
      %v3126 = vsel %vm788, %v3123, %v3125
      %v3127 = vrot.slane %v3022, 2
      %v3128 = vsel %vm788, %v3125, %v3127
      %v3129 = vrot.slane %v3023, 2
      %v3130 = vsel %vm788, %v3127, %v3129
      %v3131 = vrot.slane %v3024, 2
      %v3132 = vsel %vm788, %v3129, %v3131
      %v3133 = vrot.slane %v3025, 2
      %v3134 = vsel %vm788, %v3131, %v3133
      %v3135 = vrot.slane %v3026, 2
      %v3136 = vsel %vm788, %v3133, %v3135
      %v3137 = vrot.slane %v3027, 2
      %v3138 = vsel %vm788, %v3135, %v3137
      %v3139 = vrot.slane %v3028, 2
      %v3140 = vsel %vm788, %v3137, %v3139
      %v3141 = vrot.slane %v3029, 2
      %v3142 = vsel %vm788, %v3139, %v3141
      %v3143 = vrot.slane %v3030, 2
      %v3144 = vsel %vm788, %v3141, %v3143
      %v3145 = vrot.slane %v3031, 2
      %v3146 = vsel %vm788, %v3143, %v3145
      %v3147 = vrot.slane %v3032, 2
      %v3148 = vsel %vm788, %v3145, %v3147
      %v3149 = vrot.slane %v3033, 2
      %v3150 = vsel %vm788, %v3147, %v3149
      %v3151 = vrot.slane %v3034, 2
      %v3152 = vsel %vm788, %v3149, %v3151
      %v3153 = vrot.slane %v3035, 2
      %v3154 = vsel %vm788, %v3151, %v3153
      %v3155 = vrot.slane %v3036, 2
      %v3156 = vsel %vm788, %v3153, %v3155
      %v3157 = vrot.slane %v3037, 2
      %v3158 = vsel %vm788, %v3155, %v3157
      %v3159 = vrot.slane %v3038, 2
      %v3160 = vsel %vm788, %v3157, %v3159
      %v3161 = vrot.slane %v3039, 2
      %v3162 = vsel %vm788, %v3159, %v3161
      %v3163 = vrot.slane %v3050, 2
      %v3164 = vsel %vm788, %v3161, %v3163
      %v3165 = vrot.slane %v3051, 2
      %v3166 = vsel %vm788, %v3163, %v3165
      %v3167 = vrot.slane %v3052, 2
      %v3168 = vsel %vm788, %v3165, %v3167
      %v3208 = vmax.f32 %v3002, %v3094
      %v3209 = vmax.f32 %v3003, %v3096
      %v3210 = vmax.f32 %v3004, %v3098
      %v3211 = vmax.f32 %v3005, %v3100
      %v3212 = vmax.f32 %v3006, %v3102
      %v3213 = vmax.f32 %v3007, %v3104
      %v3214 = vmax.f32 %v3008, %v3106
      %v3215 = vmax.f32 %v3009, %v3108
      %v3216 = vmax.f32 %v3010, %v3110
      %v3217 = vmax.f32 %v3011, %v3112
      %v3218 = vmax.f32 %v3012, %v3114
      %v3219 = vmax.f32 %v3013, %v3116
      %v3220 = vmax.f32 %v3014, %v3118
      %v3221 = vmax.f32 %v3015, %v3120
      %v3222 = vmax.f32 %v3016, %v3122
      %v3223 = vmax.f32 %v3017, %v3124
      %v3224 = vmax.f32 %v3018, %v3126
      %v3225 = vmax.f32 %v3019, %v3128
      %v3226 = vmax.f32 %v3020, %v3130
      %v3227 = vmax.f32 %v3021, %v3132
      %v3228 = vmax.f32 %v3022, %v3134
      %v3229 = vmax.f32 %v3023, %v3136
      %v3230 = vmax.f32 %v3024, %v3138
      %v3231 = vmax.f32 %v3025, %v3140
      %v3232 = vmax.f32 %v3026, %v3142
      %v3233 = vmax.f32 %v3027, %v3144
      %v3234 = vmax.f32 %v3028, %v3146
      %v3235 = vmax.f32 %v3029, %v3148
      %v3236 = vmax.f32 %v3030, %v3150
      %v3237 = vmax.f32 %v3031, %v3152
      %v3238 = vmax.f32 %v3032, %v3154
      %v3239 = vmax.f32 %v3033, %v3156
      %v3240 = vmax.f32 %v3034, %v3158
      %v3241 = vmax.f32 %v3035, %v3160
      %v3242 = vmax.f32 %v3036, %v3162
      %v3243 = vmax.f32 %v3037, %v3164
      %v3244 = vmax.f32 %v3038, %v3166
      %v3245 = vmax.f32 %v3039, %v3168
      %v3246 = vmax.f32 %v3040, %v3167
      %v3247 = vld [vmem:[%s11] sm:$0xff]
      %v3248 = vld [vmem:[%s11 + $0x8] sm:$0xf]
      %v3249 = vld [vmem:[%s11 + $0xc] sm:$0xff]
      %v3250 = vld [vmem:[%s11 + $0x14] sm:$0xf]
      %v3251 = vld [vmem:[%s11 + $0x18] sm:$0xff]
      %v3252 = vld [vmem:[%s11 + $0x20] sm:$0xf]
      %v3253 = vld [vmem:[%s11 + $0x24] sm:$0xff]
      %v3254 = vld [vmem:[%s11 + $0x2c] sm:$0xf]
      %v3255 = vld [vmem:[%s11 + $0x30] sm:$0xff]
      %v3256 = vld [vmem:[%s11 + $0x38] sm:$0xf]
      %v3257 = vld [vmem:[%s11 + $0x3c] sm:$0xff]
      %v3258 = vld [vmem:[%s11 + $0x44] sm:$0xf]
      %v3259 = vld [vmem:[%s11 + $0x48] sm:$0xff]
      %v3260 = vld [vmem:[%s11 + $0x50] sm:$0xf]
      %v3261 = vld [vmem:[%s11 + $0x54] sm:$0xff]
      %v3262 = vld [vmem:[%s11 + $0x5c] sm:$0xf]
      %v3263 = vld [vmem:[%s11 + $0x60] sm:$0xff]
      %v3264 = vld [vmem:[%s11 + $0x68] sm:$0xf]
      %v3265 = vld [vmem:[%s11 + $0x6c] sm:$0xff]
      %v3266 = vld [vmem:[%s11 + $0x74] sm:$0xf]
      %v3267 = vld [vmem:[%s11 + $0x78] sm:$0xff]
      %v3268 = vld [vmem:[%s11 + $0x80] sm:$0xf]
      %v3269 = vld [vmem:[%s11 + $0x84] sm:$0xff]
      %v3270 = vld [vmem:[%s11 + $0x8c] sm:$0xf]
      %v3271 = vld [vmem:[%s11 + $0x90] sm:$0xff]
      %v3272 = vld [vmem:[%s11 + $0x98] sm:$0xf]
      %v3273 = vld [vmem:[%s11 + $0x9c] sm:$0xff]
      %v3274 = vld [vmem:[%s11 + $0xa4] sm:$0xf]
      %v3275 = vld [vmem:[%s11 + $0xa8] sm:$0xff]
      %v3276 = vld [vmem:[%s11 + $0xb0] sm:$0xf]
      %v3277 = vld [vmem:[%s11 + $0xb4] sm:$0x11]
      %v3278 = vld [vmem:[%s11 + $0xbc] sm:$0x1]
      %v3279 = vpack.c.bf16 %v3209, %v3208
      %v3280 = vpack.c.bf16 %v3211, %v3210
      %v3281 = vpack.c.bf16 %v3213, %v3212
      %v3282 = vpack.c.bf16 %v3215, %v3214
      %v3283 = vpack.c.bf16 %v3217, %v3216
      %v3284 = vpack.c.bf16 %v3219, %v3218
      %v3285 = vpack.c.bf16 %v3221, %v3220
      %v3286 = vpack.c.bf16 %v3223, %v3222
      %v3287 = vpack.c.bf16 %v3225, %v3224
      %v3288 = vpack.c.bf16 %v3227, %v3226
      %v3289 = vpack.c.bf16 %v3229, %v3228
      %v3290 = vpack.c.bf16 %v3231, %v3230
      %v3291 = vpack.c.bf16 %v3233, %v3232
      %v3292 = vpack.c.bf16 %v3235, %v3234
      %v3293 = vpack.c.bf16 %v3237, %v3236
      %v3294 = vpack.c.bf16 %v3239, %v3238
      %v3295 = vpack.c.bf16 %v3241, %v3240
      %v3296 = vpack.c.bf16 %v3243, %v3242
      %v3297 = vpack.c.bf16 %v3245, %v3244
      %v3298 = vpack.c.bf16 %v3246, %v3246
      %v3331 = vunpack.c.l.b16 %v3247
      %v3332 = vunpack.c.h.b16 %v3247
      %v3333 = vunpack.c.l.b16 %v3248
      %v3334 = vunpack.c.l.b16 %v3249
      %v3335 = vunpack.c.h.b16 %v3249
      %v3336 = vunpack.c.l.b16 %v3250
      %v3337 = vunpack.c.l.b16 %v3251
      %v3338 = vunpack.c.h.b16 %v3251
      %v3339 = vunpack.c.l.b16 %v3252
      %v3340 = vunpack.c.l.b16 %v3253
      %v3341 = vunpack.c.h.b16 %v3253
      %v3342 = vunpack.c.l.b16 %v3254
      %v3343 = vunpack.c.l.b16 %v3255
      %v3344 = vunpack.c.h.b16 %v3255
      %v3345 = vunpack.c.l.b16 %v3256
      %v3346 = vunpack.c.l.b16 %v3257
      %v3347 = vunpack.c.h.b16 %v3257
      %v3348 = vunpack.c.l.b16 %v3258
      %v3349 = vunpack.c.l.b16 %v3259
      %v3350 = vunpack.c.h.b16 %v3259
      %v3351 = vunpack.c.l.b16 %v3260
      %v3352 = vunpack.c.l.b16 %v3261
      %v3353 = vunpack.c.h.b16 %v3261
      %v3354 = vunpack.c.l.b16 %v3262
      %v3355 = vunpack.c.l.b16 %v3263
      %v3356 = vunpack.c.h.b16 %v3263
      %v3357 = vunpack.c.l.b16 %v3264
      %v3358 = vunpack.c.l.b16 %v3265
      %v3359 = vunpack.c.h.b16 %v3265
      %v3360 = vunpack.c.l.b16 %v3266
      %v3361 = vunpack.c.l.b16 %v3267
      %v3362 = vunpack.c.h.b16 %v3267
      %v3363 = vunpack.c.l.b16 %v3268
      %v3364 = vunpack.c.l.b16 %v3269
      %v3365 = vunpack.c.h.b16 %v3269
      %v3366 = vunpack.c.l.b16 %v3270
      %v3367 = vunpack.c.l.b16 %v3271
      %v3368 = vunpack.c.h.b16 %v3271
      %v3369 = vunpack.c.l.b16 %v3272
      %v3370 = vunpack.c.l.b16 %v3273
      %v3371 = vunpack.c.h.b16 %v3273
      %v3372 = vunpack.c.l.b16 %v3274
      %v3373 = vunpack.c.l.b16 %v3275
      %v3374 = vunpack.c.h.b16 %v3275
      %v3375 = vunpack.c.l.b16 %v3276
      %v3376 = vunpack.c.l.b16 %v3277
      %v3377 = vunpack.c.h.b16 %v3277
      %v3378 = vunpack.c.l.b16 %v3278
      %v3379 = vpack.c.b16 %v3334, %v3331
      %v3380 = vpack.c.b16 %v3335, %v3332
      %v3381 = vpack.c.b16 %v3336, %v3333
      %v3382 = vpack.c.b16 %v3340, %v3337
      %v3383 = vpack.c.b16 %v3341, %v3338
      %v3384 = vpack.c.b16 %v3342, %v3339
      %v3385 = vpack.c.b16 %v3346, %v3343
      %v3386 = vpack.c.b16 %v3347, %v3344
      %v3387 = vpack.c.b16 %v3348, %v3345
      %v3388 = vpack.c.b16 %v3352, %v3349
      %v3389 = vpack.c.b16 %v3353, %v3350
      %v3390 = vpack.c.b16 %v3354, %v3351
      %v3391 = vpack.c.b16 %v3358, %v3355
      %v3392 = vpack.c.b16 %v3359, %v3356
      %v3393 = vpack.c.b16 %v3360, %v3357
      %v3394 = vpack.c.b16 %v3364, %v3361
      %v3395 = vpack.c.b16 %v3365, %v3362
      %v3396 = vpack.c.b16 %v3366, %v3363
      %v3397 = vpack.c.b16 %v3370, %v3367
      %v3398 = vpack.c.b16 %v3371, %v3368
      %v3399 = vpack.c.b16 %v3372, %v3369
      %v3400 = vpack.c.b16 %v3376, %v3373
      %v3401 = vpack.c.b16 %v3377, %v3374
      %v3402 = vpack.c.b16 %v3378, %v3375
      %vm3419 = vcmask 400384
      %v3421 = vsel %vm3419, %v3381, 0
      %v3424 = vsel %vm3419, %v3384, 0
      %v3427 = vsel %vm3419, %v3387, 0
      %v3430 = vsel %vm3419, %v3390, 0
      %v3433 = vsel %vm3419, %v3393, 0
      %v3436 = vsel %vm3419, %v3396, 0
      %v3439 = vsel %vm3419, %v3399, 0
      %v3442 = vsel %vm3419, %v3402, 0
      %vm3444 = vcmask 1040384
      %v3445 = vsel 0, 4294967295, 65535
      %v3446 = vsel %vm3444, %v3445, 0
      %v3448 = vand.u32 %v3298, %v3446
      %3450 = vmatprep.subr.bf16.mxu0 0
      %3451 = vmatpush1.bf16.msra.mxu0 %v3286
      %3452 = vmatprep.subr.bf16.mxu0 0
      %3453 = vmatpush1.bf16.msra.mxu0 %v3285
      %3454 = vmatprep.subr.bf16.mxu0 0
      %3455 = vmatpush1.bf16.msra.mxu0 %v3284
      %3456 = vmatprep.subr.bf16.mxu0 0
      %3457 = vmatpush1.bf16.msra.mxu0 %v3283
      %3458 = vmatprep.subr.bf16.mxu0 0
      %3459 = vmatpush1.bf16.msra.mxu0 %v3282
      %3460 = vmatprep.subr.bf16.mxu0 0
      %3461 = vmatpush1.bf16.msra.mxu0 %v3281
      %3462 = vmatprep.subr.bf16.mxu0 0
      %3463 = vmatpush1.bf16.msra.mxu0 %v3280
      %3464 = vmatprep.subr.bf16.mxu0 0
      %3465 = vmatpush1.bf16.msra.mxu0 %v3279
      %3466 = vmatprep.subr.bf16.mxu0 0
      %3467 = vmatpush2.bf16.msra.mxu0 %v3294
      %3468 = vmatprep.subr.bf16.mxu0 0
      %3469 = vmatpush2.bf16.msra.mxu0 %v3293
      %3470 = vmatprep.subr.bf16.mxu0 0
      %3471 = vmatpush2.bf16.msra.mxu0 %v3292
      %3472 = vmatprep.subr.bf16.mxu0 0
      %3473 = vmatpush2.bf16.msra.mxu0 %v3291
      %3474 = vmatprep.subr.bf16.mxu0 0
      %3475 = vmatpush2.bf16.msra.mxu0 %v3290
      %3476 = vmatprep.subr.bf16.mxu0 0
      %3477 = vmatpush2.bf16.msra.mxu0 %v3289
      %3478 = vmatprep.subr.bf16.mxu0 0
      %3479 = vmatpush2.bf16.msra.mxu0 %v3288
      %3480 = vmatprep.subr.bf16.mxu0 0
      %3481 = vmatpush2.bf16.msra.mxu0 %v3287
      %3482 = vmatprep.mubr.bf16.mxu0 %v3380
      %3483 = vmatmul.mubr.bf16.gmra.mxu0 %v3379
      %v3484 = vpop.f32.mrf.mxu0
      %v3485 = vadd.f32 0.0, %v3484
      %v3486 = vpop.f32.mrf.mxu0
      %v3487 = vpop.f32.mrf.mxu0
      %v3488 = vadd.f32 0.0, %v3487
      %v3489 = vpop.f32.mrf.mxu0
      %3490 = vmatprep.mubr.bf16.mxu0 %v3383
      %3491 = vmatmul.mubr.bf16.gmra.mxu0 %v3382
      %v3492 = vpop.f32.mrf.mxu0
      %v3493 = vadd.f32 0.0, %v3492
      %v3494 = vpop.f32.mrf.mxu0
      %v3495 = vpop.f32.mrf.mxu0
      %v3496 = vadd.f32 0.0, %v3495
      %v3497 = vpop.f32.mrf.mxu0
      %3498 = vmatprep.mubr.bf16.mxu0 %v3386
      %3499 = vmatmul.mubr.bf16.gmra.mxu0 %v3385
      %v3500 = vpop.f32.mrf.mxu0
      %v3501 = vadd.f32 0.0, %v3500
      %v3502 = vpop.f32.mrf.mxu0
      %v3503 = vpop.f32.mrf.mxu0
      %v3504 = vadd.f32 0.0, %v3503
      %v3505 = vpop.f32.mrf.mxu0
      %3506 = vmatprep.mubr.bf16.mxu0 %v3389
      %3507 = vmatmul.mubr.bf16.gmra.mxu0 %v3388
      %v3508 = vpop.f32.mrf.mxu0
      %v3509 = vadd.f32 0.0, %v3508
      %v3510 = vpop.f32.mrf.mxu0
      %v3511 = vpop.f32.mrf.mxu0
      %v3512 = vadd.f32 0.0, %v3511
      %v3513 = vpop.f32.mrf.mxu0
      %3514 = vmatprep.mubr.bf16.mxu0 %v3392
      %3515 = vmatmul.mubr.bf16.gmra.mxu0 %v3391
      %v3516 = vpop.f32.mrf.mxu0
      %v3517 = vadd.f32 0.0, %v3516
      %v3518 = vpop.f32.mrf.mxu0
      %v3519 = vpop.f32.mrf.mxu0
      %v3520 = vadd.f32 0.0, %v3519
      %v3521 = vpop.f32.mrf.mxu0
      %3522 = vmatprep.mubr.bf16.mxu0 %v3395
      %3523 = vmatmul.mubr.bf16.gmra.mxu0 %v3394
      %v3524 = vpop.f32.mrf.mxu0
      %v3525 = vadd.f32 0.0, %v3524
      %v3526 = vpop.f32.mrf.mxu0
      %v3527 = vpop.f32.mrf.mxu0
      %v3528 = vadd.f32 0.0, %v3527
      %v3529 = vpop.f32.mrf.mxu0
      %3530 = vmatprep.mubr.bf16.mxu0 %v3398
      %3531 = vmatmul.mubr.bf16.gmra.mxu0 %v3397
      %v3532 = vpop.f32.mrf.mxu0
      %v3533 = vadd.f32 0.0, %v3532
      %v3534 = vpop.f32.mrf.mxu0
      %v3535 = vpop.f32.mrf.mxu0
      %v3536 = vadd.f32 0.0, %v3535
      %v3537 = vpop.f32.mrf.mxu0
      %3538 = vmatprep.mubr.bf16.mxu0 %v3401
      %3539 = vmatmul.mubr.bf16.gmra.mxu0 %v3400
      %v3540 = vpop.f32.mrf.mxu0
      %v3541 = vadd.f32 0.0, %v3540
      %v3542 = vpop.f32.mrf.mxu0
      %v3543 = vpop.f32.mrf.mxu0
      %v3544 = vadd.f32 0.0, %v3543
      %v3545 = vpop.f32.mrf.mxu0
      %3546 = vdwg.mxu0
      %3547 = vmatprep.subr.bf16.mxu0 0
      %3548 = vmatpush1.bf16.msra.mxu0 0
      %3549 = vmatprep.subr.bf16.mxu0 0
      %3550 = vmatpush1.bf16.msra.mxu0 0
      %3551 = vmatprep.subr.bf16.mxu0 0
      %3552 = vmatpush1.bf16.msra.mxu0 0
      %3553 = vmatprep.subr.bf16.mxu0 0
      %3554 = vmatpush1.bf16.msra.mxu0 0
      %3555 = vmatprep.subr.bf16.mxu0 0
      %3556 = vmatpush1.bf16.msra.mxu0 %v3448
      %3557 = vmatprep.subr.bf16.mxu0 0
      %3558 = vmatpush1.bf16.msra.mxu0 %v3297
      %3559 = vmatprep.subr.bf16.mxu0 0
      %3560 = vmatpush1.bf16.msra.mxu0 %v3296
      %3561 = vmatprep.subr.bf16.mxu0 0
      %3562 = vmatpush1.bf16.msra.mxu0 %v3295
      %3563 = vmatprep.subr.bf16.mxu0 0
      %3564 = vmatpush2.bf16.msra.mxu0 0
      %3565 = vmatprep.subr.bf16.mxu0 0
      %3566 = vmatpush2.bf16.msra.mxu0 0
      %3567 = vmatprep.subr.bf16.mxu0 0
      %3568 = vmatpush2.bf16.msra.mxu0 0
      %3569 = vmatprep.subr.bf16.mxu0 0
      %3570 = vmatpush2.bf16.msra.mxu0 0
      %3571 = vmatprep.subr.bf16.mxu0 0
      %3572 = vmatpush2.bf16.msra.mxu0 0
      %3573 = vmatprep.subr.bf16.mxu0 0
      %3574 = vmatpush2.bf16.msra.mxu0 0
      %3575 = vmatprep.subr.bf16.mxu0 0
      %3576 = vmatpush2.bf16.msra.mxu0 0
      %3577 = vmatprep.subr.bf16.mxu0 0
      %3578 = vmatpush2.bf16.msra.mxu0 0
      %3579 = vmatprep.mubr.bf16.mxu0 0
      %3580 = vmatmul.mubr.bf16.gmra.mxu0 %v3421
      %v3581 = vpop.f32.mrf.mxu0
      %v3582 = vadd.f32 %v3485, %v3581
      %v3583 = vpop.f32.mrf.mxu0
      %v3584 = vpop.f32.mrf.mxu0
      %v3585 = vadd.f32 %v3488, %v3584
      %v3586 = vpop.f32.mrf.mxu0
      %3587 = vmatprep.mubr.bf16.mxu0 0
      %3588 = vmatmul.mubr.bf16.gmra.mxu0 %v3424
      %v3589 = vpop.f32.mrf.mxu0
      %v3590 = vadd.f32 %v3493, %v3589
      %v3591 = vpop.f32.mrf.mxu0
      %v3592 = vpop.f32.mrf.mxu0
      %v3593 = vadd.f32 %v3496, %v3592
      %v3594 = vpop.f32.mrf.mxu0
      %3595 = vmatprep.mubr.bf16.mxu0 0
      %3596 = vmatmul.mubr.bf16.gmra.mxu0 %v3427
      %v3597 = vpop.f32.mrf.mxu0
      %v3598 = vadd.f32 %v3501, %v3597
      %v3599 = vpop.f32.mrf.mxu0
      %v3600 = vpop.f32.mrf.mxu0
      %v3601 = vadd.f32 %v3504, %v3600
      %v3602 = vpop.f32.mrf.mxu0
      %3603 = vmatprep.mubr.bf16.mxu0 0
      %3604 = vmatmul.mubr.bf16.gmra.mxu0 %v3430
      %v3605 = vpop.f32.mrf.mxu0
      %v3606 = vadd.f32 %v3509, %v3605
      %v3607 = vpop.f32.mrf.mxu0
      %v3608 = vpop.f32.mrf.mxu0
      %v3609 = vadd.f32 %v3512, %v3608
      %v3610 = vpop.f32.mrf.mxu0
      %3611 = vmatprep.mubr.bf16.mxu0 0
      %3612 = vmatmul.mubr.bf16.gmra.mxu0 %v3433
      %v3613 = vpop.f32.mrf.mxu0
      %v3614 = vadd.f32 %v3517, %v3613
      %v3615 = vpop.f32.mrf.mxu0
      %v3616 = vpop.f32.mrf.mxu0
      %v3617 = vadd.f32 %v3520, %v3616
      %v3618 = vpop.f32.mrf.mxu0
      %3619 = vmatprep.mubr.bf16.mxu0 0
      %3620 = vmatmul.mubr.bf16.gmra.mxu0 %v3436
      %v3621 = vpop.f32.mrf.mxu0
      %v3622 = vadd.f32 %v3525, %v3621
      %v3623 = vpop.f32.mrf.mxu0
      %v3624 = vpop.f32.mrf.mxu0
      %v3625 = vadd.f32 %v3528, %v3624
      %v3626 = vpop.f32.mrf.mxu0
      %3627 = vmatprep.mubr.bf16.mxu0 0
      %3628 = vmatmul.mubr.bf16.gmra.mxu0 %v3439
      %v3629 = vpop.f32.mrf.mxu0
      %v3630 = vadd.f32 %v3533, %v3629
      %v3631 = vpop.f32.mrf.mxu0
      %v3632 = vpop.f32.mrf.mxu0
      %v3633 = vadd.f32 %v3536, %v3632
      %v3634 = vpop.f32.mrf.mxu0
      %3635 = vmatprep.mubr.bf16.mxu0 0
      %3636 = vmatmul.mubr.bf16.gmra.mxu0 %v3442
      %v3637 = vpop.f32.mrf.mxu0
      %v3638 = vadd.f32 %v3541, %v3637
      %v3639 = vpop.f32.mrf.mxu0
      %v3640 = vpop.f32.mrf.mxu0
      %v3641 = vadd.f32 %v3544, %v3640
      %v3642 = vpop.f32.mrf.mxu0
      %3643 = vdwg.mxu0
      %v3657 = vrot.slane %v3582, 1
      %v3658 = vrot.slane %v3585, 1
      %v3659 = vsel %vm583, %v3657, %v3658
      %v3660 = vrot.slane %v3590, 1
      %v3661 = vsel %vm583, %v3658, %v3660
      %v3662 = vrot.slane %v3593, 1
      %v3663 = vsel %vm583, %v3660, %v3662
      %v3664 = vrot.slane %v3598, 1
      %v3665 = vsel %vm583, %v3662, %v3664
      %v3666 = vrot.slane %v3601, 1
      %v3667 = vsel %vm583, %v3664, %v3666
      %v3668 = vrot.slane %v3606, 1
      %v3669 = vsel %vm583, %v3666, %v3668
      %v3670 = vrot.slane %v3609, 1
      %v3671 = vsel %vm583, %v3668, %v3670
      %v3672 = vrot.slane %v3614, 1
      %v3673 = vsel %vm583, %v3670, %v3672
      %v3674 = vrot.slane %v3617, 1
      %v3675 = vsel %vm583, %v3672, %v3674
      %v3676 = vrot.slane %v3622, 1
      %v3677 = vsel %vm583, %v3674, %v3676
      %v3678 = vrot.slane %v3625, 1
      %v3679 = vsel %vm583, %v3676, %v3678
      %v3680 = vrot.slane %v3630, 1
      %v3681 = vsel %vm583, %v3678, %v3680
      %3682 = vrot.lane.b32.xlu0 %v3659, 16
      %v3683 = vpop.permute.xlu0 %3682
      %3684 = vrot.lane.b32.xlu0 %v3661, 16
      %v3685 = vpop.permute.xlu0 %3684
      %3686 = vrot.lane.b32.xlu0 %v3663, 16
      %v3687 = vpop.permute.xlu0 %3686
      %3688 = vrot.lane.b32.xlu0 %v3665, 16
      %v3689 = vpop.permute.xlu0 %3688
      %3690 = vrot.lane.b32.xlu0 %v3667, 16
      %v3691 = vpop.permute.xlu0 %3690
      %3692 = vrot.lane.b32.xlu0 %v3669, 16
      %v3693 = vpop.permute.xlu0 %3692
      %3694 = vrot.lane.b32.xlu0 %v3671, 16
      %v3695 = vpop.permute.xlu0 %3694
      %3696 = vrot.lane.b32.xlu0 %v3673, 16
      %v3697 = vpop.permute.xlu0 %3696
      %3698 = vrot.lane.b32.xlu0 %v3675, 16
      %v3699 = vpop.permute.xlu0 %3698
      %3700 = vrot.lane.b32.xlu0 %v3677, 16
      %v3701 = vpop.permute.xlu0 %3700
      %3702 = vrot.lane.b32.xlu0 %v3679, 16
      %v3703 = vpop.permute.xlu0 %3702
      %3704 = vrot.lane.b32.xlu0 %v3681, 16
      %v3705 = vpop.permute.xlu0 %3704
      %3706 = vrot.lane.b32.xlu0 %v3680, 16
      %v3707 = vpop.permute.xlu0 %3706
      %v3721 = vrot.slane %v3582, 2
      %v3722 = vrot.slane %v3585, 2
      %v3723 = vsel %vm788, %v3721, %v3722
      %v3724 = vrot.slane %v3590, 2
      %v3725 = vsel %vm788, %v3722, %v3724
      %v3726 = vrot.slane %v3593, 2
      %v3727 = vsel %vm788, %v3724, %v3726
      %v3728 = vrot.slane %v3598, 2
      %v3729 = vsel %vm788, %v3726, %v3728
      %v3730 = vrot.slane %v3601, 2
      %v3731 = vsel %vm788, %v3728, %v3730
      %v3732 = vrot.slane %v3606, 2
      %v3733 = vsel %vm788, %v3730, %v3732
      %v3734 = vrot.slane %v3609, 2
      %v3735 = vsel %vm788, %v3732, %v3734
      %v3736 = vrot.slane %v3614, 2
      %v3737 = vsel %vm788, %v3734, %v3736
      %v3738 = vrot.slane %v3617, 2
      %v3739 = vsel %vm788, %v3736, %v3738
      %v3740 = vrot.slane %v3622, 2
      %v3741 = vsel %vm788, %v3738, %v3740
      %v3742 = vrot.slane %v3625, 2
      %v3743 = vsel %vm788, %v3740, %v3742
      %v3744 = vrot.slane %v3630, 2
      %v3745 = vsel %vm788, %v3742, %v3744
      %3746 = vrot.lane.b32.xlu0 %v3723, 32
      %v3747 = vpop.permute.xlu0 %3746
      %3748 = vrot.lane.b32.xlu0 %v3725, 32
      %v3749 = vpop.permute.xlu0 %3748
      %3750 = vrot.lane.b32.xlu0 %v3727, 32
      %v3751 = vpop.permute.xlu0 %3750
      %3752 = vrot.lane.b32.xlu0 %v3729, 32
      %v3753 = vpop.permute.xlu0 %3752
      %3754 = vrot.lane.b32.xlu0 %v3731, 32
      %v3755 = vpop.permute.xlu0 %3754
      %3756 = vrot.lane.b32.xlu0 %v3733, 32
      %v3757 = vpop.permute.xlu0 %3756
      %3758 = vrot.lane.b32.xlu0 %v3735, 32
      %v3759 = vpop.permute.xlu0 %3758
      %3760 = vrot.lane.b32.xlu0 %v3737, 32
      %v3761 = vpop.permute.xlu0 %3760
      %3762 = vrot.lane.b32.xlu0 %v3739, 32
      %v3763 = vpop.permute.xlu0 %3762
      %3764 = vrot.lane.b32.xlu0 %v3741, 32
      %v3765 = vpop.permute.xlu0 %3764
      %3766 = vrot.lane.b32.xlu0 %v3743, 32
      %v3767 = vpop.permute.xlu0 %3766
      %3768 = vrot.lane.b32.xlu0 %v3745, 32
      %v3769 = vpop.permute.xlu0 %3768
      %3770 = vrot.lane.b32.xlu0 %v3744, 32
      %v3771 = vpop.permute.xlu0 %3770
      %v3786 = vrot.slane %v3633, 2
      %v3787 = vsel %vm788, %v3744, %v3786
      %3788 = vrot.lane.b32.xlu0 %v3725, 48
      %v3789 = vpop.permute.xlu0 %3788
      %3790 = vrot.lane.b32.xlu0 %v3727, 48
      %v3791 = vpop.permute.xlu0 %3790
      %3792 = vrot.lane.b32.xlu0 %v3729, 48
      %v3793 = vpop.permute.xlu0 %3792
      %3794 = vrot.lane.b32.xlu0 %v3731, 48
      %v3795 = vpop.permute.xlu0 %3794
      %3796 = vrot.lane.b32.xlu0 %v3733, 48
      %v3797 = vpop.permute.xlu0 %3796
      %3798 = vrot.lane.b32.xlu0 %v3735, 48
      %v3799 = vpop.permute.xlu0 %3798
      %3800 = vrot.lane.b32.xlu0 %v3737, 48
      %v3801 = vpop.permute.xlu0 %3800
      %3802 = vrot.lane.b32.xlu0 %v3739, 48
      %v3803 = vpop.permute.xlu0 %3802
      %3804 = vrot.lane.b32.xlu0 %v3741, 48
      %v3805 = vpop.permute.xlu0 %3804
      %3806 = vrot.lane.b32.xlu0 %v3743, 48
      %v3807 = vpop.permute.xlu0 %3806
      %3808 = vrot.lane.b32.xlu0 %v3745, 48
      %v3809 = vpop.permute.xlu0 %3808
      %3810 = vrot.lane.b32.xlu0 %v3787, 48
      %v3811 = vpop.permute.xlu0 %3810
      %3812 = vrot.lane.b32.xlu0 %v3786, 48
      %v3813 = vpop.permute.xlu0 %3812
      %v3827 = vrot.slane %v3585, 3
      %v3828 = vrot.slane %v3590, 3
      %v3829 = vsel %vm1122, %v3827, %v3828
      %v3830 = vrot.slane %v3593, 3
      %v3831 = vsel %vm1122, %v3828, %v3830
      %v3832 = vrot.slane %v3598, 3
      %v3833 = vsel %vm1122, %v3830, %v3832
      %v3834 = vrot.slane %v3601, 3
      %v3835 = vsel %vm1122, %v3832, %v3834
      %v3836 = vrot.slane %v3606, 3
      %v3837 = vsel %vm1122, %v3834, %v3836
      %v3838 = vrot.slane %v3609, 3
      %v3839 = vsel %vm1122, %v3836, %v3838
      %v3840 = vrot.slane %v3614, 3
      %v3841 = vsel %vm1122, %v3838, %v3840
      %v3842 = vrot.slane %v3617, 3
      %v3843 = vsel %vm1122, %v3840, %v3842
      %v3844 = vrot.slane %v3622, 3
      %v3845 = vsel %vm1122, %v3842, %v3844
      %v3846 = vrot.slane %v3625, 3
      %v3847 = vsel %vm1122, %v3844, %v3846
      %v3848 = vrot.slane %v3630, 3
      %v3849 = vsel %vm1122, %v3846, %v3848
      %v3850 = vrot.slane %v3633, 3
      %v3851 = vsel %vm1122, %v3848, %v3850
      %3852 = vrot.lane.b32.xlu0 %v3829, 64
      %v3853 = vpop.permute.xlu0 %3852
      %3854 = vrot.lane.b32.xlu0 %v3831, 64
      %v3855 = vpop.permute.xlu0 %3854
      %3856 = vrot.lane.b32.xlu0 %v3833, 64
      %v3857 = vpop.permute.xlu0 %3856
      %3858 = vrot.lane.b32.xlu0 %v3835, 64
      %v3859 = vpop.permute.xlu0 %3858
      %3860 = vrot.lane.b32.xlu0 %v3837, 64
      %v3861 = vpop.permute.xlu0 %3860
      %3862 = vrot.lane.b32.xlu0 %v3839, 64
      %v3863 = vpop.permute.xlu0 %3862
      %3864 = vrot.lane.b32.xlu0 %v3841, 64
      %v3865 = vpop.permute.xlu0 %3864
      %3866 = vrot.lane.b32.xlu0 %v3843, 64
      %v3867 = vpop.permute.xlu0 %3866
      %3868 = vrot.lane.b32.xlu0 %v3845, 64
      %v3869 = vpop.permute.xlu0 %3868
      %3870 = vrot.lane.b32.xlu0 %v3847, 64
      %v3871 = vpop.permute.xlu0 %3870
      %3872 = vrot.lane.b32.xlu0 %v3849, 64
      %v3873 = vpop.permute.xlu0 %3872
      %3874 = vrot.lane.b32.xlu0 %v3851, 64
      %v3875 = vpop.permute.xlu0 %3874
      %3876 = vrot.lane.b32.xlu0 %v3850, 64
      %v3877 = vpop.permute.xlu0 %3876
      %v3891 = vrot.slane %v3585, 4
      %v3892 = vrot.slane %v3590, 4
      %v3893 = vsel %vm1327, %v3891, %v3892
      %v3894 = vrot.slane %v3593, 4
      %v3895 = vsel %vm1327, %v3892, %v3894
      %v3896 = vrot.slane %v3598, 4
      %v3897 = vsel %vm1327, %v3894, %v3896
      %v3898 = vrot.slane %v3601, 4
      %v3899 = vsel %vm1327, %v3896, %v3898
      %v3900 = vrot.slane %v3606, 4
      %v3901 = vsel %vm1327, %v3898, %v3900
      %v3902 = vrot.slane %v3609, 4
      %v3903 = vsel %vm1327, %v3900, %v3902
      %v3904 = vrot.slane %v3614, 4
      %v3905 = vsel %vm1327, %v3902, %v3904
      %v3906 = vrot.slane %v3617, 4
      %v3907 = vsel %vm1327, %v3904, %v3906
      %v3908 = vrot.slane %v3622, 4
      %v3909 = vsel %vm1327, %v3906, %v3908
      %v3910 = vrot.slane %v3625, 4
      %v3911 = vsel %vm1327, %v3908, %v3910
      %v3912 = vrot.slane %v3630, 4
      %v3913 = vsel %vm1327, %v3910, %v3912
      %v3914 = vrot.slane %v3633, 4
      %v3915 = vsel %vm1327, %v3912, %v3914
      %3916 = vrot.lane.b32.xlu0 %v3893, 80
      %v3917 = vpop.permute.xlu0 %3916
      %3918 = vrot.lane.b32.xlu0 %v3895, 80
      %v3919 = vpop.permute.xlu0 %3918
      %3920 = vrot.lane.b32.xlu0 %v3897, 80
      %v3921 = vpop.permute.xlu0 %3920
      %3922 = vrot.lane.b32.xlu0 %v3899, 80
      %v3923 = vpop.permute.xlu0 %3922
      %3924 = vrot.lane.b32.xlu0 %v3901, 80
      %v3925 = vpop.permute.xlu0 %3924
      %3926 = vrot.lane.b32.xlu0 %v3903, 80
      %v3927 = vpop.permute.xlu0 %3926
      %3928 = vrot.lane.b32.xlu0 %v3905, 80
      %v3929 = vpop.permute.xlu0 %3928
      %3930 = vrot.lane.b32.xlu0 %v3907, 80
      %v3931 = vpop.permute.xlu0 %3930
      %3932 = vrot.lane.b32.xlu0 %v3909, 80
      %v3933 = vpop.permute.xlu0 %3932
      %3934 = vrot.lane.b32.xlu0 %v3911, 80
      %v3935 = vpop.permute.xlu0 %3934
      %3936 = vrot.lane.b32.xlu0 %v3913, 80
      %v3937 = vpop.permute.xlu0 %3936
      %3938 = vrot.lane.b32.xlu0 %v3915, 80
      %v3939 = vpop.permute.xlu0 %3938
      %3940 = vrot.lane.b32.xlu0 %v3914, 80
      %v3941 = vpop.permute.xlu0 %3940
      %v3956 = vrot.slane %v3638, 4
      %v3957 = vsel %vm1327, %v3914, %v3956
      %3958 = vrot.lane.b32.xlu0 %v3895, 96
      %v3959 = vpop.permute.xlu0 %3958
      %3960 = vrot.lane.b32.xlu0 %v3897, 96
      %v3961 = vpop.permute.xlu0 %3960
      %3962 = vrot.lane.b32.xlu0 %v3899, 96
      %v3963 = vpop.permute.xlu0 %3962
      %3964 = vrot.lane.b32.xlu0 %v3901, 96
      %v3965 = vpop.permute.xlu0 %3964
      %3966 = vrot.lane.b32.xlu0 %v3903, 96
      %v3967 = vpop.permute.xlu0 %3966
      %3968 = vrot.lane.b32.xlu0 %v3905, 96
      %v3969 = vpop.permute.xlu0 %3968
      %3970 = vrot.lane.b32.xlu0 %v3907, 96
      %v3971 = vpop.permute.xlu0 %3970
      %3972 = vrot.lane.b32.xlu0 %v3909, 96
      %v3973 = vpop.permute.xlu0 %3972
      %3974 = vrot.lane.b32.xlu0 %v3911, 96
      %v3975 = vpop.permute.xlu0 %3974
      %3976 = vrot.lane.b32.xlu0 %v3913, 96
      %v3977 = vpop.permute.xlu0 %3976
      %3978 = vrot.lane.b32.xlu0 %v3915, 96
      %v3979 = vpop.permute.xlu0 %3978
      %3980 = vrot.lane.b32.xlu0 %v3957, 96
      %v3981 = vpop.permute.xlu0 %3980
      %3982 = vrot.lane.b32.xlu0 %v3956, 96
      %v3983 = vpop.permute.xlu0 %3982
      %v3998 = vrot.slane %v3590, 5
      %v3999 = vrot.slane %v3593, 5
      %v4000 = vsel %vm1662, %v3998, %v3999
      %v4001 = vrot.slane %v3598, 5
      %v4002 = vsel %vm1662, %v3999, %v4001
      %v4003 = vrot.slane %v3601, 5
      %v4004 = vsel %vm1662, %v4001, %v4003
      %v4005 = vrot.slane %v3606, 5
      %v4006 = vsel %vm1662, %v4003, %v4005
      %v4007 = vrot.slane %v3609, 5
      %v4008 = vsel %vm1662, %v4005, %v4007
      %v4009 = vrot.slane %v3614, 5
      %v4010 = vsel %vm1662, %v4007, %v4009
      %v4011 = vrot.slane %v3617, 5
      %v4012 = vsel %vm1662, %v4009, %v4011
      %v4013 = vrot.slane %v3622, 5
      %v4014 = vsel %vm1662, %v4011, %v4013
      %v4015 = vrot.slane %v3625, 5
      %v4016 = vsel %vm1662, %v4013, %v4015
      %v4017 = vrot.slane %v3630, 5
      %v4018 = vsel %vm1662, %v4015, %v4017
      %v4019 = vrot.slane %v3633, 5
      %v4020 = vsel %vm1662, %v4017, %v4019
      %v4021 = vrot.slane %v3638, 5
      %v4022 = vsel %vm1662, %v4019, %v4021
      %v4023 = vrot.slane %v3641, 5
      %v4024 = vsel %vm1662, %v4021, %v4023
      %4025 = vrot.lane.b32.xlu0 %v4000, 112
      %v4026 = vpop.permute.xlu0 %4025
      %4027 = vrot.lane.b32.xlu0 %v4002, 112
      %v4028 = vpop.permute.xlu0 %4027
      %4029 = vrot.lane.b32.xlu0 %v4004, 112
      %v4030 = vpop.permute.xlu0 %4029
      %4031 = vrot.lane.b32.xlu0 %v4006, 112
      %v4032 = vpop.permute.xlu0 %4031
      %4033 = vrot.lane.b32.xlu0 %v4008, 112
      %v4034 = vpop.permute.xlu0 %4033
      %4035 = vrot.lane.b32.xlu0 %v4010, 112
      %v4036 = vpop.permute.xlu0 %4035
      %4037 = vrot.lane.b32.xlu0 %v4012, 112
      %v4038 = vpop.permute.xlu0 %4037
      %4039 = vrot.lane.b32.xlu0 %v4014, 112
      %v4040 = vpop.permute.xlu0 %4039
      %4041 = vrot.lane.b32.xlu0 %v4016, 112
      %v4042 = vpop.permute.xlu0 %4041
      %4043 = vrot.lane.b32.xlu0 %v4018, 112
      %v4044 = vpop.permute.xlu0 %4043
      %4045 = vrot.lane.b32.xlu0 %v4020, 112
      %v4046 = vpop.permute.xlu0 %4045
      %4047 = vrot.lane.b32.xlu0 %v4022, 112
      %v4048 = vpop.permute.xlu0 %4047
      %4049 = vrot.lane.b32.xlu0 %v4024, 112
      %v4050 = vpop.permute.xlu0 %4049
      %v4064 = vrot.slane %v3590, 6
      %v4065 = vrot.slane %v3593, 6
      %v4066 = vsel %vm1869, %v4064, %v4065
      %v4067 = vrot.slane %v3598, 6
      %v4068 = vsel %vm1869, %v4065, %v4067
      %v4069 = vrot.slane %v3601, 6
      %v4070 = vsel %vm1869, %v4067, %v4069
      %v4071 = vrot.slane %v3606, 6
      %v4072 = vsel %vm1869, %v4069, %v4071
      %v4073 = vrot.slane %v3609, 6
      %v4074 = vsel %vm1869, %v4071, %v4073
      %v4075 = vrot.slane %v3614, 6
      %v4076 = vsel %vm1869, %v4073, %v4075
      %v4077 = vrot.slane %v3617, 6
      %v4078 = vsel %vm1869, %v4075, %v4077
      %v4079 = vrot.slane %v3622, 6
      %v4080 = vsel %vm1869, %v4077, %v4079
      %v4081 = vrot.slane %v3625, 6
      %v4082 = vsel %vm1869, %v4079, %v4081
      %v4083 = vrot.slane %v3630, 6
      %v4084 = vsel %vm1869, %v4081, %v4083
      %v4085 = vrot.slane %v3633, 6
      %v4086 = vsel %vm1869, %v4083, %v4085
      %v4087 = vrot.slane %v3638, 6
      %v4088 = vsel %vm1869, %v4085, %v4087
      %v4089 = vrot.slane %v3641, 6
      %v4090 = vsel %vm1869, %v4087, %v4089
      %vm4104 = vcmask 130048
      %v4105 = vsel %vm4104, %v3582, %v3683
      %v4106 = vsel %vm4104, %v3585, %v3685
      %v4107 = vsel %vm4104, %v3590, %v3687
      %v4108 = vsel %vm4104, %v3593, %v3689
      %v4109 = vsel %vm4104, %v3598, %v3691
      %v4110 = vsel %vm4104, %v3601, %v3693
      %v4111 = vsel %vm4104, %v3606, %v3695
      %v4112 = vsel %vm4104, %v3609, %v3697
      %v4113 = vsel %vm4104, %v3614, %v3699
      %v4114 = vsel %vm4104, %v3617, %v3701
      %v4115 = vsel %vm4104, %v3622, %v3703
      %v4116 = vsel %vm4104, %v3625, %v3705
      %v4117 = vsel %vm4104, %v3630, %v3707
      %vm4118 = vcmask 261120
      %v4119 = vsel %vm4118, %v4105, %v3747
      %v4120 = vsel %vm4118, %v4106, %v3749
      %v4121 = vsel %vm4118, %v4107, %v3751
      %v4122 = vsel %vm4118, %v4108, %v3753
      %v4123 = vsel %vm4118, %v4109, %v3755
      %v4124 = vsel %vm4118, %v4110, %v3757
      %v4125 = vsel %vm4118, %v4111, %v3759
      %v4126 = vsel %vm4118, %v4112, %v3761
      %v4127 = vsel %vm4118, %v4113, %v3763
      %v4128 = vsel %vm4118, %v4114, %v3765
      %v4129 = vsel %vm4118, %v4115, %v3767
      %v4130 = vsel %vm4118, %v4116, %v3769
      %v4131 = vsel %vm4118, %v4117, %v3771
      %vm4132 = vcmask 392192
      %v4133 = vsel %vm4132, %v4119, %v3789
      %v4134 = vsel %vm4132, %v4120, %v3791
      %v4135 = vsel %vm4132, %v4121, %v3793
      %v4136 = vsel %vm4132, %v4122, %v3795
      %v4137 = vsel %vm4132, %v4123, %v3797
      %v4138 = vsel %vm4132, %v4124, %v3799
      %v4139 = vsel %vm4132, %v4125, %v3801
      %v4140 = vsel %vm4132, %v4126, %v3803
      %v4141 = vsel %vm4132, %v4127, %v3805
      %v4142 = vsel %vm4132, %v4128, %v3807
      %v4143 = vsel %vm4132, %v4129, %v3809
      %v4144 = vsel %vm4132, %v4130, %v3811
      %v4145 = vsel %vm4132, %v4131, %v3813
      %vm4146 = vcmask 523264
      %v4147 = vsel %vm4146, %v4133, %v3853
      %v4148 = vsel %vm4146, %v4134, %v3855
      %v4149 = vsel %vm4146, %v4135, %v3857
      %v4150 = vsel %vm4146, %v4136, %v3859
      %v4151 = vsel %vm4146, %v4137, %v3861
      %v4152 = vsel %vm4146, %v4138, %v3863
      %v4153 = vsel %vm4146, %v4139, %v3865
      %v4154 = vsel %vm4146, %v4140, %v3867
      %v4155 = vsel %vm4146, %v4141, %v3869
      %v4156 = vsel %vm4146, %v4142, %v3871
      %v4157 = vsel %vm4146, %v4143, %v3873
      %v4158 = vsel %vm4146, %v4144, %v3875
      %v4159 = vsel %vm4146, %v4145, %v3877
      %vm4160 = vcmask 654336
      %v4161 = vsel %vm4160, %v4147, %v3917
      %v4162 = vsel %vm4160, %v4148, %v3919
      %v4163 = vsel %vm4160, %v4149, %v3921
      %v4164 = vsel %vm4160, %v4150, %v3923
      %v4165 = vsel %vm4160, %v4151, %v3925
      %v4166 = vsel %vm4160, %v4152, %v3927
      %v4167 = vsel %vm4160, %v4153, %v3929
      %v4168 = vsel %vm4160, %v4154, %v3931
      %v4169 = vsel %vm4160, %v4155, %v3933
      %v4170 = vsel %vm4160, %v4156, %v3935
      %v4171 = vsel %vm4160, %v4157, %v3937
      %v4172 = vsel %vm4160, %v4158, %v3939
      %v4173 = vsel %vm4160, %v4159, %v3941
      %vm4174 = vcmask 785408
      %v4175 = vsel %vm4174, %v4161, %v3959
      %v4176 = vsel %vm4174, %v4162, %v3961
      %v4177 = vsel %vm4174, %v4163, %v3963
      %v4178 = vsel %vm4174, %v4164, %v3965
      %v4179 = vsel %vm4174, %v4165, %v3967
      %v4180 = vsel %vm4174, %v4166, %v3969
      %v4181 = vsel %vm4174, %v4167, %v3971
      %v4182 = vsel %vm4174, %v4168, %v3973
      %v4183 = vsel %vm4174, %v4169, %v3975
      %v4184 = vsel %vm4174, %v4170, %v3977
      %v4185 = vsel %vm4174, %v4171, %v3979
      %v4186 = vsel %vm4174, %v4172, %v3981
      %v4187 = vsel %vm4174, %v4173, %v3983
      %vm4188 = vcmask 916480
      %v4189 = vsel %vm4188, %v4175, %v4026
      %v4190 = vsel %vm4188, %v4176, %v4028
      %v4191 = vsel %vm4188, %v4177, %v4030
      %v4192 = vsel %vm4188, %v4178, %v4032
      %v4193 = vsel %vm4188, %v4179, %v4034
      %v4194 = vsel %vm4188, %v4180, %v4036
      %v4195 = vsel %vm4188, %v4181, %v4038
      %v4196 = vsel %vm4188, %v4182, %v4040
      %v4197 = vsel %vm4188, %v4183, %v4042
      %v4198 = vsel %vm4188, %v4184, %v4044
      %v4199 = vsel %vm4188, %v4185, %v4046
      %v4200 = vsel %vm4188, %v4186, %v4048
      %v4201 = vsel %vm4188, %v4187, %v4050
      %v4202 = vpack.c.bf16 %v4190, %v4189
      %v4203 = vpack.c.bf16 %v4068, %v4066
      %v4204 = vpack.c.bf16 %v4192, %v4191
      %v4205 = vpack.c.bf16 %v4072, %v4070
      %v4206 = vpack.c.bf16 %v4194, %v4193
      %v4207 = vpack.c.bf16 %v4076, %v4074
      %v4208 = vpack.c.bf16 %v4196, %v4195
      %v4209 = vpack.c.bf16 %v4080, %v4078
      %v4210 = vpack.c.bf16 %v4198, %v4197
      %v4211 = vpack.c.bf16 %v4084, %v4082
      %v4212 = vpack.c.bf16 %v4200, %v4199
      %v4213 = vpack.c.bf16 %v4088, %v4086
      %v4214 = vpack.c.bf16 %v4201, %v4201
      %v4215 = vpack.c.bf16 %v4090, %v4090
      %v4216 = vld [vmem:[%s3] sm:$0xf]
      %v4217 = vld [vmem:[%s3 + $0x4] sm:$0xf]
      %v4218 = vld [vmem:[%s3 + $0x8] sm:$0xf]
      %v4219 = vld [vmem:[%s3 + $0xc] sm:$0xf]
      %v4220 = vld [vmem:[%s3 + $0x10] sm:$0xf]
      %v4221 = vld [vmem:[%s3 + $0x14] sm:$0xf]
      %v4222 = vld [vmem:[%s3 + $0x18] sm:$0xf]
      %v4223 = vld [vmem:[%s3 + $0x1c] sm:$0xf]
      %v4224 = vld [vmem:[%s3 + $0x20] sm:$0xf]
      %v4225 = vld [vmem:[%s3 + $0x24] sm:$0xf]
      %v4226 = vld [vmem:[%s3 + $0x28] sm:$0xf]
      %v4227 = vld [vmem:[%s3 + $0x2c] sm:$0xf]
      %v4228 = vld [vmem:[%s3 + $0x30] sm:$0xf]
      %v4229 = vld [vmem:[%s3 + $0x34] sm:$0xf]
      %v4230 = vld [vmem:[%s3 + $0x38] sm:$0xf]
      %v4231 = vld [vmem:[%s3 + $0x3c] sm:$0xf]
      %v4232 = vld [vmem:[%s3 + $0x40] sm:$0xf]
      %v4233 = vld [vmem:[%s3 + $0x44] sm:$0xf]
      %v4234 = vld [vmem:[%s4] sm:$0x1]
      %v4236 = vlaneseq
      %v4237 = vshrl.u32 %v4236, 7
      %v4238 = vsub.s32 0, %v4237
      %v4239 = vrot.slane %v4234, %v4238
      %v4259 = vunpack.c.l.b16 %v4216
      %v4260 = vunpack.c.l.b16 %v4217
      %v4261 = vunpack.c.l.b16 %v4218
      %v4262 = vunpack.c.l.b16 %v4219
      %v4263 = vunpack.c.l.b16 %v4220
      %v4264 = vunpack.c.l.b16 %v4221
      %v4265 = vunpack.c.l.b16 %v4222
      %v4266 = vunpack.c.l.b16 %v4223
      %v4267 = vunpack.c.l.b16 %v4224
      %v4268 = vunpack.c.l.b16 %v4225
      %v4269 = vunpack.c.l.b16 %v4226
      %v4270 = vunpack.c.l.b16 %v4227
      %v4271 = vunpack.c.l.b16 %v4228
      %v4272 = vunpack.c.l.b16 %v4229
      %v4273 = vunpack.c.l.b16 %v4230
      %v4274 = vunpack.c.l.b16 %v4231
      %v4275 = vunpack.c.l.b16 %v4232
      %v4276 = vunpack.c.l.b16 %v4233
      %v4277 = vpack.c.b16 %v4260, %v4259
      %v4278 = vpack.c.b16 %v4262, %v4261
      %v4279 = vpack.c.b16 %v4264, %v4263
      %v4280 = vpack.c.b16 %v4266, %v4265
      %v4281 = vpack.c.b16 %v4268, %v4267
      %v4282 = vpack.c.b16 %v4270, %v4269
      %v4283 = vpack.c.b16 %v4272, %v4271
      %v4284 = vpack.c.b16 %v4274, %v4273
      %v4285 = vpack.c.b16 %v4276, %v4275
      %v4296 = vsel %vm4104, %v4203, 0
      %v4299 = vsel %vm4104, %v4205, 0
      %v4302 = vsel %vm4104, %v4207, 0
      %v4305 = vsel %vm4104, %v4209, 0
      %v4308 = vsel %vm4104, %v4211, 0
      %v4311 = vsel %vm4104, %v4213, 0
      %v4314 = vsel %vm4104, %v4215, 0
      %4316 = vmatprep.subr.bf16.mxu0 0
      %4317 = vmatpush1.bf16.msra.mxu0 %v4284
      %4318 = vmatprep.subr.bf16.mxu0 0
      %4319 = vmatpush1.bf16.msra.mxu0 %v4283
      %4320 = vmatprep.subr.bf16.mxu0 0
      %4321 = vmatpush1.bf16.msra.mxu0 %v4282
      %4322 = vmatprep.subr.bf16.mxu0 0
      %4323 = vmatpush1.bf16.msra.mxu0 %v4281
      %4324 = vmatprep.subr.bf16.mxu0 0
      %4325 = vmatpush1.bf16.msra.mxu0 %v4280
      %4326 = vmatprep.subr.bf16.mxu0 0
      %4327 = vmatpush1.bf16.msra.mxu0 %v4279
      %4328 = vmatprep.subr.bf16.mxu0 0
      %4329 = vmatpush1.bf16.msra.mxu0 %v4278
      %4330 = vmatprep.subr.bf16.mxu0 0
      %4331 = vmatpush1.bf16.msra.mxu0 %v4277
      %4332 = vmatprep.subr.bf16.mxu0 0
      %4333 = vmatpush2.bf16.msra.mxu0 0
      %4334 = vmatprep.subr.bf16.mxu0 0
      %4335 = vmatpush2.bf16.msra.mxu0 0
      %4336 = vmatprep.subr.bf16.mxu0 0
      %4337 = vmatpush2.bf16.msra.mxu0 0
      %4338 = vmatprep.subr.bf16.mxu0 0
      %4339 = vmatpush2.bf16.msra.mxu0 0
      %4340 = vmatprep.subr.bf16.mxu0 0
      %4341 = vmatpush2.bf16.msra.mxu0 0
      %4342 = vmatprep.subr.bf16.mxu0 0
      %4343 = vmatpush2.bf16.msra.mxu0 0
      %4344 = vmatprep.subr.bf16.mxu0 0
      %4345 = vmatpush2.bf16.msra.mxu0 0
      %4346 = vmatprep.subr.bf16.mxu0 0
      %4347 = vmatpush2.bf16.msra.mxu0 %v4285
      %4348 = vmatprep.mubr.bf16.mxu0 %v4296
      %4349 = vmatmul.mubr.bf16.gmra.mxu0 %v4202
      %v4350 = vpop.f32.mrf.mxu0
      %v4351 = vadd.f32 %v4239, %v4350
      %v4352 = vpop.f32.mrf.mxu0
      %v4353 = vpop.f32.mrf.mxu0
      %v4354 = vadd.f32 %v4239, %v4353
      %v4355 = vpop.f32.mrf.mxu0
      %4356 = vmatprep.mubr.bf16.mxu0 %v4299
      %4357 = vmatmul.mubr.bf16.gmra.mxu0 %v4204
      %v4358 = vpop.f32.mrf.mxu0
      %v4359 = vadd.f32 %v4239, %v4358
      %v4360 = vpop.f32.mrf.mxu0
      %v4361 = vpop.f32.mrf.mxu0
      %v4362 = vadd.f32 %v4239, %v4361
      %v4363 = vpop.f32.mrf.mxu0
      %4364 = vmatprep.mubr.bf16.mxu0 %v4302
      %4365 = vmatmul.mubr.bf16.gmra.mxu0 %v4206
      %v4366 = vpop.f32.mrf.mxu0
      %v4367 = vadd.f32 %v4239, %v4366
      %v4368 = vpop.f32.mrf.mxu0
      %v4369 = vpop.f32.mrf.mxu0
      %v4370 = vadd.f32 %v4239, %v4369
      %v4371 = vpop.f32.mrf.mxu0
      %4372 = vmatprep.mubr.bf16.mxu0 %v4305
      %4373 = vmatmul.mubr.bf16.gmra.mxu0 %v4208
      %v4374 = vpop.f32.mrf.mxu0
      %v4375 = vadd.f32 %v4239, %v4374
      %v4376 = vpop.f32.mrf.mxu0
      %v4377 = vpop.f32.mrf.mxu0
      %v4378 = vadd.f32 %v4239, %v4377
      %v4379 = vpop.f32.mrf.mxu0
      %4380 = vmatprep.mubr.bf16.mxu0 %v4308
      %4381 = vmatmul.mubr.bf16.gmra.mxu0 %v4210
      %v4382 = vpop.f32.mrf.mxu0
      %v4383 = vadd.f32 %v4239, %v4382
      %v4384 = vpop.f32.mrf.mxu0
      %v4385 = vpop.f32.mrf.mxu0
      %v4386 = vadd.f32 %v4239, %v4385
      %v4387 = vpop.f32.mrf.mxu0
      %4388 = vmatprep.mubr.bf16.mxu0 %v4311
      %4389 = vmatmul.mubr.bf16.gmra.mxu0 %v4212
      %v4390 = vpop.f32.mrf.mxu0
      %v4391 = vadd.f32 %v4239, %v4390
      %v4392 = vpop.f32.mrf.mxu0
      %v4393 = vpop.f32.mrf.mxu0
      %v4394 = vadd.f32 %v4239, %v4393
      %v4395 = vpop.f32.mrf.mxu0
      %4396 = vmatprep.mubr.bf16.mxu0 %v4314
      %4397 = vmatmul.mubr.bf16.gmra.mxu0 %v4214
      %v4398 = vpop.f32.mrf.mxu0
      %v4399 = vadd.f32 %v4239, %v4398
      %v4400 = vpop.f32.mrf.mxu0
      %v4401 = vpop.f32.mrf.mxu0
      %v4402 = vpop.f32.mrf.mxu0
      %4403 = vdwg.mxu0
      %vm4404 = vcmp.ge.f32.partialorder %v4351, 0.0
      %vm4405 = vcmp.ge.f32.partialorder %v4354, 0.0
      %vm4406 = vcmp.ge.f32.partialorder %v4359, 0.0
      %vm4407 = vcmp.ge.f32.partialorder %v4362, 0.0
      %vm4408 = vcmp.ge.f32.partialorder %v4367, 0.0
      %vm4409 = vcmp.ge.f32.partialorder %v4370, 0.0
      %vm4410 = vcmp.ge.f32.partialorder %v4375, 0.0
      %vm4411 = vcmp.ge.f32.partialorder %v4378, 0.0
      %vm4412 = vcmp.ge.f32.partialorder %v4383, 0.0
      %vm4413 = vcmp.ge.f32.partialorder %v4386, 0.0
      %vm4414 = vcmp.ge.f32.partialorder %v4391, 0.0
      %vm4415 = vcmp.ge.f32.partialorder %v4394, 0.0
      %vm4416 = vcmp.ge.f32.partialorder %v4399, 0.0
      %v4417 = vmul.f32 %v4351, 0.01
      %v4418 = vmul.f32 %v4354, 0.01
      %v4419 = vmul.f32 %v4359, 0.01
      %v4420 = vmul.f32 %v4362, 0.01
      %v4421 = vmul.f32 %v4367, 0.01
      %v4422 = vmul.f32 %v4370, 0.01
      %v4423 = vmul.f32 %v4375, 0.01
      %v4424 = vmul.f32 %v4378, 0.01
      %v4425 = vmul.f32 %v4383, 0.01
      %v4426 = vmul.f32 %v4386, 0.01
      %v4427 = vmul.f32 %v4391, 0.01
      %v4428 = vmul.f32 %v4394, 0.01
      %v4429 = vmul.f32 %v4399, 0.01
      %v4430 = vsel %vm4404, %v4351, %v4417
      %v4431 = vsel %vm4405, %v4354, %v4418
      %v4432 = vsel %vm4406, %v4359, %v4419
      %v4433 = vsel %vm4407, %v4362, %v4420
      %v4434 = vsel %vm4408, %v4367, %v4421
      %v4435 = vsel %vm4409, %v4370, %v4422
      %v4436 = vsel %vm4410, %v4375, %v4423
      %v4437 = vsel %vm4411, %v4378, %v4424
      %v4438 = vsel %vm4412, %v4383, %v4425
      %v4439 = vsel %vm4413, %v4386, %v4426
      %v4440 = vsel %vm4414, %v4391, %v4427
      %v4441 = vsel %vm4415, %v4394, %v4428
      %v4442 = vsel %vm4416, %v4399, %v4429
      %v4455 = vrot.slane %v4430, 1
      %v4456 = vrot.slane %v4431, 1
      %v4457 = vsel %vm583, %v4455, %v4456
      %v4458 = vrot.slane %v4432, 1
      %v4459 = vsel %vm583, %v4456, %v4458
      %v4460 = vrot.slane %v4433, 1
      %v4461 = vsel %vm583, %v4458, %v4460
      %v4462 = vrot.slane %v4434, 1
      %v4463 = vsel %vm583, %v4460, %v4462
      %v4464 = vrot.slane %v4435, 1
      %v4465 = vsel %vm583, %v4462, %v4464
      %v4466 = vrot.slane %v4436, 1
      %v4467 = vsel %vm583, %v4464, %v4466
      %v4468 = vrot.slane %v4437, 1
      %v4469 = vsel %vm583, %v4466, %v4468
      %v4470 = vrot.slane %v4438, 1
      %v4471 = vsel %vm583, %v4468, %v4470
      %v4472 = vrot.slane %v4439, 1
      %v4473 = vsel %vm583, %v4470, %v4472
      %v4474 = vrot.slane %v4440, 1
      %v4475 = vsel %vm583, %v4472, %v4474
      %v4476 = vrot.slane %v4441, 1
      %v4477 = vsel %vm583, %v4474, %v4476
      %v4490 = vmax.f32 %v4430, %v4457
      %v4491 = vmax.f32 %v4431, %v4459
      %v4492 = vmax.f32 %v4432, %v4461
      %v4493 = vmax.f32 %v4433, %v4463
      %v4494 = vmax.f32 %v4434, %v4465
      %v4495 = vmax.f32 %v4435, %v4467
      %v4496 = vmax.f32 %v4436, %v4469
      %v4497 = vmax.f32 %v4437, %v4471
      %v4498 = vmax.f32 %v4438, %v4473
      %v4499 = vmax.f32 %v4439, %v4475
      %v4500 = vmax.f32 %v4440, %v4477
      %v4501 = vmax.f32 %v4441, %v4476
      %v4503 = vrot.slane %v4442, 1
      %v4504 = vsel %vm583, %v4476, %v4503
      %v4507 = vmax.f32 %v4441, %v4504
      %v4508 = vmax.f32 %v4442, %v4503
      %v4521 = vrot.slane %v4491, 2
      %v4522 = vrot.slane %v4492, 2
      %v4523 = vsel %vm788, %v4521, %v4522
      %v4524 = vrot.slane %v4493, 2
      %v4525 = vsel %vm788, %v4522, %v4524
      %v4526 = vrot.slane %v4494, 2
      %v4527 = vsel %vm788, %v4524, %v4526
      %v4528 = vrot.slane %v4495, 2
      %v4529 = vsel %vm788, %v4526, %v4528
      %v4530 = vrot.slane %v4496, 2
      %v4531 = vsel %vm788, %v4528, %v4530
      %v4532 = vrot.slane %v4497, 2
      %v4533 = vsel %vm788, %v4530, %v4532
      %v4534 = vrot.slane %v4498, 2
      %v4535 = vsel %vm788, %v4532, %v4534
      %v4536 = vrot.slane %v4499, 2
      %v4537 = vsel %vm788, %v4534, %v4536
      %v4538 = vrot.slane %v4500, 2
      %v4539 = vsel %vm788, %v4536, %v4538
      %v4540 = vrot.slane %v4507, 2
      %v4541 = vsel %vm788, %v4538, %v4540
      %v4542 = vrot.slane %v4508, 2
      %v4543 = vsel %vm788, %v4540, %v4542
      %v4556 = vmax.f32 %v4490, %v4523
      %v4557 = vmax.f32 %v4491, %v4525
      %v4558 = vmax.f32 %v4492, %v4527
      %v4559 = vmax.f32 %v4493, %v4529
      %v4560 = vmax.f32 %v4494, %v4531
      %v4561 = vmax.f32 %v4495, %v4533
      %v4562 = vmax.f32 %v4496, %v4535
      %v4563 = vmax.f32 %v4497, %v4537
      %v4564 = vmax.f32 %v4498, %v4539
      %v4565 = vmax.f32 %v4499, %v4541
      %v4566 = vmax.f32 %v4500, %v4543
      %v4567 = vmax.f32 %v4501, %v4542
      %v4568 = vld [vmem:[%s12] sm:$0xf]
      %v4569 = vld [vmem:[%s12 + $0x4] sm:$0xf]
      %v4570 = vld [vmem:[%s12 + $0x8] sm:$0xf]
      %v4571 = vld [vmem:[%s12 + $0xc] sm:$0xf]
      %v4572 = vld [vmem:[%s12 + $0x10] sm:$0xf]
      %v4573 = vld [vmem:[%s12 + $0x14] sm:$0xf]
      %v4574 = vld [vmem:[%s12 + $0x18] sm:$0x1]
      %v4575 = vpack.c.bf16 %v4557, %v4556
      %v4576 = vpack.c.bf16 %v4559, %v4558
      %v4577 = vpack.c.bf16 %v4561, %v4560
      %v4578 = vpack.c.bf16 %v4563, %v4562
      %v4579 = vpack.c.bf16 %v4565, %v4564
      %v4580 = vpack.c.bf16 %v4567, %v4566
      %v4588 = vunpack.c.l.b16 %v4568
      %v4589 = vunpack.c.l.b16 %v4569
      %v4590 = vunpack.c.l.b16 %v4570
      %v4591 = vunpack.c.l.b16 %v4571
      %v4592 = vunpack.c.l.b16 %v4572
      %v4593 = vunpack.c.l.b16 %v4573
      %v4594 = vunpack.c.l.b16 %v4574
      %v4595 = vpack.c.b16 %v4589, %v4588
      %v4596 = vpack.c.b16 %v4591, %v4590
      %v4597 = vpack.c.b16 %v4593, %v4592
      %v4598 = vpack.c.b16 %v4594, %v4594
      %vm4599 = vcmask 728064
      %v4601 = vsel %vm4599, %v4595, 0
      %v4604 = vsel %vm4599, %v4596, 0
      %v4607 = vsel %vm4599, %v4597, 0
      %v4610 = vsel %vm4599, %v4598, 0
      %v4612 = vsel %vm1327, 4294967295, 65535
      %v4613 = vsel %vm1122, %v4612, 0
      %v4615 = vand.u32 %v4580, %v4613
      %4617 = vmatprep.subr.bf16.mxu0 0
      %4618 = vmatpush1.bf16.msra.mxu0 0
      %4619 = vmatprep.subr.bf16.mxu0 0
      %4620 = vmatpush1.bf16.msra.mxu0 0
      %4621 = vmatprep.subr.bf16.mxu0 0
      %4622 = vmatpush1.bf16.msra.mxu0 %v4615
      %4623 = vmatprep.subr.bf16.mxu0 0
      %4624 = vmatpush1.bf16.msra.mxu0 %v4579
      %4625 = vmatprep.subr.bf16.mxu0 0
      %4626 = vmatpush1.bf16.msra.mxu0 %v4578
      %4627 = vmatprep.subr.bf16.mxu0 0
      %4628 = vmatpush1.bf16.msra.mxu0 %v4577
      %4629 = vmatprep.subr.bf16.mxu0 0
      %4630 = vmatpush1.bf16.msra.mxu0 %v4576
      %4631 = vmatprep.subr.bf16.mxu0 0
      %4632 = vmatpush1.bf16.msra.mxu0 %v4575
      %4633 = vmatprep.subr.bf16.mxu0 0
      %4634 = vmatpush2.bf16.msra.mxu0 0
      %4635 = vmatprep.subr.bf16.mxu0 0
      %4636 = vmatpush2.bf16.msra.mxu0 0
      %4637 = vmatprep.subr.bf16.mxu0 0
      %4638 = vmatpush2.bf16.msra.mxu0 0
      %4639 = vmatprep.subr.bf16.mxu0 0
      %4640 = vmatpush2.bf16.msra.mxu0 0
      %4641 = vmatprep.subr.bf16.mxu0 0
      %4642 = vmatpush2.bf16.msra.mxu0 0
      %4643 = vmatprep.subr.bf16.mxu0 0
      %4644 = vmatpush2.bf16.msra.mxu0 0
      %4645 = vmatprep.subr.bf16.mxu0 0
      %4646 = vmatpush2.bf16.msra.mxu0 0
      %4647 = vmatprep.subr.bf16.mxu0 0
      %4648 = vmatpush2.bf16.msra.mxu0 0
      %4649 = vmatprep.mubr.bf16.mxu0 0
      %4650 = vmatmul.mubr.bf16.gmra.mxu0 %v4601
      %v4651 = vpop.f32.mrf.mxu0
      %v4652 = vadd.f32 0.0, %v4651
      %v4653 = vpop.f32.mrf.mxu0
      %v4654 = vpop.f32.mrf.mxu0
      %v4655 = vadd.f32 0.0, %v4654
      %v4656 = vpop.f32.mrf.mxu0
      %4657 = vmatprep.mubr.bf16.mxu0 0
      %4658 = vmatmul.mubr.bf16.gmra.mxu0 %v4604
      %v4659 = vpop.f32.mrf.mxu0
      %v4660 = vadd.f32 0.0, %v4659
      %v4661 = vpop.f32.mrf.mxu0
      %v4662 = vpop.f32.mrf.mxu0
      %v4663 = vadd.f32 0.0, %v4662
      %v4664 = vpop.f32.mrf.mxu0
      %4665 = vmatprep.mubr.bf16.mxu0 0
      %4666 = vmatmul.mubr.bf16.gmra.mxu0 %v4607
      %v4667 = vpop.f32.mrf.mxu0
      %v4668 = vadd.f32 0.0, %v4667
      %v4669 = vpop.f32.mrf.mxu0
      %v4670 = vpop.f32.mrf.mxu0
      %v4671 = vadd.f32 0.0, %v4670
      %v4672 = vpop.f32.mrf.mxu0
      %4673 = vmatprep.mubr.bf16.mxu0 0
      %4674 = vmatmul.mubr.bf16.gmra.mxu0 %v4610
      %v4675 = vpop.f32.mrf.mxu0
      %v4676 = vadd.f32 0.0, %v4675
      %v4677 = vpop.f32.mrf.mxu0
      %v4678 = vpop.f32.mrf.mxu0
      %v4679 = vpop.f32.mrf.mxu0
      %4680 = vdwg.mxu0
      %v4686 = vrot.slane %v4652, 1
      %v4687 = vrot.slane %v4655, 1
      %v4688 = vsel %vm583, %v4686, %v4687
      %v4689 = vrot.slane %v4660, 1
      %v4690 = vsel %vm583, %v4687, %v4689
      %v4691 = vrot.slane %v4663, 1
      %v4692 = vsel %vm583, %v4689, %v4691
      %v4693 = vrot.slane %v4668, 1
      %v4694 = vsel %vm583, %v4691, %v4693
      %4695 = vrot.lane.b32.xlu0 %v4688, 32
      %v4696 = vpop.permute.xlu0 %4695
      %4697 = vrot.lane.b32.xlu0 %v4690, 32
      %v4698 = vpop.permute.xlu0 %4697
      %4699 = vrot.lane.b32.xlu0 %v4692, 32
      %v4700 = vpop.permute.xlu0 %4699
      %4701 = vrot.lane.b32.xlu0 %v4694, 32
      %v4702 = vpop.permute.xlu0 %4701
      %4703 = vrot.lane.b32.xlu0 %v4693, 32
      %v4704 = vpop.permute.xlu0 %4703
      %v4710 = vrot.slane %v4652, 2
      %v4711 = vrot.slane %v4655, 2
      %v4712 = vsel %vm788, %v4710, %v4711
      %v4713 = vrot.slane %v4660, 2
      %v4714 = vsel %vm788, %v4711, %v4713
      %v4715 = vrot.slane %v4663, 2
      %v4716 = vsel %vm788, %v4713, %v4715
      %v4717 = vrot.slane %v4668, 2
      %v4718 = vsel %vm788, %v4715, %v4717
      %4719 = vrot.lane.b32.xlu0 %v4712, 64
      %v4720 = vpop.permute.xlu0 %4719
      %4721 = vrot.lane.b32.xlu0 %v4714, 64
      %v4722 = vpop.permute.xlu0 %4721
      %4723 = vrot.lane.b32.xlu0 %v4716, 64
      %v4724 = vpop.permute.xlu0 %4723
      %4725 = vrot.lane.b32.xlu0 %v4718, 64
      %v4726 = vpop.permute.xlu0 %4725
      %4727 = vrot.lane.b32.xlu0 %v4717, 64
      %v4728 = vpop.permute.xlu0 %4727
      %v4735 = vrot.slane %v4652, 6
      %v4736 = vrot.slane %v4655, 6
      %v4737 = vsel %vm1869, %v4735, %v4736
      %v4738 = vrot.slane %v4660, 6
      %v4739 = vsel %vm1869, %v4736, %v4738
      %v4740 = vrot.slane %v4663, 6
      %v4741 = vsel %vm1869, %v4738, %v4740
      %v4742 = vrot.slane %v4668, 6
      %v4743 = vsel %vm1869, %v4740, %v4742
      %v4744 = vrot.slane %v4671, 6
      %v4745 = vsel %vm1869, %v4742, %v4744
      %4746 = vrot.lane.b32.xlu0 %v4737, 96
      %v4747 = vpop.permute.xlu0 %4746
      %4748 = vrot.lane.b32.xlu0 %v4739, 96
      %v4749 = vpop.permute.xlu0 %4748
      %4750 = vrot.lane.b32.xlu0 %v4741, 96
      %v4751 = vpop.permute.xlu0 %4750
      %4752 = vrot.lane.b32.xlu0 %v4743, 96
      %v4753 = vpop.permute.xlu0 %4752
      %4754 = vrot.lane.b32.xlu0 %v4745, 96
      %v4755 = vpop.permute.xlu0 %4754
      %v4761 = vrot.slane %v4652, 7
      %v4762 = vrot.slane %v4655, 7
      %v4763 = vsel %vm3444, %v4761, %v4762
      %v4764 = vrot.slane %v4660, 7
      %v4765 = vsel %vm3444, %v4762, %v4764
      %v4766 = vrot.slane %v4663, 7
      %v4767 = vsel %vm3444, %v4764, %v4766
      %v4768 = vrot.slane %v4668, 7
      %v4769 = vsel %vm3444, %v4766, %v4768
      %v4770 = vrot.slane %v4671, 7
      %v4771 = vsel %vm3444, %v4768, %v4770
      %4777 = vrot.lane.b32.xlu0 %v4655, 32
      %v4778 = vpop.permute.xlu0 %4777
      %4779 = vrot.lane.b32.xlu0 %v4660, 32
      %v4780 = vpop.permute.xlu0 %4779
      %4781 = vrot.lane.b32.xlu0 %v4663, 32
      %v4782 = vpop.permute.xlu0 %4781
      %4783 = vrot.lane.b32.xlu0 %v4668, 32
      %v4784 = vpop.permute.xlu0 %4783
      %4785 = vrot.lane.b32.xlu0 %v4671, 32
      %v4786 = vpop.permute.xlu0 %4785
      %v4792 = vrot.slane %v4655, 4
      %v4793 = vrot.slane %v4660, 4
      %v4794 = vsel %vm1327, %v4792, %v4793
      %v4795 = vrot.slane %v4663, 4
      %v4796 = vsel %vm1327, %v4793, %v4795
      %v4797 = vrot.slane %v4668, 4
      %v4798 = vsel %vm1327, %v4795, %v4797
      %v4799 = vrot.slane %v4671, 4
      %v4800 = vsel %vm1327, %v4797, %v4799
      %4801 = vrot.lane.b32.xlu0 %v4794, 64
      %v4802 = vpop.permute.xlu0 %4801
      %4803 = vrot.lane.b32.xlu0 %v4796, 64
      %v4804 = vpop.permute.xlu0 %4803
      %4805 = vrot.lane.b32.xlu0 %v4798, 64
      %v4806 = vpop.permute.xlu0 %4805
      %4807 = vrot.lane.b32.xlu0 %v4800, 64
      %v4808 = vpop.permute.xlu0 %4807
      %4809 = vrot.lane.b32.xlu0 %v4799, 64
      %v4810 = vpop.permute.xlu0 %4809
      %v4817 = vrot.slane %v4655, 5
      %v4818 = vrot.slane %v4660, 5
      %v4819 = vsel %vm1662, %v4817, %v4818
      %v4820 = vrot.slane %v4663, 5
      %v4821 = vsel %vm1662, %v4818, %v4820
      %v4822 = vrot.slane %v4668, 5
      %v4823 = vsel %vm1662, %v4820, %v4822
      %v4824 = vrot.slane %v4671, 5
      %v4825 = vsel %vm1662, %v4822, %v4824
      %v4826 = vrot.slane %v4676, 5
      %v4827 = vsel %vm1662, %v4824, %v4826
      %4828 = vrot.lane.b32.xlu0 %v4819, 96
      %v4829 = vpop.permute.xlu0 %4828
      %4830 = vrot.lane.b32.xlu0 %v4821, 96
      %v4831 = vpop.permute.xlu0 %4830
      %4832 = vrot.lane.b32.xlu0 %v4823, 96
      %v4833 = vpop.permute.xlu0 %4832
      %4834 = vrot.lane.b32.xlu0 %v4825, 96
      %v4835 = vpop.permute.xlu0 %4834
      %4836 = vrot.lane.b32.xlu0 %v4827, 96
      %v4837 = vpop.permute.xlu0 %4836
      %v4843 = vrot.slane %v4676, 6
      %v4844 = vsel %vm1869, %v4744, %v4843
      %v4850 = vsel %vm4118, %v4652, %v4696
      %v4851 = vsel %vm4118, %v4655, %v4698
      %v4852 = vsel %vm4118, %v4660, %v4700
      %v4853 = vsel %vm4118, %v4663, %v4702
      %v4854 = vsel %vm4118, %v4668, %v4704
      %v4855 = vsel %vm4146, %v4850, %v4720
      %v4856 = vsel %vm4146, %v4851, %v4722
      %v4857 = vsel %vm4146, %v4852, %v4724
      %v4858 = vsel %vm4146, %v4853, %v4726
      %v4859 = vsel %vm4146, %v4854, %v4728
      %v4860 = vsel %vm4174, %v4855, %v4747
      %v4861 = vsel %vm4174, %v4856, %v4749
      %v4862 = vsel %vm4174, %v4857, %v4751
      %v4863 = vsel %vm4174, %v4858, %v4753
      %v4864 = vsel %vm4174, %v4859, %v4755
      %v4865 = vsel %vm4118, %v4763, %v4778
      %v4866 = vsel %vm4118, %v4765, %v4780
      %v4867 = vsel %vm4118, %v4767, %v4782
      %v4868 = vsel %vm4118, %v4769, %v4784
      %v4869 = vsel %vm4118, %v4771, %v4786
      %v4870 = vsel %vm4146, %v4865, %v4802
      %v4871 = vsel %vm4146, %v4866, %v4804
      %v4872 = vsel %vm4146, %v4867, %v4806
      %v4873 = vsel %vm4146, %v4868, %v4808
      %v4874 = vsel %vm4146, %v4869, %v4810
      %v4875 = vsel %vm4174, %v4870, %v4829
      %v4876 = vsel %vm4174, %v4871, %v4831
      %v4877 = vsel %vm4174, %v4872, %v4833
      %v4878 = vsel %vm4174, %v4873, %v4835
      %v4879 = vsel %vm4174, %v4874, %v4837
      %v4880 = vpack.c.bf16 %v4861, %v4860
      %v4881 = vpack.c.bf16 %v4876, %v4875
      %v4882 = vpack.c.bf16 %v4741, %v4739
      %v4883 = vpack.c.bf16 %v4863, %v4862
      %v4884 = vpack.c.bf16 %v4878, %v4877
      %v4885 = vpack.c.bf16 %v4745, %v4743
      %v4886 = vpack.c.bf16 %v4864, %v4864
      %v4887 = vpack.c.bf16 %v4879, %v4879
      %v4888 = vpack.c.bf16 %v4844, %v4844
      %v4889 = vld [vmem:[%s5] sm:$0xf]
      %v4890 = vld [vmem:[%s5 + $0x4] sm:$0xf]
      %v4891 = vld [vmem:[%s5 + $0x8] sm:$0xf]
      %v4892 = vld [vmem:[%s5 + $0xc] sm:$0xf]
      %v4893 = vld [vmem:[%s5 + $0x10] sm:$0xf]
      %v4894 = vld [vmem:[%s5 + $0x14] sm:$0xf]
      %v4895 = vld [vmem:[%s5 + $0x18] sm:$0xf]
      %v4896 = vld [vmem:[%s5 + $0x1c] sm:$0xf]
      %v4897 = vld [vmem:[%s5 + $0x20] sm:$0xf]
      %v4898 = vld [vmem:[%s5 + $0x24] sm:$0xf]
      %v4899 = vld [vmem:[%s5 + $0x28] sm:$0xf]
      %v4900 = vld [vmem:[%s5 + $0x2c] sm:$0xf]
      %v4901 = vld [vmem:[%s5 + $0x30] sm:$0xf]
      %v4902 = vld [vmem:[%s5 + $0x34] sm:$0xf]
      %v4903 = vld [vmem:[%s5 + $0x38] sm:$0xf]
      %v4904 = vld [vmem:[%s5 + $0x3c] sm:$0xf]
      %v4905 = vld [vmem:[%s5 + $0x40] sm:$0xf]
      %v4906 = vld [vmem:[%s5 + $0x44] sm:$0xf]
      %v4907 = vld [vmem:[%s5 + $0x48] sm:$0xf]
      %v4908 = vld [vmem:[%s5 + $0x4c] sm:$0xf]
      %v4909 = vld [vmem:[%s5 + $0x50] sm:$0xf]
      %v4910 = vld [vmem:[%s5 + $0x54] sm:$0xf]
      %v4911 = vld [vmem:[%s5 + $0x58] sm:$0xf]
      %v4912 = vld [vmem:[%s5 + $0x5c] sm:$0xf]
      %v4913 = vld [vmem:[%s5 + $0x60] sm:$0xf]
      %v4914 = vld [vmem:[%s5 + $0x64] sm:$0xf]
      %v4915 = vld [vmem:[%s5 + $0x68] sm:$0xf]
      %v4916 = vld [vmem:[%s5 + $0x6c] sm:$0xf]
      %v4917 = vld [vmem:[%s5 + $0x70] sm:$0xf]
      %v4918 = vld [vmem:[%s5 + $0x74] sm:$0xf]
      %v4919 = vld [vmem:[%s5 + $0x78] sm:$0xf]
      %v4920 = vld [vmem:[%s5 + $0x7c] sm:$0xf]
      %v4921 = vld [vmem:[%s5 + $0x80] sm:$0xf]
      %v4922 = vld [vmem:[%s5 + $0x84] sm:$0xf]
      %v4923 = vld [vmem:[%s5 + $0x88] sm:$0xf]
      %v4924 = vld [vmem:[%s5 + $0x8c] sm:$0xf]
      %v4925 = vld [vmem:[%s6] sm:$0x1]
      %v4927 = vlaneseq
      %v4928 = vshrl.u32 %v4927, 7
      %v4929 = vsub.s32 0, %v4928
      %v4930 = vrot.slane %v4925, %v4929
      %v4968 = vunpack.c.l.b16 %v4889
      %v4969 = vunpack.c.l.b16 %v4890
      %v4970 = vunpack.c.l.b16 %v4891
      %v4971 = vunpack.c.l.b16 %v4892
      %v4972 = vunpack.c.l.b16 %v4893
      %v4973 = vunpack.c.l.b16 %v4894
      %v4974 = vunpack.c.l.b16 %v4895
      %v4975 = vunpack.c.l.b16 %v4896
      %v4976 = vunpack.c.l.b16 %v4897
      %v4977 = vunpack.c.l.b16 %v4898
      %v4978 = vunpack.c.l.b16 %v4899
      %v4979 = vunpack.c.l.b16 %v4900
      %v4980 = vunpack.c.l.b16 %v4901
      %v4981 = vunpack.c.l.b16 %v4902
      %v4982 = vunpack.c.l.b16 %v4903
      %v4983 = vunpack.c.l.b16 %v4904
      %v4984 = vunpack.c.l.b16 %v4905
      %v4985 = vunpack.c.l.b16 %v4906
      %v4986 = vunpack.c.l.b16 %v4907
      %v4987 = vunpack.c.l.b16 %v4908
      %v4988 = vunpack.c.l.b16 %v4909
      %v4989 = vunpack.c.l.b16 %v4910
      %v4990 = vunpack.c.l.b16 %v4911
      %v4991 = vunpack.c.l.b16 %v4912
      %v4992 = vunpack.c.l.b16 %v4913
      %v4993 = vunpack.c.l.b16 %v4914
      %v4994 = vunpack.c.l.b16 %v4915
      %v4995 = vunpack.c.l.b16 %v4916
      %v4996 = vunpack.c.l.b16 %v4917
      %v4997 = vunpack.c.l.b16 %v4918
      %v4998 = vunpack.c.l.b16 %v4919
      %v4999 = vunpack.c.l.b16 %v4920
      %v5000 = vunpack.c.l.b16 %v4921
      %v5001 = vunpack.c.l.b16 %v4922
      %v5002 = vunpack.c.l.b16 %v4923
      %v5003 = vunpack.c.l.b16 %v4924
      %v5004 = vpack.c.b16 %v4969, %v4968
      %v5005 = vpack.c.b16 %v4971, %v4970
      %v5006 = vpack.c.b16 %v4973, %v4972
      %v5007 = vpack.c.b16 %v4975, %v4974
      %v5008 = vpack.c.b16 %v4977, %v4976
      %v5009 = vpack.c.b16 %v4979, %v4978
      %v5010 = vpack.c.b16 %v4981, %v4980
      %v5011 = vpack.c.b16 %v4983, %v4982
      %v5012 = vpack.c.b16 %v4985, %v4984
      %v5013 = vpack.c.b16 %v4987, %v4986
      %v5014 = vpack.c.b16 %v4989, %v4988
      %v5015 = vpack.c.b16 %v4991, %v4990
      %v5016 = vpack.c.b16 %v4993, %v4992
      %v5017 = vpack.c.b16 %v4995, %v4994
      %v5018 = vpack.c.b16 %v4997, %v4996
      %v5019 = vpack.c.b16 %v4999, %v4998
      %v5020 = vpack.c.b16 %v5001, %v5000
      %v5021 = vpack.c.b16 %v5003, %v5002
      %v5041 = vsel %vm4118, %v4882, 0
      %v5044 = vsel %vm4118, %v4885, 0
      %v5047 = vsel %vm4118, %v4888, 0
      %5049 = vmatprep.subr.bf16.mxu0 0
      %5050 = vmatpush1.bf16.msra.mxu0 %v5011
      %5051 = vmatprep.subr.bf16.mxu0 0
      %5052 = vmatpush1.bf16.msra.mxu0 %v5010
      %5053 = vmatprep.subr.bf16.mxu0 0
      %5054 = vmatpush1.bf16.msra.mxu0 %v5009
      %5055 = vmatprep.subr.bf16.mxu0 0
      %5056 = vmatpush1.bf16.msra.mxu0 %v5008
      %5057 = vmatprep.subr.bf16.mxu0 0
      %5058 = vmatpush1.bf16.msra.mxu0 %v5007
      %5059 = vmatprep.subr.bf16.mxu0 0
      %5060 = vmatpush1.bf16.msra.mxu0 %v5006
      %5061 = vmatprep.subr.bf16.mxu0 0
      %5062 = vmatpush1.bf16.msra.mxu0 %v5005
      %5063 = vmatprep.subr.bf16.mxu0 0
      %5064 = vmatpush1.bf16.msra.mxu0 %v5004
      %5065 = vmatprep.subr.bf16.mxu0 0
      %5066 = vmatpush2.bf16.msra.mxu0 %v5019
      %5067 = vmatprep.subr.bf16.mxu0 0
      %5068 = vmatpush2.bf16.msra.mxu0 %v5018
      %5069 = vmatprep.subr.bf16.mxu0 0
      %5070 = vmatpush2.bf16.msra.mxu0 %v5017
      %5071 = vmatprep.subr.bf16.mxu0 0
      %5072 = vmatpush2.bf16.msra.mxu0 %v5016
      %5073 = vmatprep.subr.bf16.mxu0 0
      %5074 = vmatpush2.bf16.msra.mxu0 %v5015
      %5075 = vmatprep.subr.bf16.mxu0 0
      %5076 = vmatpush2.bf16.msra.mxu0 %v5014
      %5077 = vmatprep.subr.bf16.mxu0 0
      %5078 = vmatpush2.bf16.msra.mxu0 %v5013
      %5079 = vmatprep.subr.bf16.mxu0 0
      %5080 = vmatpush2.bf16.msra.mxu0 %v5012
      %5081 = vmatprep.mubr.bf16.mxu0 %v4881
      %5082 = vmatmul.mubr.bf16.gmra.mxu0 %v4880
      %v5083 = vpop.f32.mrf.mxu0
      %v5084 = vadd.f32 %v4930, %v5083
      %v5085 = vpop.f32.mrf.mxu0
      %v5086 = vpop.f32.mrf.mxu0
      %v5087 = vadd.f32 %v4930, %v5086
      %v5088 = vpop.f32.mrf.mxu0
      %5089 = vmatprep.mubr.bf16.mxu0 %v4884
      %5090 = vmatmul.mubr.bf16.gmra.mxu0 %v4883
      %v5091 = vpop.f32.mrf.mxu0
      %v5092 = vadd.f32 %v4930, %v5091
      %v5093 = vpop.f32.mrf.mxu0
      %v5094 = vpop.f32.mrf.mxu0
      %v5095 = vadd.f32 %v4930, %v5094
      %v5096 = vpop.f32.mrf.mxu0
      %5097 = vmatprep.mubr.bf16.mxu0 %v4887
      %5098 = vmatmul.mubr.bf16.gmra.mxu0 %v4886
      %v5099 = vpop.f32.mrf.mxu0
      %v5100 = vadd.f32 %v4930, %v5099
      %v5101 = vpop.f32.mrf.mxu0
      %v5102 = vpop.f32.mrf.mxu0
      %v5103 = vpop.f32.mrf.mxu0
      %5104 = vdwg.mxu0
      %5105 = vmatprep.subr.bf16.mxu0 0
      %5106 = vmatpush1.bf16.msra.mxu0 0
      %5107 = vmatprep.subr.bf16.mxu0 0
      %5108 = vmatpush1.bf16.msra.mxu0 0
      %5109 = vmatprep.subr.bf16.mxu0 0
      %5110 = vmatpush1.bf16.msra.mxu0 0
      %5111 = vmatprep.subr.bf16.mxu0 0
      %5112 = vmatpush1.bf16.msra.mxu0 0
      %5113 = vmatprep.subr.bf16.mxu0 0
      %5114 = vmatpush1.bf16.msra.mxu0 0
      %5115 = vmatprep.subr.bf16.mxu0 0
      %5116 = vmatpush1.bf16.msra.mxu0 0
      %5117 = vmatprep.subr.bf16.mxu0 0
      %5118 = vmatpush1.bf16.msra.mxu0 %v5021
      %5119 = vmatprep.subr.bf16.mxu0 0
      %5120 = vmatpush1.bf16.msra.mxu0 %v5020
      %5121 = vmatprep.subr.bf16.mxu0 0
      %5122 = vmatpush2.bf16.msra.mxu0 0
      %5123 = vmatprep.subr.bf16.mxu0 0
      %5124 = vmatpush2.bf16.msra.mxu0 0
      %5125 = vmatprep.subr.bf16.mxu0 0
      %5126 = vmatpush2.bf16.msra.mxu0 0
      %5127 = vmatprep.subr.bf16.mxu0 0
      %5128 = vmatpush2.bf16.msra.mxu0 0
      %5129 = vmatprep.subr.bf16.mxu0 0
      %5130 = vmatpush2.bf16.msra.mxu0 0
      %5131 = vmatprep.subr.bf16.mxu0 0
      %5132 = vmatpush2.bf16.msra.mxu0 0
      %5133 = vmatprep.subr.bf16.mxu0 0
      %5134 = vmatpush2.bf16.msra.mxu0 0
      %5135 = vmatprep.subr.bf16.mxu0 0
      %5136 = vmatpush2.bf16.msra.mxu0 0
      %5137 = vmatprep.mubr.bf16.mxu0 0
      %5138 = vmatmul.mubr.bf16.gmra.mxu0 %v5041
      %v5139 = vpop.f32.mrf.mxu0
      %v5140 = vadd.f32 %v5084, %v5139
      %v5141 = vpop.f32.mrf.mxu0
      %v5142 = vpop.f32.mrf.mxu0
      %v5143 = vadd.f32 %v5087, %v5142
      %v5144 = vpop.f32.mrf.mxu0
      %5145 = vmatprep.mubr.bf16.mxu0 0
      %5146 = vmatmul.mubr.bf16.gmra.mxu0 %v5044
      %v5147 = vpop.f32.mrf.mxu0
      %v5148 = vadd.f32 %v5092, %v5147
      %v5149 = vpop.f32.mrf.mxu0
      %v5150 = vpop.f32.mrf.mxu0
      %v5151 = vadd.f32 %v5095, %v5150
      %v5152 = vpop.f32.mrf.mxu0
      %5153 = vmatprep.mubr.bf16.mxu0 0
      %5154 = vmatmul.mubr.bf16.gmra.mxu0 %v5047
      %v5155 = vpop.f32.mrf.mxu0
      %v5156 = vadd.f32 %v5100, %v5155
      %v5157 = vpop.f32.mrf.mxu0
      %v5158 = vpop.f32.mrf.mxu0
      %v5159 = vpop.f32.mrf.mxu0
      %5160 = vdwg.mxu0
      %vm5161 = vcmp.ge.f32.partialorder %v5140, 0.0
      %vm5162 = vcmp.ge.f32.partialorder %v5143, 0.0
      %vm5163 = vcmp.ge.f32.partialorder %v5148, 0.0
      %vm5164 = vcmp.ge.f32.partialorder %v5151, 0.0
      %vm5165 = vcmp.ge.f32.partialorder %v5156, 0.0
      %v5166 = vmul.f32 %v5140, 0.01
      %v5167 = vmul.f32 %v5143, 0.01
      %v5168 = vmul.f32 %v5148, 0.01
      %v5169 = vmul.f32 %v5151, 0.01
      %v5170 = vmul.f32 %v5156, 0.01
      %v5171 = vsel %vm5161, %v5140, %v5166
      %v5172 = vsel %vm5162, %v5143, %v5167
      %v5173 = vsel %vm5163, %v5148, %v5168
      %v5174 = vsel %vm5164, %v5151, %v5169
      %v5175 = vsel %vm5165, %v5156, %v5170
      %v5180 = vrot.slane %v5171, 1
      %v5181 = vrot.slane %v5172, 1
      %v5182 = vsel %vm583, %v5180, %v5181
      %v5183 = vrot.slane %v5173, 1
      %v5184 = vsel %vm583, %v5181, %v5183
      %v5185 = vrot.slane %v5174, 1
      %v5186 = vsel %vm583, %v5183, %v5185
      %v5191 = vmax.f32 %v5171, %v5182
      %v5192 = vmax.f32 %v5172, %v5184
      %v5193 = vmax.f32 %v5173, %v5186
      %v5194 = vmax.f32 %v5174, %v5185
      %v5196 = vrot.slane %v5175, 1
      %v5197 = vsel %vm583, %v5185, %v5196
      %v5200 = vmax.f32 %v5174, %v5197
      %v5201 = vmax.f32 %v5175, %v5196
      %v5207 = vrot.slane %v5191, 6
      %v5208 = vrot.slane %v5192, 6
      %v5209 = vsel %vm1869, %v5207, %v5208
      %v5210 = vrot.slane %v5193, 6
      %v5211 = vsel %vm1869, %v5208, %v5210
      %v5212 = vrot.slane %v5200, 6
      %v5213 = vsel %vm1869, %v5210, %v5212
      %v5214 = vrot.slane %v5201, 6
      %v5215 = vsel %vm1869, %v5212, %v5214
      %v5220 = vmax.f32 %v5191, %v5209
      %v5221 = vmax.f32 %v5192, %v5211
      %v5222 = vmax.f32 %v5193, %v5213
      %v5223 = vmax.f32 %v5194, %v5215
      %v5224 = vld [vmem:[%s13] sm:$0xf]
      %v5225 = vld [vmem:[%s13 + $0x4] sm:$0xf]
      %v5226 = vld [vmem:[%s13 + $0x8] sm:$0xf]
      %v5227 = vld [vmem:[%s13 + $0xc] sm:$0xf]
      %v5228 = vld [vmem:[%s13 + $0x10] sm:$0xf]
      %v5229 = vld [vmem:[%s13 + $0x14] sm:$0xf]
      %v5230 = vld [vmem:[%s13 + $0x18] sm:$0x1]
      %v5231 = vpack.c.bf16 %v5221, %v5220
      %v5232 = vpack.c.bf16 %v5223, %v5222
      %v5240 = vunpack.c.l.b16 %v5224
      %v5241 = vunpack.c.l.b16 %v5225
      %v5242 = vunpack.c.l.b16 %v5226
      %v5243 = vunpack.c.l.b16 %v5227
      %v5244 = vunpack.c.l.b16 %v5228
      %v5245 = vunpack.c.l.b16 %v5229
      %v5246 = vunpack.c.l.b16 %v5230
      %v5247 = vpack.c.b16 %v5241, %v5240
      %v5248 = vpack.c.b16 %v5243, %v5242
      %v5249 = vpack.c.b16 %v5245, %v5244
      %v5250 = vpack.c.b16 %v5246, %v5246
      %vm5251 = vcmask 236544
      %v5253 = vsel %vm5251, %v5247, 0
      %v5256 = vsel %vm5251, %v5248, 0
      %v5259 = vsel %vm5251, %v5249, 0
      %v5262 = vsel %vm5251, %v5250, 0
      %v5264 = vsel %vm788, 4294967295, 65535
      %v5265 = vsel %vm583, %v5264, 0
      %v5267 = vand.u32 %v5232, %v5265
      %5269 = vmatprep.subr.bf16.mxu0 0
      %5270 = vmatpush1.bf16.msra.mxu0 0
      %5271 = vmatprep.subr.bf16.mxu0 0
      %5272 = vmatpush1.bf16.msra.mxu0 0
      %5273 = vmatprep.subr.bf16.mxu0 0
      %5274 = vmatpush1.bf16.msra.mxu0 0
      %5275 = vmatprep.subr.bf16.mxu0 0
      %5276 = vmatpush1.bf16.msra.mxu0 0
      %5277 = vmatprep.subr.bf16.mxu0 0
      %5278 = vmatpush1.bf16.msra.mxu0 0
      %5279 = vmatprep.subr.bf16.mxu0 0
      %5280 = vmatpush1.bf16.msra.mxu0 0
      %5281 = vmatprep.subr.bf16.mxu0 0
      %5282 = vmatpush1.bf16.msra.mxu0 %v5267
      %5283 = vmatprep.subr.bf16.mxu0 0
      %5284 = vmatpush1.bf16.msra.mxu0 %v5231
      %5285 = vmatprep.subr.bf16.mxu0 0
      %5286 = vmatpush2.bf16.msra.mxu0 0
      %5287 = vmatprep.subr.bf16.mxu0 0
      %5288 = vmatpush2.bf16.msra.mxu0 0
      %5289 = vmatprep.subr.bf16.mxu0 0
      %5290 = vmatpush2.bf16.msra.mxu0 0
      %5291 = vmatprep.subr.bf16.mxu0 0
      %5292 = vmatpush2.bf16.msra.mxu0 0
      %5293 = vmatprep.subr.bf16.mxu0 0
      %5294 = vmatpush2.bf16.msra.mxu0 0
      %5295 = vmatprep.subr.bf16.mxu0 0
      %5296 = vmatpush2.bf16.msra.mxu0 0
      %5297 = vmatprep.subr.bf16.mxu0 0
      %5298 = vmatpush2.bf16.msra.mxu0 0
      %5299 = vmatprep.subr.bf16.mxu0 0
      %5300 = vmatpush2.bf16.msra.mxu0 0
      %5301 = vmatprep.mubr.bf16.mxu0 0
      %5302 = vmatmul.mubr.bf16.gmra.mxu0 %v5253
      %v5303 = vpop.f32.mrf.mxu0
      %v5304 = vadd.f32 0.0, %v5303
      %v5305 = vpop.f32.mrf.mxu0
      %v5306 = vpop.f32.mrf.mxu0
      %v5307 = vadd.f32 0.0, %v5306
      %v5308 = vpop.f32.mrf.mxu0
      %5309 = vmatprep.mubr.bf16.mxu0 0
      %5310 = vmatmul.mubr.bf16.gmra.mxu0 %v5256
      %v5311 = vpop.f32.mrf.mxu0
      %v5312 = vadd.f32 0.0, %v5311
      %v5313 = vpop.f32.mrf.mxu0
      %v5314 = vpop.f32.mrf.mxu0
      %v5315 = vadd.f32 0.0, %v5314
      %v5316 = vpop.f32.mrf.mxu0
      %5317 = vmatprep.mubr.bf16.mxu0 0
      %5318 = vmatmul.mubr.bf16.gmra.mxu0 %v5259
      %v5319 = vpop.f32.mrf.mxu0
      %v5320 = vadd.f32 0.0, %v5319
      %v5321 = vpop.f32.mrf.mxu0
      %v5322 = vpop.f32.mrf.mxu0
      %v5323 = vadd.f32 0.0, %v5322
      %v5324 = vpop.f32.mrf.mxu0
      %5325 = vmatprep.mubr.bf16.mxu0 0
      %5326 = vmatmul.mubr.bf16.gmra.mxu0 %v5262
      %v5327 = vpop.f32.mrf.mxu0
      %v5328 = vadd.f32 0.0, %v5327
      %v5329 = vpop.f32.mrf.mxu0
      %v5330 = vpop.f32.mrf.mxu0
      %v5331 = vpop.f32.mrf.mxu0
      %5332 = vdwg.mxu0
      %v5338 = vrot.slane %v5304, 1
      %v5339 = vrot.slane %v5307, 1
      %v5340 = vsel %vm583, %v5338, %v5339
      %v5341 = vrot.slane %v5312, 1
      %v5342 = vsel %vm583, %v5339, %v5341
      %v5343 = vrot.slane %v5315, 1
      %v5344 = vsel %vm583, %v5341, %v5343
      %v5345 = vrot.slane %v5320, 1
      %v5346 = vsel %vm583, %v5343, %v5345
      %5347 = vrot.lane.b32.xlu0 %v5340, 64
      %v5348 = vpop.permute.xlu0 %5347
      %5349 = vrot.lane.b32.xlu0 %v5342, 64
      %v5350 = vpop.permute.xlu0 %5349
      %5351 = vrot.lane.b32.xlu0 %v5344, 64
      %v5352 = vpop.permute.xlu0 %5351
      %5353 = vrot.lane.b32.xlu0 %v5346, 64
      %v5354 = vpop.permute.xlu0 %5353
      %5355 = vrot.lane.b32.xlu0 %v5345, 64
      %v5356 = vpop.permute.xlu0 %5355
      %v5362 = vrot.slane %v5304, 2
      %v5363 = vrot.slane %v5307, 2
      %v5364 = vsel %vm788, %v5362, %v5363
      %v5365 = vrot.slane %v5312, 2
      %v5366 = vsel %vm788, %v5363, %v5365
      %v5367 = vrot.slane %v5315, 2
      %v5368 = vsel %vm788, %v5365, %v5367
      %v5369 = vrot.slane %v5320, 2
      %v5370 = vsel %vm788, %v5367, %v5369
      %v5377 = vrot.slane %v5304, 6
      %v5378 = vrot.slane %v5307, 6
      %v5379 = vsel %vm1869, %v5377, %v5378
      %v5380 = vrot.slane %v5312, 6
      %v5381 = vsel %vm1869, %v5378, %v5380
      %v5382 = vrot.slane %v5315, 6
      %v5383 = vsel %vm1869, %v5380, %v5382
      %v5384 = vrot.slane %v5320, 6
      %v5385 = vsel %vm1869, %v5382, %v5384
      %v5386 = vrot.slane %v5323, 6
      %v5387 = vsel %vm1869, %v5384, %v5386
      %5388 = vrot.lane.b32.xlu0 %v5379, 64
      %v5389 = vpop.permute.xlu0 %5388
      %5390 = vrot.lane.b32.xlu0 %v5381, 64
      %v5391 = vpop.permute.xlu0 %5390
      %5392 = vrot.lane.b32.xlu0 %v5383, 64
      %v5393 = vpop.permute.xlu0 %5392
      %5394 = vrot.lane.b32.xlu0 %v5385, 64
      %v5395 = vpop.permute.xlu0 %5394
      %5396 = vrot.lane.b32.xlu0 %v5387, 64
      %v5397 = vpop.permute.xlu0 %5396
      %v5403 = vrot.slane %v5304, 7
      %v5404 = vrot.slane %v5307, 7
      %v5405 = vsel %vm3444, %v5403, %v5404
      %v5406 = vrot.slane %v5312, 7
      %v5407 = vsel %vm3444, %v5404, %v5406
      %v5408 = vrot.slane %v5315, 7
      %v5409 = vsel %vm3444, %v5406, %v5408
      %v5410 = vrot.slane %v5320, 7
      %v5411 = vsel %vm3444, %v5408, %v5410
      %v5412 = vrot.slane %v5323, 7
      %v5413 = vsel %vm3444, %v5410, %v5412
      %5419 = vrot.lane.b32.xlu0 %v5307, 64
      %v5420 = vpop.permute.xlu0 %5419
      %5421 = vrot.lane.b32.xlu0 %v5312, 64
      %v5422 = vpop.permute.xlu0 %5421
      %5423 = vrot.lane.b32.xlu0 %v5315, 64
      %v5424 = vpop.permute.xlu0 %5423
      %5425 = vrot.lane.b32.xlu0 %v5320, 64
      %v5426 = vpop.permute.xlu0 %5425
      %5427 = vrot.lane.b32.xlu0 %v5323, 64
      %v5428 = vpop.permute.xlu0 %5427
      %v5434 = vrot.slane %v5307, 4
      %v5435 = vrot.slane %v5312, 4
      %v5436 = vsel %vm1327, %v5434, %v5435
      %v5437 = vrot.slane %v5315, 4
      %v5438 = vsel %vm1327, %v5435, %v5437
      %v5439 = vrot.slane %v5320, 4
      %v5440 = vsel %vm1327, %v5437, %v5439
      %v5441 = vrot.slane %v5323, 4
      %v5442 = vsel %vm1327, %v5439, %v5441
      %v5449 = vrot.slane %v5307, 5
      %v5450 = vrot.slane %v5312, 5
      %v5451 = vsel %vm1662, %v5449, %v5450
      %v5452 = vrot.slane %v5315, 5
      %v5453 = vsel %vm1662, %v5450, %v5452
      %v5454 = vrot.slane %v5320, 5
      %v5455 = vsel %vm1662, %v5452, %v5454
      %v5456 = vrot.slane %v5323, 5
      %v5457 = vsel %vm1662, %v5454, %v5456
      %v5458 = vrot.slane %v5328, 5
      %v5459 = vsel %vm1662, %v5456, %v5458
      %5460 = vrot.lane.b32.xlu0 %v5451, 64
      %v5461 = vpop.permute.xlu0 %5460
      %5462 = vrot.lane.b32.xlu0 %v5453, 64
      %v5463 = vpop.permute.xlu0 %5462
      %5464 = vrot.lane.b32.xlu0 %v5455, 64
      %v5465 = vpop.permute.xlu0 %5464
      %5466 = vrot.lane.b32.xlu0 %v5457, 64
      %v5467 = vpop.permute.xlu0 %5466
      %5468 = vrot.lane.b32.xlu0 %v5459, 64
      %v5469 = vpop.permute.xlu0 %5468
      %v5475 = vrot.slane %v5328, 6
      %v5476 = vsel %vm1869, %v5386, %v5475
      %v5482 = vsel %vm4146, %v5304, %v5348
      %v5483 = vsel %vm4146, %v5307, %v5350
      %v5484 = vsel %vm4146, %v5312, %v5352
      %v5485 = vsel %vm4146, %v5315, %v5354
      %v5486 = vsel %vm4146, %v5320, %v5356
      %v5487 = vsel %vm4146, %v5364, %v5389
      %v5488 = vsel %vm4146, %v5366, %v5391
      %v5489 = vsel %vm4146, %v5368, %v5393
      %v5490 = vsel %vm4146, %v5370, %v5395
      %v5491 = vsel %vm4146, %v5369, %v5397
      %v5492 = vsel %vm4146, %v5405, %v5420
      %v5493 = vsel %vm4146, %v5407, %v5422
      %v5494 = vsel %vm4146, %v5409, %v5424
      %v5495 = vsel %vm4146, %v5411, %v5426
      %v5496 = vsel %vm4146, %v5413, %v5428
      %v5497 = vsel %vm4146, %v5436, %v5461
      %v5498 = vsel %vm4146, %v5438, %v5463
      %v5499 = vsel %vm4146, %v5440, %v5465
      %v5500 = vsel %vm4146, %v5442, %v5467
      %v5501 = vsel %vm4146, %v5441, %v5469
      %v5502 = vpack.c.bf16 %v5483, %v5482
      %v5503 = vpack.c.bf16 %v5488, %v5487
      %v5504 = vpack.c.bf16 %v5493, %v5492
      %v5505 = vpack.c.bf16 %v5498, %v5497
      %v5506 = vpack.c.bf16 %v5383, %v5381
      %v5507 = vpack.c.bf16 %v5485, %v5484
      %v5508 = vpack.c.bf16 %v5490, %v5489
      %v5509 = vpack.c.bf16 %v5495, %v5494
      %v5510 = vpack.c.bf16 %v5500, %v5499
      %v5511 = vpack.c.bf16 %v5387, %v5385
      %v5512 = vpack.c.bf16 %v5486, %v5486
      %v5513 = vpack.c.bf16 %v5491, %v5491
      %v5514 = vpack.c.bf16 %v5496, %v5496
      %v5515 = vpack.c.bf16 %v5501, %v5501
      %v5516 = vpack.c.bf16 %v5476, %v5476
      %v5517 = vld [vmem:[%s7] sm:$0xf]
      %v5518 = vld [vmem:[%s7 + $0x4] sm:$0xf]
      %v5519 = vld [vmem:[%s7 + $0x8] sm:$0xf]
      %v5520 = vld [vmem:[%s7 + $0xc] sm:$0xf]
      %v5521 = vld [vmem:[%s7 + $0x10] sm:$0xf]
      %v5522 = vld [vmem:[%s7 + $0x14] sm:$0xf]
      %v5523 = vld [vmem:[%s7 + $0x18] sm:$0xf]
      %v5524 = vld [vmem:[%s7 + $0x1c] sm:$0xf]
      %v5525 = vld [vmem:[%s7 + $0x20] sm:$0xf]
      %v5526 = vld [vmem:[%s7 + $0x24] sm:$0xf]
      %v5527 = vld [vmem:[%s7 + $0x28] sm:$0xf]
      %v5528 = vld [vmem:[%s7 + $0x2c] sm:$0xf]
      %v5529 = vld [vmem:[%s7 + $0x30] sm:$0xf]
      %v5530 = vld [vmem:[%s7 + $0x34] sm:$0xf]
      %v5531 = vld [vmem:[%s7 + $0x38] sm:$0xf]
      %v5532 = vld [vmem:[%s7 + $0x3c] sm:$0xf]
      %v5533 = vld [vmem:[%s7 + $0x40] sm:$0xf]
      %v5534 = vld [vmem:[%s7 + $0x44] sm:$0xf]
      %v5535 = vld [vmem:[%s7 + $0x48] sm:$0xf]
      %v5536 = vld [vmem:[%s7 + $0x4c] sm:$0xf]
      %v5537 = vld [vmem:[%s7 + $0x50] sm:$0xf]
      %v5538 = vld [vmem:[%s7 + $0x54] sm:$0xf]
      %v5539 = vld [vmem:[%s7 + $0x58] sm:$0xf]
      %v5540 = vld [vmem:[%s7 + $0x5c] sm:$0xf]
      %v5541 = vld [vmem:[%s7 + $0x60] sm:$0xf]
      %v5542 = vld [vmem:[%s7 + $0x64] sm:$0xf]
      %v5543 = vld [vmem:[%s7 + $0x68] sm:$0xf]
      %v5544 = vld [vmem:[%s7 + $0x6c] sm:$0xf]
      %v5545 = vld [vmem:[%s7 + $0x70] sm:$0xf]
      %v5546 = vld [vmem:[%s7 + $0x74] sm:$0xf]
      %v5547 = vld [vmem:[%s7 + $0x78] sm:$0xf]
      %v5548 = vld [vmem:[%s7 + $0x7c] sm:$0xf]
      %v5549 = vld [vmem:[%s7 + $0x80] sm:$0xf]
      %v5550 = vld [vmem:[%s7 + $0x84] sm:$0xf]
      %v5551 = vld [vmem:[%s7 + $0x88] sm:$0xf]
      %v5552 = vld [vmem:[%s7 + $0x8c] sm:$0xf]
      %v5553 = vld [vmem:[%s7 + $0x90] sm:$0xf]
      %v5554 = vld [vmem:[%s7 + $0x94] sm:$0xf]
      %v5555 = vld [vmem:[%s7 + $0x98] sm:$0xf]
      %v5556 = vld [vmem:[%s7 + $0x9c] sm:$0xf]
      %v5557 = vld [vmem:[%s7 + $0xa0] sm:$0xf]
      %v5558 = vld [vmem:[%s7 + $0xa4] sm:$0xf]
      %v5559 = vld [vmem:[%s7 + $0xa8] sm:$0xf]
      %v5560 = vld [vmem:[%s7 + $0xac] sm:$0xf]
      %v5561 = vld [vmem:[%s7 + $0xb0] sm:$0xf]
      %v5562 = vld [vmem:[%s7 + $0xb4] sm:$0xf]
      %v5563 = vld [vmem:[%s7 + $0xb8] sm:$0xf]
      %v5564 = vld [vmem:[%s7 + $0xbc] sm:$0xf]
      %v5565 = vld [vmem:[%s7 + $0xc0] sm:$0xf]
      %v5566 = vld [vmem:[%s7 + $0xc4] sm:$0xf]
      %v5567 = vld [vmem:[%s7 + $0xc8] sm:$0xf]
      %v5568 = vld [vmem:[%s7 + $0xcc] sm:$0xf]
      %v5569 = vld [vmem:[%s7 + $0xd0] sm:$0xf]
      %v5570 = vld [vmem:[%s7 + $0xd4] sm:$0xf]
      %v5571 = vld [vmem:[%s7 + $0xd8] sm:$0xf]
      %v5572 = vld [vmem:[%s7 + $0xdc] sm:$0xf]
      %v5573 = vld [vmem:[%s7 + $0xe0] sm:$0xf]
      %v5574 = vld [vmem:[%s7 + $0xe4] sm:$0xf]
      %v5575 = vld [vmem:[%s7 + $0xe8] sm:$0xf]
      %v5576 = vld [vmem:[%s7 + $0xec] sm:$0xf]
      %v5577 = vld [vmem:[%s7 + $0xf0] sm:$0xf]
      %v5578 = vld [vmem:[%s7 + $0xf4] sm:$0xf]
      %v5579 = vld [vmem:[%s7 + $0xf8] sm:$0xf]
      %v5580 = vld [vmem:[%s7 + $0xfc] sm:$0xf]
      %v5581 = vld [vmem:[%s7 + $0x100] sm:$0xf]
      %v5582 = vld [vmem:[%s7 + $0x104] sm:$0xf]
      %v5583 = vld [vmem:[%s7 + $0x108] sm:$0xf]
      %v5584 = vld [vmem:[%s7 + $0x10c] sm:$0xf]
      %v5585 = vld [vmem:[%s7 + $0x110] sm:$0xf]
      %v5586 = vld [vmem:[%s7 + $0x114] sm:$0xf]
      %v5587 = vld [vmem:[%s7 + $0x118] sm:$0xf]
      %v5588 = vld [vmem:[%s7 + $0x11c] sm:$0xf]
      %v5589 = vld [vmem:[%s8] sm:$0x1]
      %v5591 = vlaneseq
      %v5592 = vshrl.u32 %v5591, 7
      %v5593 = vsub.s32 0, %v5592
      %v5594 = vrot.slane %v5589, %v5593
      %v5668 = vunpack.c.l.b16 %v5517
      %v5669 = vunpack.c.l.b16 %v5518
      %v5670 = vunpack.c.l.b16 %v5519
      %v5671 = vunpack.c.l.b16 %v5520
      %v5672 = vunpack.c.l.b16 %v5521
      %v5673 = vunpack.c.l.b16 %v5522
      %v5674 = vunpack.c.l.b16 %v5523
      %v5675 = vunpack.c.l.b16 %v5524
      %v5676 = vunpack.c.l.b16 %v5525
      %v5677 = vunpack.c.l.b16 %v5526
      %v5678 = vunpack.c.l.b16 %v5527
      %v5679 = vunpack.c.l.b16 %v5528
      %v5680 = vunpack.c.l.b16 %v5529
      %v5681 = vunpack.c.l.b16 %v5530
      %v5682 = vunpack.c.l.b16 %v5531
      %v5683 = vunpack.c.l.b16 %v5532
      %v5684 = vunpack.c.l.b16 %v5533
      %v5685 = vunpack.c.l.b16 %v5534
      %v5686 = vunpack.c.l.b16 %v5535
      %v5687 = vunpack.c.l.b16 %v5536
      %v5688 = vunpack.c.l.b16 %v5537
      %v5689 = vunpack.c.l.b16 %v5538
      %v5690 = vunpack.c.l.b16 %v5539
      %v5691 = vunpack.c.l.b16 %v5540
      %v5692 = vunpack.c.l.b16 %v5541
      %v5693 = vunpack.c.l.b16 %v5542
      %v5694 = vunpack.c.l.b16 %v5543
      %v5695 = vunpack.c.l.b16 %v5544
      %v5696 = vunpack.c.l.b16 %v5545
      %v5697 = vunpack.c.l.b16 %v5546
      %v5698 = vunpack.c.l.b16 %v5547
      %v5699 = vunpack.c.l.b16 %v5548
      %v5700 = vunpack.c.l.b16 %v5549
      %v5701 = vunpack.c.l.b16 %v5550
      %v5702 = vunpack.c.l.b16 %v5551
      %v5703 = vunpack.c.l.b16 %v5552
      %v5704 = vunpack.c.l.b16 %v5553
      %v5705 = vunpack.c.l.b16 %v5554
      %v5706 = vunpack.c.l.b16 %v5555
      %v5707 = vunpack.c.l.b16 %v5556
      %v5708 = vunpack.c.l.b16 %v5557
      %v5709 = vunpack.c.l.b16 %v5558
      %v5710 = vunpack.c.l.b16 %v5559
      %v5711 = vunpack.c.l.b16 %v5560
      %v5712 = vunpack.c.l.b16 %v5561
      %v5713 = vunpack.c.l.b16 %v5562
      %v5714 = vunpack.c.l.b16 %v5563
      %v5715 = vunpack.c.l.b16 %v5564
      %v5716 = vunpack.c.l.b16 %v5565
      %v5717 = vunpack.c.l.b16 %v5566
      %v5718 = vunpack.c.l.b16 %v5567
      %v5719 = vunpack.c.l.b16 %v5568
      %v5720 = vunpack.c.l.b16 %v5569
      %v5721 = vunpack.c.l.b16 %v5570
      %v5722 = vunpack.c.l.b16 %v5571
      %v5723 = vunpack.c.l.b16 %v5572
      %v5724 = vunpack.c.l.b16 %v5573
      %v5725 = vunpack.c.l.b16 %v5574
      %v5726 = vunpack.c.l.b16 %v5575
      %v5727 = vunpack.c.l.b16 %v5576
      %v5728 = vunpack.c.l.b16 %v5577
      %v5729 = vunpack.c.l.b16 %v5578
      %v5730 = vunpack.c.l.b16 %v5579
      %v5731 = vunpack.c.l.b16 %v5580
      %v5732 = vunpack.c.l.b16 %v5581
      %v5733 = vunpack.c.l.b16 %v5582
      %v5734 = vunpack.c.l.b16 %v5583
      %v5735 = vunpack.c.l.b16 %v5584
      %v5736 = vunpack.c.l.b16 %v5585
      %v5737 = vunpack.c.l.b16 %v5586
      %v5738 = vunpack.c.l.b16 %v5587
      %v5739 = vunpack.c.l.b16 %v5588
      %v5740 = vpack.c.b16 %v5669, %v5668
      %v5741 = vpack.c.b16 %v5671, %v5670
      %v5742 = vpack.c.b16 %v5673, %v5672
      %v5743 = vpack.c.b16 %v5675, %v5674
      %v5744 = vpack.c.b16 %v5677, %v5676
      %v5745 = vpack.c.b16 %v5679, %v5678
      %v5746 = vpack.c.b16 %v5681, %v5680
      %v5747 = vpack.c.b16 %v5683, %v5682
      %v5748 = vpack.c.b16 %v5685, %v5684
      %v5749 = vpack.c.b16 %v5687, %v5686
      %v5750 = vpack.c.b16 %v5689, %v5688
      %v5751 = vpack.c.b16 %v5691, %v5690
      %v5752 = vpack.c.b16 %v5693, %v5692
      %v5753 = vpack.c.b16 %v5695, %v5694
      %v5754 = vpack.c.b16 %v5697, %v5696
      %v5755 = vpack.c.b16 %v5699, %v5698
      %v5756 = vpack.c.b16 %v5701, %v5700
      %v5757 = vpack.c.b16 %v5703, %v5702
      %v5758 = vpack.c.b16 %v5705, %v5704
      %v5759 = vpack.c.b16 %v5707, %v5706
      %v5760 = vpack.c.b16 %v5709, %v5708
      %v5761 = vpack.c.b16 %v5711, %v5710
      %v5762 = vpack.c.b16 %v5713, %v5712
      %v5763 = vpack.c.b16 %v5715, %v5714
      %v5764 = vpack.c.b16 %v5717, %v5716
      %v5765 = vpack.c.b16 %v5719, %v5718
      %v5766 = vpack.c.b16 %v5721, %v5720
      %v5767 = vpack.c.b16 %v5723, %v5722
      %v5768 = vpack.c.b16 %v5725, %v5724
      %v5769 = vpack.c.b16 %v5727, %v5726
      %v5770 = vpack.c.b16 %v5729, %v5728
      %v5771 = vpack.c.b16 %v5731, %v5730
      %v5772 = vpack.c.b16 %v5733, %v5732
      %v5773 = vpack.c.b16 %v5735, %v5734
      %v5774 = vpack.c.b16 %v5737, %v5736
      %v5775 = vpack.c.b16 %v5739, %v5738
      %v5813 = vsel %vm4146, %v5506, 0
      %v5816 = vsel %vm4146, %v5511, 0
      %v5819 = vsel %vm4146, %v5516, 0
      %5821 = vmatprep.subr.bf16.mxu0 0
      %5822 = vmatpush1.bf16.msra.mxu0 %v5747
      %5823 = vmatprep.subr.bf16.mxu0 0
      %5824 = vmatpush1.bf16.msra.mxu0 %v5746
      %5825 = vmatprep.subr.bf16.mxu0 0
      %5826 = vmatpush1.bf16.msra.mxu0 %v5745
      %5827 = vmatprep.subr.bf16.mxu0 0
      %5828 = vmatpush1.bf16.msra.mxu0 %v5744
      %5829 = vmatprep.subr.bf16.mxu0 0
      %5830 = vmatpush1.bf16.msra.mxu0 %v5743
      %5831 = vmatprep.subr.bf16.mxu0 0
      %5832 = vmatpush1.bf16.msra.mxu0 %v5742
      %5833 = vmatprep.subr.bf16.mxu0 0
      %5834 = vmatpush1.bf16.msra.mxu0 %v5741
      %5835 = vmatprep.subr.bf16.mxu0 0
      %5836 = vmatpush1.bf16.msra.mxu0 %v5740
      %5837 = vmatprep.subr.bf16.mxu0 0
      %5838 = vmatpush2.bf16.msra.mxu0 %v5755
      %5839 = vmatprep.subr.bf16.mxu0 0
      %5840 = vmatpush2.bf16.msra.mxu0 %v5754
      %5841 = vmatprep.subr.bf16.mxu0 0
      %5842 = vmatpush2.bf16.msra.mxu0 %v5753
      %5843 = vmatprep.subr.bf16.mxu0 0
      %5844 = vmatpush2.bf16.msra.mxu0 %v5752
      %5845 = vmatprep.subr.bf16.mxu0 0
      %5846 = vmatpush2.bf16.msra.mxu0 %v5751
      %5847 = vmatprep.subr.bf16.mxu0 0
      %5848 = vmatpush2.bf16.msra.mxu0 %v5750
      %5849 = vmatprep.subr.bf16.mxu0 0
      %5850 = vmatpush2.bf16.msra.mxu0 %v5749
      %5851 = vmatprep.subr.bf16.mxu0 0
      %5852 = vmatpush2.bf16.msra.mxu0 %v5748
      %5853 = vmatprep.mubr.bf16.mxu0 %v5503
      %5854 = vmatmul.mubr.bf16.gmra.mxu0 %v5502
      %v5855 = vpop.f32.mrf.mxu0
      %v5856 = vadd.f32 %v5594, %v5855
      %v5857 = vpop.f32.mrf.mxu0
      %v5858 = vpop.f32.mrf.mxu0
      %v5859 = vadd.f32 %v5594, %v5858
      %v5860 = vpop.f32.mrf.mxu0
      %5861 = vmatprep.mubr.bf16.mxu0 %v5508
      %5862 = vmatmul.mubr.bf16.gmra.mxu0 %v5507
      %v5863 = vpop.f32.mrf.mxu0
      %v5864 = vadd.f32 %v5594, %v5863
      %v5865 = vpop.f32.mrf.mxu0
      %v5866 = vpop.f32.mrf.mxu0
      %v5867 = vadd.f32 %v5594, %v5866
      %v5868 = vpop.f32.mrf.mxu0
      %5869 = vmatprep.mubr.bf16.mxu0 %v5513
      %5870 = vmatmul.mubr.bf16.gmra.mxu0 %v5512
      %v5871 = vpop.f32.mrf.mxu0
      %v5872 = vadd.f32 %v5594, %v5871
      %v5873 = vpop.f32.mrf.mxu0
      %v5874 = vpop.f32.mrf.mxu0
      %v5875 = vpop.f32.mrf.mxu0
      %5876 = vdwg.mxu0
      %5877 = vmatprep.subr.bf16.mxu0 0
      %5878 = vmatpush1.bf16.msra.mxu0 %v5763
      %5879 = vmatprep.subr.bf16.mxu0 0
      %5880 = vmatpush1.bf16.msra.mxu0 %v5762
      %5881 = vmatprep.subr.bf16.mxu0 0
      %5882 = vmatpush1.bf16.msra.mxu0 %v5761
      %5883 = vmatprep.subr.bf16.mxu0 0
      %5884 = vmatpush1.bf16.msra.mxu0 %v5760
      %5885 = vmatprep.subr.bf16.mxu0 0
      %5886 = vmatpush1.bf16.msra.mxu0 %v5759
      %5887 = vmatprep.subr.bf16.mxu0 0
      %5888 = vmatpush1.bf16.msra.mxu0 %v5758
      %5889 = vmatprep.subr.bf16.mxu0 0
      %5890 = vmatpush1.bf16.msra.mxu0 %v5757
      %5891 = vmatprep.subr.bf16.mxu0 0
      %5892 = vmatpush1.bf16.msra.mxu0 %v5756
      %5893 = vmatprep.subr.bf16.mxu0 0
      %5894 = vmatpush2.bf16.msra.mxu0 %v5771
      %5895 = vmatprep.subr.bf16.mxu0 0
      %5896 = vmatpush2.bf16.msra.mxu0 %v5770
      %5897 = vmatprep.subr.bf16.mxu0 0
      %5898 = vmatpush2.bf16.msra.mxu0 %v5769
      %5899 = vmatprep.subr.bf16.mxu0 0
      %5900 = vmatpush2.bf16.msra.mxu0 %v5768
      %5901 = vmatprep.subr.bf16.mxu0 0
      %5902 = vmatpush2.bf16.msra.mxu0 %v5767
      %5903 = vmatprep.subr.bf16.mxu0 0
      %5904 = vmatpush2.bf16.msra.mxu0 %v5766
      %5905 = vmatprep.subr.bf16.mxu0 0
      %5906 = vmatpush2.bf16.msra.mxu0 %v5765
      %5907 = vmatprep.subr.bf16.mxu0 0
      %5908 = vmatpush2.bf16.msra.mxu0 %v5764
      %5909 = vmatprep.mubr.bf16.mxu0 %v5505
      %5910 = vmatmul.mubr.bf16.gmra.mxu0 %v5504
      %v5911 = vpop.f32.mrf.mxu0
      %v5912 = vadd.f32 %v5856, %v5911
      %v5913 = vpop.f32.mrf.mxu0
      %v5914 = vpop.f32.mrf.mxu0
      %v5915 = vadd.f32 %v5859, %v5914
      %v5916 = vpop.f32.mrf.mxu0
      %5917 = vmatprep.mubr.bf16.mxu0 %v5510
      %5918 = vmatmul.mubr.bf16.gmra.mxu0 %v5509
      %v5919 = vpop.f32.mrf.mxu0
      %v5920 = vadd.f32 %v5864, %v5919
      %v5921 = vpop.f32.mrf.mxu0
      %v5922 = vpop.f32.mrf.mxu0
      %v5923 = vadd.f32 %v5867, %v5922
      %v5924 = vpop.f32.mrf.mxu0
      %5925 = vmatprep.mubr.bf16.mxu0 %v5515
      %5926 = vmatmul.mubr.bf16.gmra.mxu0 %v5514
      %v5927 = vpop.f32.mrf.mxu0
      %v5928 = vadd.f32 %v5872, %v5927
      %v5929 = vpop.f32.mrf.mxu0
      %v5930 = vpop.f32.mrf.mxu0
      %v5931 = vpop.f32.mrf.mxu0
      %5932 = vdwg.mxu0
      %5933 = vmatprep.subr.bf16.mxu0 0
      %5934 = vmatpush1.bf16.msra.mxu0 0
      %5935 = vmatprep.subr.bf16.mxu0 0
      %5936 = vmatpush1.bf16.msra.mxu0 0
      %5937 = vmatprep.subr.bf16.mxu0 0
      %5938 = vmatpush1.bf16.msra.mxu0 0
      %5939 = vmatprep.subr.bf16.mxu0 0
      %5940 = vmatpush1.bf16.msra.mxu0 0
      %5941 = vmatprep.subr.bf16.mxu0 0
      %5942 = vmatpush1.bf16.msra.mxu0 %v5775
      %5943 = vmatprep.subr.bf16.mxu0 0
      %5944 = vmatpush1.bf16.msra.mxu0 %v5774
      %5945 = vmatprep.subr.bf16.mxu0 0
      %5946 = vmatpush1.bf16.msra.mxu0 %v5773
      %5947 = vmatprep.subr.bf16.mxu0 0
      %5948 = vmatpush1.bf16.msra.mxu0 %v5772
      %5949 = vmatprep.subr.bf16.mxu0 0
      %5950 = vmatpush2.bf16.msra.mxu0 0
      %5951 = vmatprep.subr.bf16.mxu0 0
      %5952 = vmatpush2.bf16.msra.mxu0 0
      %5953 = vmatprep.subr.bf16.mxu0 0
      %5954 = vmatpush2.bf16.msra.mxu0 0
      %5955 = vmatprep.subr.bf16.mxu0 0
      %5956 = vmatpush2.bf16.msra.mxu0 0
      %5957 = vmatprep.subr.bf16.mxu0 0
      %5958 = vmatpush2.bf16.msra.mxu0 0
      %5959 = vmatprep.subr.bf16.mxu0 0
      %5960 = vmatpush2.bf16.msra.mxu0 0
      %5961 = vmatprep.subr.bf16.mxu0 0
      %5962 = vmatpush2.bf16.msra.mxu0 0
      %5963 = vmatprep.subr.bf16.mxu0 0
      %5964 = vmatpush2.bf16.msra.mxu0 0
      %5965 = vmatprep.mubr.bf16.mxu0 0
      %5966 = vmatmul.mubr.bf16.gmra.mxu0 %v5813
      %v5967 = vpop.f32.mrf.mxu0
      %v5968 = vadd.f32 %v5912, %v5967
      %v5969 = vpop.f32.mrf.mxu0
      %v5970 = vpop.f32.mrf.mxu0
      %v5971 = vadd.f32 %v5915, %v5970
      %v5972 = vpop.f32.mrf.mxu0
      %5973 = vmatprep.mubr.bf16.mxu0 0
      %5974 = vmatmul.mubr.bf16.gmra.mxu0 %v5816
      %v5975 = vpop.f32.mrf.mxu0
      %v5976 = vadd.f32 %v5920, %v5975
      %v5977 = vpop.f32.mrf.mxu0
      %v5978 = vpop.f32.mrf.mxu0
      %v5979 = vadd.f32 %v5923, %v5978
      %v5980 = vpop.f32.mrf.mxu0
      %5981 = vmatprep.mubr.bf16.mxu0 0
      %5982 = vmatmul.mubr.bf16.gmra.mxu0 %v5819
      %v5983 = vpop.f32.mrf.mxu0
      %v5984 = vadd.f32 %v5928, %v5983
      %v5985 = vpop.f32.mrf.mxu0
      %v5986 = vpop.f32.mrf.mxu0
      %v5987 = vpop.f32.mrf.mxu0
      %5988 = vdwg.mxu0
      %vm5989 = vcmp.ge.f32.partialorder %v5968, 0.0
      %vm5990 = vcmp.ge.f32.partialorder %v5971, 0.0
      %vm5991 = vcmp.ge.f32.partialorder %v5976, 0.0
      %vm5992 = vcmp.ge.f32.partialorder %v5979, 0.0
      %vm5993 = vcmp.ge.f32.partialorder %v5984, 0.0
      %v5994 = vmul.f32 %v5968, 0.01
      %v5995 = vmul.f32 %v5971, 0.01
      %v5996 = vmul.f32 %v5976, 0.01
      %v5997 = vmul.f32 %v5979, 0.01
      %v5998 = vmul.f32 %v5984, 0.01
      %v5999 = vsel %vm5989, %v5968, %v5994
      %v6000 = vsel %vm5990, %v5971, %v5995
      %v6001 = vsel %vm5991, %v5976, %v5996
      %v6002 = vsel %vm5992, %v5979, %v5997
      %v6003 = vsel %vm5993, %v5984, %v5998
      %v6004 = vld [vmem:[%s14] sm:$0xf]
      %v6005 = vld [vmem:[%s14 + $0x4] sm:$0xf]
      %v6006 = vld [vmem:[%s14 + $0x8] sm:$0xf]
      %v6007 = vld [vmem:[%s14 + $0xc] sm:$0x1]
      %v6008 = vpack.c.bf16 %v6000, %v5999
      %v6009 = vpack.c.bf16 %v6002, %v6001
      %v6010 = vpack.c.bf16 %v6003, %v6003
      %v6015 = vunpack.c.l.b16 %v6004
      %v6016 = vunpack.c.l.b16 %v6005
      %v6017 = vunpack.c.l.b16 %v6006
      %v6018 = vunpack.c.l.b16 %v6007
      %v6019 = vpack.c.b16 %v6016, %v6015
      %v6020 = vpack.c.b16 %v6018, %v6017
      %vm6021 = vcmask 293888
      %v6023 = vsel %vm6021, %v6019, 0
      %v6026 = vsel %vm6021, %v6020, 0
      %v6029 = vsel %vm1869, %v6010, 0
      %6031 = vmatprep.subr.bf16.mxu0 0
      %6032 = vmatpush1.bf16.msra.mxu0 0
      %6033 = vmatprep.subr.bf16.mxu0 0
      %6034 = vmatpush1.bf16.msra.mxu0 0
      %6035 = vmatprep.subr.bf16.mxu0 0
      %6036 = vmatpush1.bf16.msra.mxu0 0
      %6037 = vmatprep.subr.bf16.mxu0 0
      %6038 = vmatpush1.bf16.msra.mxu0 0
      %6039 = vmatprep.subr.bf16.mxu0 0
      %6040 = vmatpush1.bf16.msra.mxu0 0
      %6041 = vmatprep.subr.bf16.mxu0 0
      %6042 = vmatpush1.bf16.msra.mxu0 %v6029
      %6043 = vmatprep.subr.bf16.mxu0 0
      %6044 = vmatpush1.bf16.msra.mxu0 %v6009
      %6045 = vmatprep.subr.bf16.mxu0 0
      %6046 = vmatpush1.bf16.msra.mxu0 %v6008
      %6047 = vmatprep.subr.bf16.mxu0 0
      %6048 = vmatpush2.bf16.msra.mxu0 0
      %6049 = vmatprep.subr.bf16.mxu0 0
      %6050 = vmatpush2.bf16.msra.mxu0 0
      %6051 = vmatprep.subr.bf16.mxu0 0
      %6052 = vmatpush2.bf16.msra.mxu0 0
      %6053 = vmatprep.subr.bf16.mxu0 0
      %6054 = vmatpush2.bf16.msra.mxu0 0
      %6055 = vmatprep.subr.bf16.mxu0 0
      %6056 = vmatpush2.bf16.msra.mxu0 0
      %6057 = vmatprep.subr.bf16.mxu0 0
      %6058 = vmatpush2.bf16.msra.mxu0 0
      %6059 = vmatprep.subr.bf16.mxu0 0
      %6060 = vmatpush2.bf16.msra.mxu0 0
      %6061 = vmatprep.subr.bf16.mxu0 0
      %6062 = vmatpush2.bf16.msra.mxu0 0
      %6063 = vmatprep.mubr.bf16.mxu0 0
      %6064 = vmatmul.mubr.bf16.gmra.mxu0 %v6023
      %v6065 = vpop.f32.mrf.mxu0
      %v6066 = vadd.f32 0.0, %v6065
      %v6067 = vpop.f32.mrf.mxu0
      %v6068 = vpop.f32.mrf.mxu0
      %v6069 = vadd.f32 0.0, %v6068
      %v6070 = vpop.f32.mrf.mxu0
      %6071 = vmatprep.mubr.bf16.mxu0 0
      %6072 = vmatmul.mubr.bf16.gmra.mxu0 %v6026
      %v6073 = vpop.f32.mrf.mxu0
      %v6074 = vadd.f32 0.0, %v6073
      %v6075 = vpop.f32.mrf.mxu0
      %v6076 = vpop.f32.mrf.mxu0
      %v6077 = vadd.f32 0.0, %v6076
      %v6078 = vpop.f32.mrf.mxu0
      %6079 = vdwg.mxu0
      %v6083 = vrot.slane %v6066, 1
      %v6084 = vrot.slane %v6069, 1
      %v6085 = vsel %vm583, %v6083, %v6084
      %v6086 = vrot.slane %v6074, 1
      %v6087 = vsel %vm583, %v6084, %v6086
      %v6090 = vrot.slane %v6066, 2
      %v6091 = vrot.slane %v6069, 2
      %v6092 = vsel %vm788, %v6090, %v6091
      %v6093 = vrot.slane %v6074, 2
      %v6094 = vsel %vm788, %v6091, %v6093
      %v6097 = vrot.slane %v6066, 4
      %v6098 = vrot.slane %v6069, 4
      %v6099 = vsel %vm1327, %v6097, %v6098
      %v6100 = vrot.slane %v6074, 4
      %v6101 = vsel %vm1327, %v6098, %v6100
      %v6104 = vrot.slane %v6066, 5
      %v6105 = vrot.slane %v6069, 5
      %v6106 = vsel %vm1662, %v6104, %v6105
      %v6107 = vrot.slane %v6074, 5
      %v6108 = vsel %vm1662, %v6105, %v6107
      %v6111 = vrot.slane %v6066, 6
      %v6112 = vrot.slane %v6069, 6
      %v6113 = vsel %vm1869, %v6111, %v6112
      %v6114 = vrot.slane %v6074, 6
      %v6115 = vsel %vm1869, %v6112, %v6114
      %v6119 = vrot.slane %v6077, 1
      %v6120 = vsel %vm583, %v6086, %v6119
      %v6122 = vrot.slane %v6077, 2
      %v6123 = vsel %vm788, %v6093, %v6122
      %v6125 = vld [vmem:[%s9] sm:$0xff]
      %v6126 = vld [vmem:[%s9 + $0x8] sm:$0x1]
      %v6129 = vlaneseq
      %v6130 = vshrl.u32 %v6129, 7
      %v6131 = vsub.s32 0, %v6130
      %v6132 = vrot.slane %v6125, %v6131
      %v6133 = vlaneseq
      %v6134 = vshrl.u32 %v6133, 7
      %v6135 = vsub.s32 1, %v6134
      %v6136 = vrot.slane %v6125, %v6135
      %v6137 = vlaneseq
      %v6138 = vshrl.u32 %v6137, 7
      %v6139 = vsub.s32 2, %v6138
      %v6140 = vrot.slane %v6125, %v6139
      %v6141 = vlaneseq
      %v6142 = vshrl.u32 %v6141, 7
      %v6143 = vsub.s32 3, %v6142
      %v6144 = vrot.slane %v6125, %v6143
      %v6145 = vlaneseq
      %v6146 = vshrl.u32 %v6145, 7
      %v6147 = vsub.s32 4, %v6146
      %v6148 = vrot.slane %v6125, %v6147
      %v6149 = vlaneseq
      %v6150 = vshrl.u32 %v6149, 7
      %v6151 = vsub.s32 5, %v6150
      %v6152 = vrot.slane %v6125, %v6151
      %v6153 = vlaneseq
      %v6154 = vshrl.u32 %v6153, 7
      %v6155 = vsub.s32 6, %v6154
      %v6156 = vrot.slane %v6125, %v6155
      %v6157 = vlaneseq
      %v6158 = vshrl.u32 %v6157, 7
      %v6159 = vsub.s32 7, %v6158
      %v6160 = vrot.slane %v6125, %v6159
      %v6161 = vlaneseq
      %v6162 = vshrl.u32 %v6161, 7
      %v6163 = vsub.s32 0, %v6162
      %v6164 = vrot.slane %v6126, %v6163
      %v6174 = vmul.f32 %v6066, %v6132
      %v6175 = vmul.f32 %v6085, %v6136
      %v6176 = vmul.f32 %v6092, %v6140
      %v6177 = vmul.f32 %v6099, %v6144
      %v6178 = vmul.f32 %v6106, %v6148
      %v6179 = vmul.f32 %v6113, %v6152
      %v6180 = vmul.f32 %v6069, %v6156
      %v6181 = vmul.f32 %v6087, %v6160
      %v6182 = vmul.f32 %v6094, %v6164
      %v6183 = vmul.f32 %v6069, %v6132
      %v6184 = vmul.f32 %v6087, %v6136
      %v6185 = vmul.f32 %v6094, %v6140
      %v6186 = vmul.f32 %v6101, %v6144
      %v6187 = vmul.f32 %v6108, %v6148
      %v6188 = vmul.f32 %v6115, %v6152
      %v6189 = vmul.f32 %v6074, %v6156
      %v6190 = vmul.f32 %v6120, %v6160
      %v6191 = vmul.f32 %v6123, %v6164
      %v6192 = vadd.f32 %v6174, %v6175
      %v6193 = vadd.f32 %v6192, %v6176
      %v6194 = vadd.f32 %v6193, %v6177
      %v6195 = vadd.f32 %v6194, %v6178
      %v6196 = vadd.f32 %v6195, %v6179
      %v6197 = vadd.f32 %v6196, %v6180
      %v6198 = vadd.f32 %v6197, %v6181
      %v6199 = vadd.f32 %v6198, %v6182
      %6200 = vadd.xlane.f32.xlu0 %v6199
      %v6201 = vpop.xlane.xlu0 %6200
      %v6202 = vadd.f32 %v6183, %v6184
      %v6203 = vadd.f32 %v6202, %v6185
      %v6204 = vadd.f32 %v6203, %v6186
      %v6205 = vadd.f32 %v6204, %v6187
      %v6206 = vadd.f32 %v6205, %v6188
      %v6207 = vadd.f32 %v6206, %v6189
      %v6208 = vadd.f32 %v6207, %v6190
      %v6209 = vadd.f32 %v6208, %v6191
      %6210 = vadd.xlane.f32.xlu0 %v6209
      %v6211 = vpop.xlane.xlu0 %6210
      %v6212 = vld [vmem:[#allocation2] sm:$0x1]
      %v6214 = vlaneseq
      %v6215 = vshrl.u32 %v6214, 7
      %v6216 = vsub.s32 0, %v6215
      %v6217 = vrot.slane %v6212, %v6216
      %v6219 = vadd.f32 %v6201, %v6217
      %v6220 = vadd.f32 %v6211, %v6217
      %v6222 = vrot.slane %v6219, 5
      %v6225 = vrot.slane %v6220, 7
      %v6227 = vsel %vm1869, %v6222, %v6225
      %vm6228 = vcmask 3072
      %6229 = vst.msk [vmem:[%s494] sm:$0xf] %vm6228, %v6227
      %p6230 = scmp.lt.s32.totalorder %s28, 1
      %s6231 = scalar_select %p6230, %s28, 1
      %s6232 = smul.addr %s6231, 4
      %s6233 = scalar_lea.vmem %s15, %s6232
      // Predicated region
      $region81: #{forward.1} parent=79 // pred_check
        %p6234 = pneg %p366
      $region82: #{forward.1} parent=79 // pred_check_branch
        %6236 = sbr.rel (%p6234) target = $region84
      $region83: #{forward.1} parent=79 // pred_region
        _
      $region84: #{forward.1} parent=79 // pred_fallthru
        _
    $region80: #{forward.1} parent=5 // pred_fallthru
      _
    %p6237 = scmp.le.s32.totalorder 2, %s23
    // Predicated region
    $region85: #{forward.1} parent=5 // pred_check
      %p6238 = pneg %p6237
    $region86: #{forward.1} parent=5 // pred_check_branch
      %6240 = sbr.rel (%p6238) target = $region88
    $region87: #{forward.1} parent=5 // pred_region
      %s6241 = ssub.s32 %s23, 2
      // Predicated region
      $region89: #{forward.1} parent=87 // pred_check
        %p6242 = pneg %p372
      $region90: #{forward.1} parent=87 // pred_check_branch
        %6244 = sbr.rel (%p6242) target = $region92
      $region91: #{forward.1} parent=87 // pred_region
        %p6245 = scmp.lt.s32.totalorder %s29, 1
        %s6246 = scalar_select %p6245, %s29, 1
        %s6247 = smul.addr %s6246, 4
        %s6248 = scalar_lea.vmem %s15, %s6247
      $region92: #{forward.1} parent=87 // pred_fallthru
        _
    $region88: #{forward.1} parent=5 // pred_fallthru
      _
  $region6: #{forward.1} parent=0 // loop_footer
    %s27 = sadd.s32 1, %s23
  $region7: #{forward.1} parent=0 // loop_footer_branch
    %22 = sbr.rel target = $region3
  $region8: #{forward.1} parent=0 // loop_exit
    _

</llo_original>
